<compile_context>
chip_gen: v7x
topology: tpu7x:2x2x1
jax: 0.10.0
libtpu: 0.0.40
codegen_flags: <defaults>
</compile_context>

<pallas_src>
import functools

import jax
import jax.numpy as jnp
from jax.experimental import pallas as pl
from jax.experimental.pallas import tpu as pltpu


def _attn_kernel(qd_ref, kd_ref, amask_ref, bias_ref,
                 wqg_ref, bg_ref, wkv_ref, wo_ref, bo_ref,
                 out_ref, *, num_head, dk, dv, key_dim, value_dim,
                 n_seq, n_q, n_k, mm_dtype, approx_recip):
    f32 = jnp.float32

    # Flattened-row projections: one big-M MXU matmul per input stream.
    qd = qd_ref[0]                                               # (S*Lq, C_in)
    kd = kd_ref[0]                                               # (S*Lk, C_in)
    qg = jnp.dot(qd, wqg_ref[...], preferred_element_type=f32)   # (S*Lq, K+V)
    kv = jnp.dot(kd, wkv_ref[...], preferred_element_type=f32)   # (S*Lk, K+V)

    # Gate (sigmoid -> EUP) computed once for all heads.
    gate = jax.nn.sigmoid(qg[:, key_dim:] + bg_ref[...])         # (S*Lq, V) f32

    # Seq-batched 3-D views for the attention contractions.
    q3 = qg[:, :key_dim].reshape(n_seq, n_q, key_dim)            # (S, Lq, K)
    k3 = kv[:, :key_dim].reshape(n_seq, n_k, key_dim)            # (S, Lk, K)
    v3 = kv[:, key_dim:].reshape(n_seq, n_k, value_dim)          # (S, Lk, V)
    add_mask = amask_ref[0]                                      # (S, 1, Lk) f32

    # Accumulate each head's contribution directly into the (rows, C_out_pad)
    # output through its slice of W_o -- no per-head concatenate.
    acc = jnp.zeros((n_seq * n_q, out_ref.shape[-1]), f32)
    for h in range(num_head):                                    # small static unroll
        q_h = q3[:, :, h * dk:(h + 1) * dk].astype(mm_dtype)     # (S, Lq, dk)
        k_h = k3[:, :, h * dk:(h + 1) * dk].astype(mm_dtype)     # (S, Lk, dk)
        v_h = v3[:, :, h * dv:(h + 1) * dv].astype(mm_dtype)     # (S, Lk, dv)

        logits = jnp.einsum('sqd,skd->sqk', q_h, k_h,
                            preferred_element_type=f32)          # (S, Lq, Lk)
        logits = logits + bias_ref[0, h].astype(f32) + add_mask  # bias + additive mask

        m = jnp.max(logits, axis=-1, keepdims=True)
        p = jnp.exp(logits - m)                                  # unnormalized probs
        denom = jnp.sum(p, axis=-1, keepdims=True)
        pv = jnp.einsum('sqk,skd->sqd', p.astype(mm_dtype), v_h,
                        preferred_element_type=f32)              # (S, Lq, dv)
        if approx_recip:
            inv = pl.reciprocal(denom, approx=True)              # EUP, near free
        else:
            inv = 1.0 / denom                                    # exact for f32 check
        wa_h = (pv * inv).reshape(n_seq * n_q, dv)               # deferred softmax norm
        gated_h = (wa_h * gate[:, h * dv:(h + 1) * dv]).astype(mm_dtype)
        acc = acc + jnp.dot(gated_h, wo_ref[h * dv:(h + 1) * dv, :],
                            preferred_element_type=f32)

    out_ref[0] = (acc + bo_ref[...]).astype(out_ref.dtype)       # lane-dense store


def attention(q_data, k_data, bias, k_mask, params, *, num_head,
              mm_dtype=jnp.bfloat16):
    f32 = jnp.float32
    B, S, Lq, C_in = q_data.shape
    Lk = k_data.shape[2]
    key_dim = params['wq'].shape[1]
    value_dim = params['wv'].shape[1]
    C_out = params['wo'].shape[1]
    dk = key_dim // num_head
    dv = value_dim // num_head
    c_out_pad = ((C_out + 127) // 128) * 128                     # lane-dense output

    # Fuse [wq * dk^-0.5 | wg] and [wk | wv]; pad wo/bo for the padded store.
    wqg = jnp.concatenate([params['wq'].astype(f32) * (dk ** -0.5),
                           params['wg'].astype(f32)], axis=1).astype(mm_dtype)
    wkv = jnp.concatenate([params['wk'].astype(f32),
                           params['wv'].astype(f32)], axis=1).astype(mm_dtype)
    wo = jnp.pad(params['wo'].astype(f32),
                 ((0, 0), (0, c_out_pad - C_out))).astype(mm_dtype)
    bg = params['bg'].astype(f32).reshape(1, value_dim)
    bo = jnp.pad(params['bo'].astype(f32),
                 (0, c_out_pad - C_out)).reshape(1, c_out_pad)

    # One mask select here instead of per head inside the kernel.
    # NOTE: fully-masked rows get softmax over the raw logits instead of the
    # reference's uniform average; both are arbitrary for such rows.
    add_mask = jnp.where(k_mask.reshape(B, S, 1, Lk) > 0, 0.0, -1e30).astype(f32)

    # Flatten (S, L) -> rows in the wrapper so the kernel sees big-M matmuls
    # and the stores are plain 3-D slabs.
    qd = q_data.astype(mm_dtype).reshape(B, S * Lq, C_in)
    kd = k_data.astype(mm_dtype).reshape(B, S * Lk, C_in)
    bias_c = bias.astype(mm_dtype)                               # halves bias DMA bytes

    kernel = functools.partial(
        _attn_kernel, num_head=num_head, dk=dk, dv=dv, key_dim=key_dim,
        value_dim=value_dim, n_seq=S, n_q=Lq, n_k=Lk, mm_dtype=mm_dtype,
        approx_recip=(mm_dtype != jnp.float32))

    kv_dim = key_dim + value_dim
    out = pl.pallas_call(
        kernel,
        out_shape=jax.ShapeDtypeStruct((B, S * Lq, c_out_pad), f32),
        grid=(B,),
        in_specs=[
            pl.BlockSpec((1, S * Lq, C_in), lambda b: (b, 0, 0)),
            pl.BlockSpec((1, S * Lk, C_in), lambda b: (b, 0, 0)),
            pl.BlockSpec((1, S, 1, Lk), lambda b: (b, 0, 0, 0)),
            pl.BlockSpec((1, num_head, Lq, Lk), lambda b: (b, 0, 0, 0)),
            pl.BlockSpec((C_in, kv_dim), lambda b: (0, 0)),
            pl.BlockSpec((1, value_dim), lambda b: (0, 0)),
            pl.BlockSpec((C_in, kv_dim), lambda b: (0, 0)),
            pl.BlockSpec((value_dim, c_out_pad), lambda b: (0, 0)),
            pl.BlockSpec((1, c_out_pad), lambda b: (0, 0)),
        ],
        out_specs=pl.BlockSpec((1, S * Lq, c_out_pad), lambda b: (b, 0, 0)),
        compiler_params=pltpu.CompilerParams(
            dimension_semantics=("parallel",),
            vmem_limit_bytes=32 * 1024 * 1024),
    )(qd, kd, add_mask, bias_c, wqg, bg, wkv, wo, bo)

    return out[:, :, :C_out].reshape(B, S, Lq, C_out)


def reference(q_data, k_data, bias, k_mask, params, *, num_head):
    """Pure-JAX (f32) reference matching the PyTorch forward."""
    key_dim = params['wq'].shape[1]
    value_dim = params['wv'].shape[1]
    dk = key_dim // num_head
    dv = value_dim // num_head
    B, S, Lq, _ = q_data.shape
    Lk = k_data.shape[2]

    q = q_data @ params['wq']
    k = k_data @ params['wk']
    v = k_data @ params['wv']
    q = q.reshape(B, S, Lq, num_head, dk).transpose(0, 1, 3, 2, 4) * dk ** -0.5
    k = k.reshape(B, S, Lk, num_head, dk).transpose(0, 1, 3, 2, 4)
    v = v.reshape(B, S, Lk, num_head, dv).transpose(0, 1, 3, 2, 4)
    logits = jnp.einsum('bshqd,bshkd->bshqk', q, k)
    logits = logits + bias[:, None]                     # broadcast over seqs
    keep = k_mask[:, :, None, None, :] > 0
    logits = jnp.where(keep, logits, jnp.finfo(jnp.float32).min)
    w = jax.nn.softmax(logits, axis=-1)
    wa = jnp.einsum('bshqk,bshkd->bshqd', w, v)
    wa = wa.transpose(0, 1, 3, 2, 4).reshape(B, S, Lq, value_dim)
    gate = jax.nn.sigmoid(q_data @ params['wg'] + params['bg'])
    return (wa * gate) @ params['wo'] + params['bo']


if __name__ == "__main__":
    B, S, Lq, Lk = 2, 4, 16, 32
    C_in, key_dim, value_dim, num_head, C_out = 32, 32, 32, 4, 32

    key = jax.random.PRNGKey(0)
    ks = jax.random.split(key, 11)
    q_data = jax.random.normal(ks[0], (B, S, Lq, C_in), jnp.float32)
    k_data = jax.random.normal(ks[1], (B, S, Lk, C_in), jnp.float32)
    bias = 0.5 * jax.random.normal(ks[2], (B, num_head, Lq, Lk), jnp.float32)
    k_mask = (jax.random.uniform(ks[3], (B, S, Lk)) > 0.2).astype(jnp.float32)

    # NOTE: PyTorch init='final' zero-inits proj_out; use small random values
    # so the output (and the correctness check) is non-trivial.
    params = dict(
        wq=jax.random.normal(ks[4], (C_in, key_dim), jnp.float32) / jnp.sqrt(C_in),
        wk=jax.random.normal(ks[5], (C_in, key_dim), jnp.float32) / jnp.sqrt(C_in),
        wv=jax.random.normal(ks[6], (C_in, value_dim), jnp.float32) / jnp.sqrt(C_in),
        wg=jax.random.normal(ks[7], (C_in, value_dim), jnp.float32) / jnp.sqrt(C_in),
        bg=0.1 * jax.random.normal(ks[8], (value_dim,), jnp.float32),
        wo=0.1 * jax.random.normal(ks[9], (value_dim, C_out), jnp.float32),
        bo=0.1 * jax.random.normal(ks[10], (C_out,), jnp.float32),
    )

    ref = reference(q_data, k_data, bias, k_mask, params, num_head=num_head)

    # bf16 MXU path (production default per review).
    out_bf16 = jax.block_until_ready(
        attention(q_data, k_data, bias, k_mask, params,
                  num_head=num_head, mm_dtype=jnp.bfloat16))
    # f32 path validates the fused algorithm at tight tolerance.
    out_f32 = jax.block_until_ready(
        attention(q_data, k_data, bias, k_mask, params,
                  num_head=num_head, mm_dtype=jnp.float32))

    assert out_bf16.shape == (B, S, Lq, C_out), out_bf16.shape
    assert out_f32.shape == (B, S, Lq, C_out), out_f32.shape
    err32 = float(jnp.max(jnp.abs(out_f32 - ref)))
    err16 = float(jnp.max(jnp.abs(out_bf16 - ref)))
    assert err32 < 1e-3, f"f32 max err {err32}"
    assert err16 < 1e-1, f"bf16 max err {err16}"
    print("KERNEL_OK")
</pallas_src>

<mosaic_0001>
module attributes {stable_mosaic.version = 11 : i64} {
  func.func @_attn_kernel(%arg0: i32, %arg1: memref<1x64x32xbf16, #tpu.memory_space<vmem>>, %arg2: memref<1x128x32xbf16, #tpu.memory_space<vmem>>, %arg3: memref<1x4x1x32xf32, #tpu.memory_space<vmem>>, %arg4: memref<1x4x16x32xbf16, #tpu.memory_space<vmem>>, %arg5: memref<32x64xbf16, #tpu.memory_space<vmem>>, %arg6: memref<1x32xf32, #tpu.memory_space<vmem>>, %arg7: memref<32x64xbf16, #tpu.memory_space<vmem>>, %arg8: memref<32x128xbf16, #tpu.memory_space<vmem>>, %arg9: memref<1x128xf32, #tpu.memory_space<vmem>>, %arg10: memref<1x64x128xf32, #tpu.memory_space<vmem>>) attributes {dimension_semantics = [#tpu.dimension_semantics<parallel>], iteration_bounds = array<i64: 2>, scalar_prefetch = 0 : i64, scratch_operands = 0 : i64, tpu.core_type = #tpu.core_type<tc>, window_params = [{transform_indices = @transform_0, window_bounds = array<i64: 1, 64, 32>}, {transform_indices = @transform_1, window_bounds = array<i64: 1, 128, 32>}, {transform_indices = @transform_2, window_bounds = array<i64: 1, 4, 1, 32>}, {transform_indices = @transform_3, window_bounds = array<i64: 1, 4, 16, 32>}, {pipeline_mode = #tpu.pipeline_mode<synchronous>, transform_indices = @transform_4, window_bounds = array<i64: 32, 64>}, {pipeline_mode = #tpu.pipeline_mode<synchronous>, transform_indices = @transform_5, window_bounds = array<i64: 1, 32>}, {pipeline_mode = #tpu.pipeline_mode<synchronous>, transform_indices = @transform_6, window_bounds = array<i64: 32, 64>}, {pipeline_mode = #tpu.pipeline_mode<synchronous>, transform_indices = @transform_7, window_bounds = array<i64: 32, 128>}, {pipeline_mode = #tpu.pipeline_mode<synchronous>, transform_indices = @transform_8, window_bounds = array<i64: 1, 128>}, {transform_indices = @transform_9, window_bounds = array<i64: 1, 64, 128>}]} {
    %c0 = arith.constant 0 : index
    %c0_0 = arith.constant 0 : index
    %c0_1 = arith.constant 0 : index
    %0 = vector.load %arg1[%c0, %c0_0, %c0_1] : memref<1x64x32xbf16, #tpu.memory_space<vmem>>, vector<1x64x32xbf16>
    %1 = vector.shape_cast %0 : vector<1x64x32xbf16> to vector<64x32xbf16>
    %c0_2 = arith.constant 0 : index
    %c0_3 = arith.constant 0 : index
    %c0_4 = arith.constant 0 : index
    %2 = vector.load %arg2[%c0_2, %c0_3, %c0_4] : memref<1x128x32xbf16, #tpu.memory_space<vmem>>, vector<1x128x32xbf16>
    %3 = vector.shape_cast %2 : vector<1x128x32xbf16> to vector<128x32xbf16>
    %c0_5 = arith.constant 0 : index
    %c0_6 = arith.constant 0 : index
    %4 = vector.load %arg5[%c0_5, %c0_6] : memref<32x64xbf16, #tpu.memory_space<vmem>>, vector<32x64xbf16>
    %cst = arith.constant dense<0.000000e+00> : vector<64x64xf32>
    %5 = tpu.matmul %1, %4, %cst {dimension_numbers = #tpu.dot_dimension_numbers<[1], [0], [0], [1], [0, 0, 1, 1], [], []>} : vector<64x32xbf16>, vector<32x64xbf16>, vector<64x64xf32> -> vector<64x64xf32>
    %c0_7 = arith.constant 0 : index
    %c0_8 = arith.constant 0 : index
    %6 = vector.load %arg7[%c0_7, %c0_8] : memref<32x64xbf16, #tpu.memory_space<vmem>>, vector<32x64xbf16>
    %cst_9 = arith.constant dense<0.000000e+00> : vector<128x64xf32>
    %7 = tpu.matmul %3, %6, %cst_9 {dimension_numbers = #tpu.dot_dimension_numbers<[1], [0], [0], [1], [0, 0, 1, 1], [], []>} : vector<128x32xbf16>, vector<32x64xbf16>, vector<128x64xf32> -> vector<128x64xf32>
    %8 = vector.extract_strided_slice %5 {offsets = [0, 32], sizes = [64, 32], strides = [1, 1]} : vector<64x64xf32> to vector<64x32xf32>
    %c0_10 = arith.constant 0 : index
    %c0_11 = arith.constant 0 : index
    %9 = vector.load %arg6[%c0_10, %c0_11] : memref<1x32xf32, #tpu.memory_space<vmem>>, vector<1x32xf32>
    %10 = vector.broadcast %9 : vector<1x32xf32> to vector<64x32xf32>
    %11 = arith.addf %8, %10 : vector<64x32xf32>
    %12 = arith.negf %11 : vector<64x32xf32>
    %13 = math.exp %12 : vector<64x32xf32>
    %cst_12 = arith.constant 1.000000e+00 : f32
    %14 = vector.broadcast %cst_12 : f32 to vector<64x32xf32>
    %15 = arith.addf %14, %13 : vector<64x32xf32>
    %16 = arith.divf %14, %15 : vector<64x32xf32>
    %17 = vector.extract_strided_slice %5 {offsets = [0, 0], sizes = [64, 32], strides = [1, 1]} : vector<64x64xf32> to vector<64x32xf32>
    %18 = vector.shape_cast %17 : vector<64x32xf32> to vector<4x16x32xf32>
    %19 = vector.extract_strided_slice %7 {offsets = [0, 0], sizes = [128, 32], strides = [1, 1]} : vector<128x64xf32> to vector<128x32xf32>
    %20 = vector.shape_cast %19 : vector<128x32xf32> to vector<4x32x32xf32>
    %21 = vector.extract_strided_slice %7 {offsets = [0, 32], sizes = [128, 32], strides = [1, 1]} : vector<128x64xf32> to vector<128x32xf32>
    %22 = vector.shape_cast %21 : vector<128x32xf32> to vector<4x32x32xf32>
    %c0_13 = arith.constant 0 : index
    %c0_14 = arith.constant 0 : index
    %c0_15 = arith.constant 0 : index
    %c0_16 = arith.constant 0 : index
    %23 = vector.load %arg3[%c0_13, %c0_14, %c0_15, %c0_16] : memref<1x4x1x32xf32, #tpu.memory_space<vmem>>, vector<1x4x1x32xf32>
    %24 = vector.shape_cast %23 : vector<1x4x1x32xf32> to vector<4x1x32xf32>
    %cst_17 = arith.constant 0.000000e+00 : f32
    %25 = vector.broadcast %cst_17 : f32 to vector<64x128xf32>
    %26 = vector.extract_strided_slice %18 {offsets = [0, 0, 0], sizes = [4, 16, 8], strides = [1, 1, 1]} : vector<4x16x32xf32> to vector<4x16x8xf32>
    %27 = arith.truncf %26 : vector<4x16x8xf32> to vector<4x16x8xbf16>
    %28 = vector.extract_strided_slice %20 {offsets = [0, 0, 0], sizes = [4, 32, 8], strides = [1, 1, 1]} : vector<4x32x32xf32> to vector<4x32x8xf32>
    %29 = arith.truncf %28 : vector<4x32x8xf32> to vector<4x32x8xbf16>
    %30 = vector.extract_strided_slice %22 {offsets = [0, 0, 0], sizes = [4, 32, 8], strides = [1, 1, 1]} : vector<4x32x32xf32> to vector<4x32x8xf32>
    %31 = arith.truncf %30 : vector<4x32x8xf32> to vector<4x32x8xbf16>
    "tpu.trace_start"() <{level = 10 : i32, message = "sqd,skd->sqk"}> : () -> ()
    %cst_18 = arith.constant dense<0.000000e+00> : vector<4x16x32xf32>
    %32 = tpu.matmul %27, %29, %cst_18 {dimension_numbers = #tpu.dot_dimension_numbers<[2], [2], [1], [1], [0, 0, 0, 1, 1, 1], [0], [0]>} : vector<4x16x8xbf16>, vector<4x32x8xbf16>, vector<4x16x32xf32> -> vector<4x16x32xf32>
    "tpu.trace_stop"() : () -> ()
    %c0_19 = arith.constant 0 : index
    %c0_20 = arith.constant 0 : index
    %c0_21 = arith.constant 0 : index
    %c0_22 = arith.constant 0 : index
    %33 = vector.load %arg4[%c0_19, %c0_20, %c0_21, %c0_22] : memref<1x4x16x32xbf16, #tpu.memory_space<vmem>>, vector<1x1x16x32xbf16>
    %34 = vector.shape_cast %33 : vector<1x1x16x32xbf16> to vector<16x32xbf16>
    %35 = arith.extf %34 : vector<16x32xbf16> to vector<16x32xf32>
    %36 = vector.shape_cast %35 : vector<16x32xf32> to vector<1x16x32xf32>
    %37 = vector.broadcast %36 : vector<1x16x32xf32> to vector<4x16x32xf32>
    %38 = arith.addf %32, %37 : vector<4x16x32xf32>
    %39 = vector.broadcast %24 : vector<4x1x32xf32> to vector<4x16x32xf32>
    %40 = arith.addf %38, %39 : vector<4x16x32xf32>
    %cst_23 = arith.constant dense<0xFF800000> : vector<4x16xf32>
    %41 = vector.multi_reduction <maximumf>, %40, %cst_23 [2] : vector<4x16x32xf32> to vector<4x16xf32>
    %42 = vector.shape_cast %41 : vector<4x16xf32> to vector<4x16x1xf32>
    %43 = vector.broadcast %42 : vector<4x16x1xf32> to vector<4x16x32xf32>
    %44 = arith.subf %40, %43 : vector<4x16x32xf32>
    %45 = math.exp %44 : vector<4x16x32xf32>
    %cst_24 = arith.constant dense<0.000000e+00> : vector<4x16xf32>
    %46 = vector.multi_reduction <add>, %45, %cst_24 [2] : vector<4x16x32xf32> to vector<4x16xf32>
    %47 = vector.shape_cast %46 : vector<4x16xf32> to vector<4x16x1xf32>
    %48 = arith.truncf %45 : vector<4x16x32xf32> to vector<4x16x32xbf16>
    "tpu.trace_start"() <{level = 10 : i32, message = "sqk,skd->sqd"}> : () -> ()
    %cst_25 = arith.constant dense<0.000000e+00> : vector<4x16x8xf32>
    %49 = tpu.matmul %48, %31, %cst_25 {dimension_numbers = #tpu.dot_dimension_numbers<[2], [1], [1], [2], [0, 0, 0, 1, 1, 2], [0], [0]>} : vector<4x16x32xbf16>, vector<4x32x8xbf16>, vector<4x16x8xf32> -> vector<4x16x8xf32>
    "tpu.trace_stop"() : () -> ()
    %50 = tpu.reciprocal %47 {approx = true} : vector<4x16x1xf32> -> vector<4x16x1xf32>
    %51 = vector.broadcast %50 : vector<4x16x1xf32> to vector<4x16x8xf32>
    %52 = arith.mulf %49, %51 : vector<4x16x8xf32>
    %53 = vector.shape_cast %52 : vector<4x16x8xf32> to vector<64x8xf32>
    %54 = vector.extract_strided_slice %16 {offsets = [0, 0], sizes = [64, 8], strides = [1, 1]} : vector<64x32xf32> to vector<64x8xf32>
    %55 = arith.mulf %53, %54 : vector<64x8xf32>
    %56 = arith.truncf %55 : vector<64x8xf32> to vector<64x8xbf16>
    %c0_26 = arith.constant 0 : index
    %c0_27 = arith.constant 0 : index
    %57 = vector.load %arg8[%c0_26, %c0_27] : memref<32x128xbf16, #tpu.memory_space<vmem>>, vector<8x128xbf16>
    %cst_28 = arith.constant dense<0.000000e+00> : vector<64x128xf32>
    %58 = tpu.matmul %56, %57, %cst_28 {dimension_numbers = #tpu.dot_dimension_numbers<[1], [0], [0], [1], [0, 0, 1, 1], [], []>} : vector<64x8xbf16>, vector<8x128xbf16>, vector<64x128xf32> -> vector<64x128xf32>
    %59 = arith.addf %25, %58 : vector<64x128xf32>
    %60 = vector.extract_strided_slice %18 {offsets = [0, 0, 8], sizes = [4, 16, 8], strides = [1, 1, 1]} : vector<4x16x32xf32> to vector<4x16x8xf32>
    %61 = arith.truncf %60 : vector<4x16x8xf32> to vector<4x16x8xbf16>
    %62 = vector.extract_strided_slice %20 {offsets = [0, 0, 8], sizes = [4, 32, 8], strides = [1, 1, 1]} : vector<4x32x32xf32> to vector<4x32x8xf32>
    %63 = arith.truncf %62 : vector<4x32x8xf32> to vector<4x32x8xbf16>
    %64 = vector.extract_strided_slice %22 {offsets = [0, 0, 8], sizes = [4, 32, 8], strides = [1, 1, 1]} : vector<4x32x32xf32> to vector<4x32x8xf32>
    %65 = arith.truncf %64 : vector<4x32x8xf32> to vector<4x32x8xbf16>
    "tpu.trace_start"() <{level = 10 : i32, message = "sqd,skd->sqk"}> : () -> ()
    %cst_29 = arith.constant dense<0.000000e+00> : vector<4x16x32xf32>
    %66 = tpu.matmul %61, %63, %cst_29 {dimension_numbers = #tpu.dot_dimension_numbers<[2], [2], [1], [1], [0, 0, 0, 1, 1, 1], [0], [0]>} : vector<4x16x8xbf16>, vector<4x32x8xbf16>, vector<4x16x32xf32> -> vector<4x16x32xf32>
    "tpu.trace_stop"() : () -> ()
    %c0_30 = arith.constant 0 : index
    %c1 = arith.constant 1 : index
    %c0_31 = arith.constant 0 : index
    %c0_32 = arith.constant 0 : index
    %67 = vector.load %arg4[%c0_30, %c1, %c0_31, %c0_32] : memref<1x4x16x32xbf16, #tpu.memory_space<vmem>>, vector<1x1x16x32xbf16>
    %68 = vector.shape_cast %67 : vector<1x1x16x32xbf16> to vector<16x32xbf16>
    %69 = arith.extf %68 : vector<16x32xbf16> to vector<16x32xf32>
    %70 = vector.shape_cast %69 : vector<16x32xf32> to vector<1x16x32xf32>
    %71 = vector.broadcast %70 : vector<1x16x32xf32> to vector<4x16x32xf32>
    %72 = arith.addf %66, %71 : vector<4x16x32xf32>
    %73 = vector.broadcast %24 : vector<4x1x32xf32> to vector<4x16x32xf32>
    %74 = arith.addf %72, %73 : vector<4x16x32xf32>
    %cst_33 = arith.constant dense<0xFF800000> : vector<4x16xf32>
    %75 = vector.multi_reduction <maximumf>, %74, %cst_33 [2] : vector<4x16x32xf32> to vector<4x16xf32>
    %76 = vector.shape_cast %75 : vector<4x16xf32> to vector<4x16x1xf32>
    %77 = vector.broadcast %76 : vector<4x16x1xf32> to vector<4x16x32xf32>
    %78 = arith.subf %74, %77 : vector<4x16x32xf32>
    %79 = math.exp %78 : vector<4x16x32xf32>
    %cst_34 = arith.constant dense<0.000000e+00> : vector<4x16xf32>
    %80 = vector.multi_reduction <add>, %79, %cst_34 [2] : vector<4x16x32xf32> to vector<4x16xf32>
    %81 = vector.shape_cast %80 : vector<4x16xf32> to vector<4x16x1xf32>
    %82 = arith.truncf %79 : vector<4x16x32xf32> to vector<4x16x32xbf16>
    "tpu.trace_start"() <{level = 10 : i32, message = "sqk,skd->sqd"}> : () -> ()
    %cst_35 = arith.constant dense<0.000000e+00> : vector<4x16x8xf32>
    %83 = tpu.matmul %82, %65, %cst_35 {dimension_numbers = #tpu.dot_dimension_numbers<[2], [1], [1], [2], [0, 0, 0, 1, 1, 2], [0], [0]>} : vector<4x16x32xbf16>, vector<4x32x8xbf16>, vector<4x16x8xf32> -> vector<4x16x8xf32>
    "tpu.trace_stop"() : () -> ()
    %84 = tpu.reciprocal %81 {approx = true} : vector<4x16x1xf32> -> vector<4x16x1xf32>
    %85 = vector.broadcast %84 : vector<4x16x1xf32> to vector<4x16x8xf32>
    %86 = arith.mulf %83, %85 : vector<4x16x8xf32>
    %87 = vector.shape_cast %86 : vector<4x16x8xf32> to vector<64x8xf32>
    %88 = vector.extract_strided_slice %16 {offsets = [0, 8], sizes = [64, 8], strides = [1, 1]} : vector<64x32xf32> to vector<64x8xf32>
    %89 = arith.mulf %87, %88 : vector<64x8xf32>
    %90 = arith.truncf %89 : vector<64x8xf32> to vector<64x8xbf16>
    %c8 = arith.constant 8 : index
    %c0_36 = arith.constant 0 : index
    %91 = vector.load %arg8[%c8, %c0_36] : memref<32x128xbf16, #tpu.memory_space<vmem>>, vector<8x128xbf16>
    %cst_37 = arith.constant dense<0.000000e+00> : vector<64x128xf32>
    %92 = tpu.matmul %90, %91, %cst_37 {dimension_numbers = #tpu.dot_dimension_numbers<[1], [0], [0], [1], [0, 0, 1, 1], [], []>} : vector<64x8xbf16>, vector<8x128xbf16>, vector<64x128xf32> -> vector<64x128xf32>
    %93 = arith.addf %59, %92 : vector<64x128xf32>
    %94 = vector.extract_strided_slice %18 {offsets = [0, 0, 16], sizes = [4, 16, 8], strides = [1, 1, 1]} : vector<4x16x32xf32> to vector<4x16x8xf32>
    %95 = arith.truncf %94 : vector<4x16x8xf32> to vector<4x16x8xbf16>
    %96 = vector.extract_strided_slice %20 {offsets = [0, 0, 16], sizes = [4, 32, 8], strides = [1, 1, 1]} : vector<4x32x32xf32> to vector<4x32x8xf32>
    %97 = arith.truncf %96 : vector<4x32x8xf32> to vector<4x32x8xbf16>
    %98 = vector.extract_strided_slice %22 {offsets = [0, 0, 16], sizes = [4, 32, 8], strides = [1, 1, 1]} : vector<4x32x32xf32> to vector<4x32x8xf32>
    %99 = arith.truncf %98 : vector<4x32x8xf32> to vector<4x32x8xbf16>
    "tpu.trace_start"() <{level = 10 : i32, message = "sqd,skd->sqk"}> : () -> ()
    %cst_38 = arith.constant dense<0.000000e+00> : vector<4x16x32xf32>
    %100 = tpu.matmul %95, %97, %cst_38 {dimension_numbers = #tpu.dot_dimension_numbers<[2], [2], [1], [1], [0, 0, 0, 1, 1, 1], [0], [0]>} : vector<4x16x8xbf16>, vector<4x32x8xbf16>, vector<4x16x32xf32> -> vector<4x16x32xf32>
    "tpu.trace_stop"() : () -> ()
    %c0_39 = arith.constant 0 : index
    %c2 = arith.constant 2 : index
    %c0_40 = arith.constant 0 : index
    %c0_41 = arith.constant 0 : index
    %101 = vector.load %arg4[%c0_39, %c2, %c0_40, %c0_41] : memref<1x4x16x32xbf16, #tpu.memory_space<vmem>>, vector<1x1x16x32xbf16>
    %102 = vector.shape_cast %101 : vector<1x1x16x32xbf16> to vector<16x32xbf16>
    %103 = arith.extf %102 : vector<16x32xbf16> to vector<16x32xf32>
    %104 = vector.shape_cast %103 : vector<16x32xf32> to vector<1x16x32xf32>
    %105 = vector.broadcast %104 : vector<1x16x32xf32> to vector<4x16x32xf32>
    %106 = arith.addf %100, %105 : vector<4x16x32xf32>
    %107 = vector.broadcast %24 : vector<4x1x32xf32> to vector<4x16x32xf32>
    %108 = arith.addf %106, %107 : vector<4x16x32xf32>
    %cst_42 = arith.constant dense<0xFF800000> : vector<4x16xf32>
    %109 = vector.multi_reduction <maximumf>, %108, %cst_42 [2] : vector<4x16x32xf32> to vector<4x16xf32>
    %110 = vector.shape_cast %109 : vector<4x16xf32> to vector<4x16x1xf32>
    %111 = vector.broadcast %110 : vector<4x16x1xf32> to vector<4x16x32xf32>
    %112 = arith.subf %108, %111 : vector<4x16x32xf32>
    %113 = math.exp %112 : vector<4x16x32xf32>
    %cst_43 = arith.constant dense<0.000000e+00> : vector<4x16xf32>
    %114 = vector.multi_reduction <add>, %113, %cst_43 [2] : vector<4x16x32xf32> to vector<4x16xf32>
    %115 = vector.shape_cast %114 : vector<4x16xf32> to vector<4x16x1xf32>
    %116 = arith.truncf %113 : vector<4x16x32xf32> to vector<4x16x32xbf16>
    "tpu.trace_start"() <{level = 10 : i32, message = "sqk,skd->sqd"}> : () -> ()
    %cst_44 = arith.constant dense<0.000000e+00> : vector<4x16x8xf32>
    %117 = tpu.matmul %116, %99, %cst_44 {dimension_numbers = #tpu.dot_dimension_numbers<[2], [1], [1], [2], [0, 0, 0, 1, 1, 2], [0], [0]>} : vector<4x16x32xbf16>, vector<4x32x8xbf16>, vector<4x16x8xf32> -> vector<4x16x8xf32>
    "tpu.trace_stop"() : () -> ()
    %118 = tpu.reciprocal %115 {approx = true} : vector<4x16x1xf32> -> vector<4x16x1xf32>
    %119 = vector.broadcast %118 : vector<4x16x1xf32> to vector<4x16x8xf32>
    %120 = arith.mulf %117, %119 : vector<4x16x8xf32>
    %121 = vector.shape_cast %120 : vector<4x16x8xf32> to vector<64x8xf32>
    %122 = vector.extract_strided_slice %16 {offsets = [0, 16], sizes = [64, 8], strides = [1, 1]} : vector<64x32xf32> to vector<64x8xf32>
    %123 = arith.mulf %121, %122 : vector<64x8xf32>
    %124 = arith.truncf %123 : vector<64x8xf32> to vector<64x8xbf16>
    %c16 = arith.constant 16 : index
    %c0_45 = arith.constant 0 : index
    %125 = vector.load %arg8[%c16, %c0_45] : memref<32x128xbf16, #tpu.memory_space<vmem>>, vector<8x128xbf16>
    %cst_46 = arith.constant dense<0.000000e+00> : vector<64x128xf32>
    %126 = tpu.matmul %124, %125, %cst_46 {dimension_numbers = #tpu.dot_dimension_numbers<[1], [0], [0], [1], [0, 0, 1, 1], [], []>} : vector<64x8xbf16>, vector<8x128xbf16>, vector<64x128xf32> -> vector<64x128xf32>
    %127 = arith.addf %93, %126 : vector<64x128xf32>
    %128 = vector.extract_strided_slice %18 {offsets = [0, 0, 24], sizes = [4, 16, 8], strides = [1, 1, 1]} : vector<4x16x32xf32> to vector<4x16x8xf32>
    %129 = arith.truncf %128 : vector<4x16x8xf32> to vector<4x16x8xbf16>
    %130 = vector.extract_strided_slice %20 {offsets = [0, 0, 24], sizes = [4, 32, 8], strides = [1, 1, 1]} : vector<4x32x32xf32> to vector<4x32x8xf32>
    %131 = arith.truncf %130 : vector<4x32x8xf32> to vector<4x32x8xbf16>
    %132 = vector.extract_strided_slice %22 {offsets = [0, 0, 24], sizes = [4, 32, 8], strides = [1, 1, 1]} : vector<4x32x32xf32> to vector<4x32x8xf32>
    %133 = arith.truncf %132 : vector<4x32x8xf32> to vector<4x32x8xbf16>
    "tpu.trace_start"() <{level = 10 : i32, message = "sqd,skd->sqk"}> : () -> ()
    %cst_47 = arith.constant dense<0.000000e+00> : vector<4x16x32xf32>
    %134 = tpu.matmul %129, %131, %cst_47 {dimension_numbers = #tpu.dot_dimension_numbers<[2], [2], [1], [1], [0, 0, 0, 1, 1, 1], [0], [0]>} : vector<4x16x8xbf16>, vector<4x32x8xbf16>, vector<4x16x32xf32> -> vector<4x16x32xf32>
    "tpu.trace_stop"() : () -> ()
    %c0_48 = arith.constant 0 : index
    %c3 = arith.constant 3 : index
    %c0_49 = arith.constant 0 : index
    %c0_50 = arith.constant 0 : index
    %135 = vector.load %arg4[%c0_48, %c3, %c0_49, %c0_50] : memref<1x4x16x32xbf16, #tpu.memory_space<vmem>>, vector<1x1x16x32xbf16>
    %136 = vector.shape_cast %135 : vector<1x1x16x32xbf16> to vector<16x32xbf16>
    %137 = arith.extf %136 : vector<16x32xbf16> to vector<16x32xf32>
    %138 = vector.shape_cast %137 : vector<16x32xf32> to vector<1x16x32xf32>
    %139 = vector.broadcast %138 : vector<1x16x32xf32> to vector<4x16x32xf32>
    %140 = arith.addf %134, %139 : vector<4x16x32xf32>
    %141 = vector.broadcast %24 : vector<4x1x32xf32> to vector<4x16x32xf32>
    %142 = arith.addf %140, %141 : vector<4x16x32xf32>
    %cst_51 = arith.constant dense<0xFF800000> : vector<4x16xf32>
    %143 = vector.multi_reduction <maximumf>, %142, %cst_51 [2] : vector<4x16x32xf32> to vector<4x16xf32>
    %144 = vector.shape_cast %143 : vector<4x16xf32> to vector<4x16x1xf32>
    %145 = vector.broadcast %144 : vector<4x16x1xf32> to vector<4x16x32xf32>
    %146 = arith.subf %142, %145 : vector<4x16x32xf32>
    %147 = math.exp %146 : vector<4x16x32xf32>
    %cst_52 = arith.constant dense<0.000000e+00> : vector<4x16xf32>
    %148 = vector.multi_reduction <add>, %147, %cst_52 [2] : vector<4x16x32xf32> to vector<4x16xf32>
    %149 = vector.shape_cast %148 : vector<4x16xf32> to vector<4x16x1xf32>
    %150 = arith.truncf %147 : vector<4x16x32xf32> to vector<4x16x32xbf16>
    "tpu.trace_start"() <{level = 10 : i32, message = "sqk,skd->sqd"}> : () -> ()
    %cst_53 = arith.constant dense<0.000000e+00> : vector<4x16x8xf32>
    %151 = tpu.matmul %150, %133, %cst_53 {dimension_numbers = #tpu.dot_dimension_numbers<[2], [1], [1], [2], [0, 0, 0, 1, 1, 2], [0], [0]>} : vector<4x16x32xbf16>, vector<4x32x8xbf16>, vector<4x16x8xf32> -> vector<4x16x8xf32>
    "tpu.trace_stop"() : () -> ()
    %152 = tpu.reciprocal %149 {approx = true} : vector<4x16x1xf32> -> vector<4x16x1xf32>
    %153 = vector.broadcast %152 : vector<4x16x1xf32> to vector<4x16x8xf32>
    %154 = arith.mulf %151, %153 : vector<4x16x8xf32>
    %155 = vector.shape_cast %154 : vector<4x16x8xf32> to vector<64x8xf32>
    %156 = vector.extract_strided_slice %16 {offsets = [0, 24], sizes = [64, 8], strides = [1, 1]} : vector<64x32xf32> to vector<64x8xf32>
    %157 = arith.mulf %155, %156 : vector<64x8xf32>
    %158 = arith.truncf %157 : vector<64x8xf32> to vector<64x8xbf16>
    %c24 = arith.constant 24 : index
    %c0_54 = arith.constant 0 : index
    %159 = vector.load %arg8[%c24, %c0_54] : memref<32x128xbf16, #tpu.memory_space<vmem>>, vector<8x128xbf16>
    %cst_55 = arith.constant dense<0.000000e+00> : vector<64x128xf32>
    %160 = tpu.matmul %158, %159, %cst_55 {dimension_numbers = #tpu.dot_dimension_numbers<[1], [0], [0], [1], [0, 0, 1, 1], [], []>} : vector<64x8xbf16>, vector<8x128xbf16>, vector<64x128xf32> -> vector<64x128xf32>
    %161 = arith.addf %127, %160 : vector<64x128xf32>
    %c0_56 = arith.constant 0 : index
    %c0_57 = arith.constant 0 : index
    %162 = vector.load %arg9[%c0_56, %c0_57] : memref<1x128xf32, #tpu.memory_space<vmem>>, vector<1x128xf32>
    %163 = vector.broadcast %162 : vector<1x128xf32> to vector<64x128xf32>
    %164 = arith.addf %161, %163 : vector<64x128xf32>
    %c0_58 = arith.constant 0 : index
    %c0_59 = arith.constant 0 : index
    %c0_60 = arith.constant 0 : index
    %165 = vector.load %arg10[%c0_58, %c0_59, %c0_60] : memref<1x64x128xf32, #tpu.memory_space<vmem>>, vector<1x64x128xf32>
    %166 = vector.shape_cast %165 : vector<1x64x128xf32> to vector<64x128xf32>
    %167 = vector.shape_cast %164 : vector<64x128xf32> to vector<1x64x128xf32>
    tpu.vector_store %arg10[%c0_58, %c0_59, %c0_60], %167 {strides = array<i32>} : memref<1x64x128xf32, #tpu.memory_space<vmem>>, vector<1x64x128xf32>,
    return
  }
  func.func @transform_0(%arg0: i32) -> (i32, i32, i32) {
    %c0_i32 = arith.constant 0 : i32
    %c0_i32_0 = arith.constant 0 : i32
    %c0_i32_1 = arith.constant 0 : i32
    return %arg0, %c0_i32, %c0_i32_0 : i32, i32, i32
  }
  func.func @transform_1(%arg0: i32) -> (i32, i32, i32) {
    %c0_i32 = arith.constant 0 : i32
    %c0_i32_0 = arith.constant 0 : i32
    %c0_i32_1 = arith.constant 0 : i32
    return %arg0, %c0_i32, %c0_i32_0 : i32, i32, i32
  }
  func.func @transform_2(%arg0: i32) -> (i32, i32, i32, i32) {
    %c0_i32 = arith.constant 0 : i32
    %c0_i32_0 = arith.constant 0 : i32
    %c0_i32_1 = arith.constant 0 : i32
    %c0_i32_2 = arith.constant 0 : i32
    return %arg0, %c0_i32, %c0_i32_0, %c0_i32_1 : i32, i32, i32, i32
  }
  func.func @transform_3(%arg0: i32) -> (i32, i32, i32, i32) {
    %c0_i32 = arith.constant 0 : i32
    %c0_i32_0 = arith.constant 0 : i32
    %c0_i32_1 = arith.constant 0 : i32
    %c0_i32_2 = arith.constant 0 : i32
    return %arg0, %c0_i32, %c0_i32_0, %c0_i32_1 : i32, i32, i32, i32
  }
  func.func @transform_4(%arg0: i32) -> (i32, i32) {
    %c0_i32 = arith.constant 0 : i32
    %c0_i32_0 = arith.constant 0 : i32
    %c0_i32_1 = arith.constant 0 : i32
    return %c0_i32, %c0_i32_0 : i32, i32
  }
  func.func @transform_5(%arg0: i32) -> (i32, i32) {
    %c0_i32 = arith.constant 0 : i32
    %c0_i32_0 = arith.constant 0 : i32
    %c0_i32_1 = arith.constant 0 : i32
    return %c0_i32, %c0_i32_0 : i32, i32
  }
  func.func @transform_6(%arg0: i32) -> (i32, i32) {
    %c0_i32 = arith.constant 0 : i32
    %c0_i32_0 = arith.constant 0 : i32
    %c0_i32_1 = arith.constant 0 : i32
    return %c0_i32, %c0_i32_0 : i32, i32
  }
  func.func @transform_7(%arg0: i32) -> (i32, i32) {
    %c0_i32 = arith.constant 0 : i32
    %c0_i32_0 = arith.constant 0 : i32
    %c0_i32_1 = arith.constant 0 : i32
    return %c0_i32, %c0_i32_0 : i32, i32
  }
  func.func @transform_8(%arg0: i32) -> (i32, i32) {
    %c0_i32 = arith.constant 0 : i32
    %c0_i32_0 = arith.constant 0 : i32
    %c0_i32_1 = arith.constant 0 : i32
    return %c0_i32, %c0_i32_0 : i32, i32
  }
  func.func @transform_9(%arg0: i32) -> (i32, i32, i32) {
    %c0_i32 = arith.constant 0 : i32
    %c0_i32_0 = arith.constant 0 : i32
    %c0_i32_1 = arith.constant 0 : i32
    return %arg0, %c0_i32, %c0_i32_0 : i32, i32, i32
  }
}

</mosaic_0001>

<llo_original>
// kernel: tpu_custom_call.1
$region0: #{tpu_custom_call.1}
  #allocation0 [shape = 'u32[]', space=smem, size = 0x4, offset = 0x4, fixed_abs, tag = 'smem constant byte address 0x4 - core index']
  #allocation1 [shape = 'u32[144,128]{1,0:T(1,128)}', space=vmem, size = 0x12000, scoped, tag = 'internal scratch']
  %s0 = inlined_call_operand.vmem [shape: bf16[2,64,32], index: 0, kind: input, shape index: {}]
  %s1 = inlined_call_operand.vmem [shape: bf16[2,128,32], index: 1, kind: input, shape index: {}]
  %s2 = inlined_call_operand.vmem [shape: f32[2,4,1,32], index: 2, kind: input, shape index: {}]
  %s3 = inlined_call_operand.vmem [shape: bf16[2,4,16,32], index: 3, kind: input, shape index: {}]
  %s4 = inlined_call_operand.vmem [shape: bf16[32,64], index: 4, kind: input, shape index: {}]
  %s5 = inlined_call_operand.vmem [shape: f32[1,32], index: 5, kind: input, shape index: {}]
  %s6 = inlined_call_operand.vmem [shape: bf16[32,64], index: 6, kind: input, shape index: {}]
  %s7 = inlined_call_operand.vmem [shape: bf16[32,128], index: 7, kind: input, shape index: {}]
  %s8 = inlined_call_operand.vmem [shape: f32[1,128], index: 8, kind: input, shape index: {}]
  %s9 = inlined_call_operand.hbm [shape: f32[2,64,128], index: 9, kind: output, shape index: {}]
  %s10 = sld [smem:[#allocation0]]
  $region69: #{tpu_custom_call.1} parent=0
    _
  %s12 = ssub.s32 1, %s10
  %s13 = scalar_select 0, %s12, %s10
  $region1: #{tpu_custom_call.1} parent=0
    #allocation2 [shape = 'u8[65536]{0}', space=vmem, size = 0x10000, scoped, tag = 'output window, operand 0']
    #allocation3 [shape = 's32[2]{0}', space=sflag, size = 0x8, scoped, tag = 'scoped memory for tpu_custom_call.1']
    %14 = vsyncpa [#allocation3], 0
    %s15 = scalar_lea.sflag [#allocation3], 1
    %16 = vsyncpa %s15, 0
    loop: start=0, step=1, limit=4
    $region2: #{tpu_custom_call.1} parent=1 // loop_pre_header
      _
    $region3: #{tpu_custom_call.1} parent=1 // loop_header
      %s18 = sphi 0, %s22
      %p19 = scmp.ge.s32.totalorder %s18, 4
      %s28 = sphi 0, %s30
      %s31 = sphi 0, %s28
      %s32 = sphi 0, %s31
      %s48 = sphi 0, %s32
      %s54 = sphi 0, %s56
      %s57 = sphi 0, %s54
      %s58 = sphi 0, %s57
      %s74 = sphi 0, %s58
      %s80 = sphi 0, %s82
      %s83 = sphi 0, %s80
      %s84 = sphi 0, %s83
      %s100 = sphi 0, %s84
      %s106 = sphi 0, %s108
      %s109 = sphi 0, %s106
      %s110 = sphi 0, %s109
      %s126 = sphi 0, %s110
      %s130 = sphi 0, %s130
      %s132 = sphi 0, %s130
      %s133 = sphi 0, %s132
      %s147 = sphi 0, %s133
      %s151 = sphi 0, %s151
      %s153 = sphi 0, %s151
      %s154 = sphi 0, %s153
      %s168 = sphi 0, %s154
      %s172 = sphi 0, %s172
      %s174 = sphi 0, %s172
      %s175 = sphi 0, %s174
      %s189 = sphi 0, %s175
      %s193 = sphi 0, %s193
      %s195 = sphi 0, %s193
      %s196 = sphi 0, %s195
      %s210 = sphi 0, %s196
      %s214 = sphi 0, %s214
      %s216 = sphi 0, %s214
      %s217 = sphi 0, %s216
      %s231 = sphi 0, %s217
      %s237 = sphi 0, %s239
      %s240 = sphi 0, %s237
      %s241 = sphi 0, %s240
      %s257 = sphi 0, %s241
    $region4: #{tpu_custom_call.1} parent=1 // loop_header_branch
      %21 = sbr.rel (%p19) target = $region8
    $region5: #{tpu_custom_call.1} parent=1 // loop_body
      %s23 = ssub.s32 %s18, 1
      %s24 = ssub.s32 %s18, 2
      %s25 = sadd.s32 %s18, 1
      %s26 = ssub.s32 %s18, %s25
      %p27 = scmp.eq.s32.totalorder %s26, 0
      %s29 = sadd.s32 %s28, 1
      %s30 = scalar_select %p27, %s28, %s29
      %p33 = pneg %p27
      %p34 = scmp.eq.s32.totalorder %s18, 1
      %p35 = por %p33, %p34
      %p36 = scmp.ne.s32.totalorder %s28, %s31
      %p37 = scmp.eq.s32.totalorder %s18, 0
      %p38 = por %p36, %p37
      %p39 = scmp.ne.s32.totalorder %s28, %s31
      %p40 = scmp.eq.s32.totalorder %s23, 1
      %p41 = por %p39, %p40
      %p42 = scmp.ne.s32.totalorder %s31, %s32
      %p43 = scmp.eq.s32.totalorder %s23, 0
      %p44 = por %p42, %p43
      %p45 = scmp.ne.s32.totalorder %s31, %s32
      %p46 = scmp.eq.s32.totalorder %s24, 1
      %p47 = por %p45, %p46
      %p49 = scmp.ne.s32.totalorder %s32, %s48
      %p50 = scmp.eq.s32.totalorder %s24, 0
      %p51 = por %p49, %p50
      %s52 = ssub.s32 %s18, %s25
      %p53 = scmp.eq.s32.totalorder %s52, 0
      %s55 = sadd.s32 %s54, 1
      %s56 = scalar_select %p53, %s54, %s55
      %p59 = pneg %p53
      %p60 = scmp.eq.s32.totalorder %s18, 1
      %p61 = por %p59, %p60
      %p62 = scmp.ne.s32.totalorder %s54, %s57
      %p63 = scmp.eq.s32.totalorder %s18, 0
      %p64 = por %p62, %p63
      %p65 = scmp.ne.s32.totalorder %s54, %s57
      %p66 = scmp.eq.s32.totalorder %s23, 1
      %p67 = por %p65, %p66
      %p68 = scmp.ne.s32.totalorder %s57, %s58
      %p69 = scmp.eq.s32.totalorder %s23, 0
      %p70 = por %p68, %p69
      %p71 = scmp.ne.s32.totalorder %s57, %s58
      %p72 = scmp.eq.s32.totalorder %s24, 1
      %p73 = por %p71, %p72
      %p75 = scmp.ne.s32.totalorder %s58, %s74
      %p76 = scmp.eq.s32.totalorder %s24, 0
      %p77 = por %p75, %p76
      %s78 = ssub.s32 %s18, %s25
      %p79 = scmp.eq.s32.totalorder %s78, 0
      %s81 = sadd.s32 %s80, 1
      %s82 = scalar_select %p79, %s80, %s81
      %p85 = pneg %p79
      %p86 = scmp.eq.s32.totalorder %s18, 1
      %p87 = por %p85, %p86
      %p88 = scmp.ne.s32.totalorder %s80, %s83
      %p89 = scmp.eq.s32.totalorder %s18, 0
      %p90 = por %p88, %p89
      %p91 = scmp.ne.s32.totalorder %s80, %s83
      %p92 = scmp.eq.s32.totalorder %s23, 1
      %p93 = por %p91, %p92
      %p94 = scmp.ne.s32.totalorder %s83, %s84
      %p95 = scmp.eq.s32.totalorder %s23, 0
      %p96 = por %p94, %p95
      %p97 = scmp.ne.s32.totalorder %s83, %s84
      %p98 = scmp.eq.s32.totalorder %s24, 1
      %p99 = por %p97, %p98
      %p101 = scmp.ne.s32.totalorder %s84, %s100
      %p102 = scmp.eq.s32.totalorder %s24, 0
      %p103 = por %p101, %p102
      %s104 = ssub.s32 %s18, %s25
      %p105 = scmp.eq.s32.totalorder %s104, 0
      %s107 = sadd.s32 %s106, 1
      %s108 = scalar_select %p105, %s106, %s107
      %p111 = pneg %p105
      %p112 = scmp.eq.s32.totalorder %s18, 1
      %p113 = por %p111, %p112
      %p114 = scmp.ne.s32.totalorder %s106, %s109
      %p115 = scmp.eq.s32.totalorder %s18, 0
      %p116 = por %p114, %p115
      %p117 = scmp.ne.s32.totalorder %s106, %s109
      %p118 = scmp.eq.s32.totalorder %s23, 1
      %p119 = por %p117, %p118
      %p120 = scmp.ne.s32.totalorder %s109, %s110
      %p121 = scmp.eq.s32.totalorder %s23, 0
      %p122 = por %p120, %p121
      %p123 = scmp.ne.s32.totalorder %s109, %s110
      %p124 = scmp.eq.s32.totalorder %s24, 1
      %p125 = por %p123, %p124
      %p127 = scmp.ne.s32.totalorder %s110, %s126
      %p128 = scmp.eq.s32.totalorder %s24, 0
      %p129 = por %p127, %p128
      %s131 = sadd.s32 %s130, 1
      %p134 = scmp.eq.s32.totalorder %s18, 1
      %p135 = scmp.ne.s32.totalorder %s130, %s132
      %p136 = scmp.eq.s32.totalorder %s18, 0
      %p137 = por %p135, %p136
      %p138 = scmp.ne.s32.totalorder %s130, %s132
      %p139 = scmp.eq.s32.totalorder %s23, 1
      %p140 = por %p138, %p139
      %p141 = scmp.ne.s32.totalorder %s132, %s133
      %p142 = scmp.eq.s32.totalorder %s23, 0
      %p143 = por %p141, %p142
      %p144 = scmp.ne.s32.totalorder %s132, %s133
      %p145 = scmp.eq.s32.totalorder %s24, 1
      %p146 = por %p144, %p145
      %p148 = scmp.ne.s32.totalorder %s133, %s147
      %p149 = scmp.eq.s32.totalorder %s24, 0
      %p150 = por %p148, %p149
      %s152 = sadd.s32 %s151, 1
      %p155 = scmp.eq.s32.totalorder %s18, 1
      %p156 = scmp.ne.s32.totalorder %s151, %s153
      %p157 = scmp.eq.s32.totalorder %s18, 0
      %p158 = por %p156, %p157
      %p159 = scmp.ne.s32.totalorder %s151, %s153
      %p160 = scmp.eq.s32.totalorder %s23, 1
      %p161 = por %p159, %p160
      %p162 = scmp.ne.s32.totalorder %s153, %s154
      %p163 = scmp.eq.s32.totalorder %s23, 0
      %p164 = por %p162, %p163
      %p165 = scmp.ne.s32.totalorder %s153, %s154
      %p166 = scmp.eq.s32.totalorder %s24, 1
      %p167 = por %p165, %p166
      %p169 = scmp.ne.s32.totalorder %s154, %s168
      %p170 = scmp.eq.s32.totalorder %s24, 0
      %p171 = por %p169, %p170
      %s173 = sadd.s32 %s172, 1
      %p176 = scmp.eq.s32.totalorder %s18, 1
      %p177 = scmp.ne.s32.totalorder %s172, %s174
      %p178 = scmp.eq.s32.totalorder %s18, 0
      %p179 = por %p177, %p178
      %p180 = scmp.ne.s32.totalorder %s172, %s174
      %p181 = scmp.eq.s32.totalorder %s23, 1
      %p182 = por %p180, %p181
      %p183 = scmp.ne.s32.totalorder %s174, %s175
      %p184 = scmp.eq.s32.totalorder %s23, 0
      %p185 = por %p183, %p184
      %p186 = scmp.ne.s32.totalorder %s174, %s175
      %p187 = scmp.eq.s32.totalorder %s24, 1
      %p188 = por %p186, %p187
      %p190 = scmp.ne.s32.totalorder %s175, %s189
      %p191 = scmp.eq.s32.totalorder %s24, 0
      %p192 = por %p190, %p191
      %s194 = sadd.s32 %s193, 1
      %p197 = scmp.eq.s32.totalorder %s18, 1
      %p198 = scmp.ne.s32.totalorder %s193, %s195
      %p199 = scmp.eq.s32.totalorder %s18, 0
      %p200 = por %p198, %p199
      %p201 = scmp.ne.s32.totalorder %s193, %s195
      %p202 = scmp.eq.s32.totalorder %s23, 1
      %p203 = por %p201, %p202
      %p204 = scmp.ne.s32.totalorder %s195, %s196
      %p205 = scmp.eq.s32.totalorder %s23, 0
      %p206 = por %p204, %p205
      %p207 = scmp.ne.s32.totalorder %s195, %s196
      %p208 = scmp.eq.s32.totalorder %s24, 1
      %p209 = por %p207, %p208
      %p211 = scmp.ne.s32.totalorder %s196, %s210
      %p212 = scmp.eq.s32.totalorder %s24, 0
      %p213 = por %p211, %p212
      %s215 = sadd.s32 %s214, 1
      %p218 = scmp.eq.s32.totalorder %s18, 1
      %p219 = scmp.ne.s32.totalorder %s214, %s216
      %p220 = scmp.eq.s32.totalorder %s18, 0
      %p221 = por %p219, %p220
      %p222 = scmp.ne.s32.totalorder %s214, %s216
      %p223 = scmp.eq.s32.totalorder %s23, 1
      %p224 = por %p222, %p223
      %p225 = scmp.ne.s32.totalorder %s216, %s217
      %p226 = scmp.eq.s32.totalorder %s23, 0
      %p227 = por %p225, %p226
      %p228 = scmp.ne.s32.totalorder %s216, %s217
      %p229 = scmp.eq.s32.totalorder %s24, 1
      %p230 = por %p228, %p229
      %p232 = scmp.ne.s32.totalorder %s217, %s231
      %p233 = scmp.eq.s32.totalorder %s24, 0
      %p234 = por %p232, %p233
      %s235 = ssub.s32 %s18, %s25
      %p236 = scmp.eq.s32.totalorder %s235, 0
      %s238 = sadd.s32 %s237, 1
      %s239 = scalar_select %p236, %s237, %s238
      %p242 = pneg %p236
      %p243 = scmp.eq.s32.totalorder %s18, 1
      %p244 = por %p242, %p243
      %p245 = scmp.ne.s32.totalorder %s237, %s240
      %p246 = scmp.eq.s32.totalorder %s18, 0
      %p247 = por %p245, %p246
      %p248 = scmp.ne.s32.totalorder %s237, %s240
      %p249 = scmp.eq.s32.totalorder %s23, 1
      %p250 = por %p248, %p249
      %p251 = scmp.ne.s32.totalorder %s240, %s241
      %p252 = scmp.eq.s32.totalorder %s23, 0
      %p253 = por %p251, %p252
      %p254 = scmp.ne.s32.totalorder %s240, %s241
      %p255 = scmp.eq.s32.totalorder %s24, 1
      %p256 = por %p254, %p255
      %p258 = scmp.ne.s32.totalorder %s241, %s257
      %p259 = scmp.eq.s32.totalorder %s24, 0
      %p260 = por %p258, %p259
      %p261 = scmp.le.s32.totalorder 1, %s18
      %p262 = scmp.lt.s32.totalorder %s18, 3
      %p263 = pnand %p261, %p262
      %p264 = pneg %p263
      // Predicated region
      $region9: #{tpu_custom_call.1} parent=5 // pred_check
        _
      $region10: #{tpu_custom_call.1} parent=5 // pred_check_branch
        %266 = sbr.rel (%p263) target = $region12
      $region11: #{tpu_custom_call.1} parent=5 // pred_region
        %s267 = ssub.s32 %s18, 1
        // Predicated region
        $region13: #{tpu_custom_call.1} parent=11 // pred_check
          %p268 = pneg %p143
        $region14: #{tpu_custom_call.1} parent=11 // pred_check_branch
          %270 = sbr.rel (%p268) target = $region16
        $region15: #{tpu_custom_call.1} parent=11 // pred_region
          _
        $region16: #{tpu_custom_call.1} parent=11 // pred_fallthru
          _
        // Predicated region
        $region17: #{tpu_custom_call.1} parent=11 // pred_check
          %p271 = pneg %p164
        $region18: #{tpu_custom_call.1} parent=11 // pred_check_branch
          %273 = sbr.rel (%p271) target = $region20
        $region19: #{tpu_custom_call.1} parent=11 // pred_region
          _
        $region20: #{tpu_custom_call.1} parent=11 // pred_fallthru
          _
        // Predicated region
        $region21: #{tpu_custom_call.1} parent=11 // pred_check
          %p274 = pneg %p185
        $region22: #{tpu_custom_call.1} parent=11 // pred_check_branch
          %276 = sbr.rel (%p274) target = $region24
        $region23: #{tpu_custom_call.1} parent=11 // pred_region
          _
        $region24: #{tpu_custom_call.1} parent=11 // pred_fallthru
          _
        // Predicated region
        $region25: #{tpu_custom_call.1} parent=11 // pred_check
          %p277 = pneg %p206
        $region26: #{tpu_custom_call.1} parent=11 // pred_check_branch
          %279 = sbr.rel (%p277) target = $region28
        $region27: #{tpu_custom_call.1} parent=11 // pred_region
          _
        $region28: #{tpu_custom_call.1} parent=11 // pred_fallthru
          _
        // Predicated region
        $region29: #{tpu_custom_call.1} parent=11 // pred_check
          %p280 = pneg %p227
        $region30: #{tpu_custom_call.1} parent=11 // pred_check_branch
          %282 = sbr.rel (%p280) target = $region32
        $region31: #{tpu_custom_call.1} parent=11 // pred_region
          _
        $region32: #{tpu_custom_call.1} parent=11 // pred_fallthru
          _
      $region12: #{tpu_custom_call.1} parent=5 // pred_fallthru
        _
      %p283 = scmp.lt.s32.totalorder %s18, 2
      // Predicated region
      $region33: #{tpu_custom_call.1} parent=5 // pred_check
        %p284 = pneg %p283
      $region34: #{tpu_custom_call.1} parent=5 // pred_check_branch
        %286 = sbr.rel (%p284) target = $region36
      $region35: #{tpu_custom_call.1} parent=5 // pred_region
        // Predicated region
        $region37: #{tpu_custom_call.1} parent=35 // pred_check
          %p287 = pneg %p38
        $region38: #{tpu_custom_call.1} parent=35 // pred_check_branch
          %289 = sbr.rel (%p287) target = $region40
        $region39: #{tpu_custom_call.1} parent=35 // pred_region
          %p290 = scmp.lt.s32.totalorder %s18, 1
          %s291 = scalar_select %p290, %s18, 1
          %s292 = smul.addr %s291, 8
          %s293 = smul.addr %s292, 4
          %s294 = scalar_lea.vmem %s0, %s293
        $region40: #{tpu_custom_call.1} parent=35 // pred_fallthru
          _
        // Predicated region
        $region41: #{tpu_custom_call.1} parent=35 // pred_check
          %p295 = pneg %p64
        $region42: #{tpu_custom_call.1} parent=35 // pred_check_branch
          %297 = sbr.rel (%p295) target = $region44
        $region43: #{tpu_custom_call.1} parent=35 // pred_region
          %p298 = scmp.lt.s32.totalorder %s18, 1
          %s299 = scalar_select %p298, %s18, 1
          %s300 = smul.addr %s299, 16
          %s301 = smul.addr %s300, 4
          %s302 = scalar_lea.vmem %s1, %s301
        $region44: #{tpu_custom_call.1} parent=35 // pred_fallthru
          _
        // Predicated region
        $region45: #{tpu_custom_call.1} parent=35 // pred_check
          %p303 = pneg %p90
        $region46: #{tpu_custom_call.1} parent=35 // pred_check_branch
          %305 = sbr.rel (%p303) target = $region48
        $region47: #{tpu_custom_call.1} parent=35 // pred_region
          %p306 = scmp.lt.s32.totalorder %s18, 1
          %s307 = scalar_select %p306, %s18, 1
          %s308 = smul.addr %s307, 4
          %s309 = scalar_lea.vmem %s2, %s308
        $region48: #{tpu_custom_call.1} parent=35 // pred_fallthru
          _
        // Predicated region
        $region49: #{tpu_custom_call.1} parent=35 // pred_check
          %p310 = pneg %p116
        $region50: #{tpu_custom_call.1} parent=35 // pred_check_branch
          %312 = sbr.rel (%p310) target = $region52
        $region51: #{tpu_custom_call.1} parent=35 // pred_region
          %p313 = scmp.lt.s32.totalorder %s18, 1
          %s314 = scalar_select %p313, %s18, 1
          %s315 = smul.addr %s314, 8
          %s316 = smul.addr %s315, 4
          %s317 = scalar_lea.vmem %s3, %s316
        $region52: #{tpu_custom_call.1} parent=35 // pred_fallthru
          _
      $region36: #{tpu_custom_call.1} parent=5 // pred_fallthru
        _
      %p318 = scmp.le.s32.totalorder 1, %s18
      %p319 = scmp.lt.s32.totalorder %s18, 3
      %p320 = pnand %p318, %p319
      %p321 = pneg %p320
      // Predicated region
      $region53: #{tpu_custom_call.1} parent=5 // pred_check
        _
      $region54: #{tpu_custom_call.1} parent=5 // pred_check_branch
        %323 = sbr.rel (%p320) target = $region56
      $region55: #{tpu_custom_call.1} parent=5 // pred_region
        %s324 = ssub.s32 %s18, 1
        %p325 = scmp.lt.s32.totalorder %s23, 1
        %s326 = scalar_select %p325, %s23, 1
        %s327 = smul.addr %s326, 8
        %s328 = smul.addr %s327, 4
        %s329 = scalar_lea.vmem %s0, %s328
        %p330 = pneg %p44
        %p331 = pneg %p41
        %p332 = scmp.lt.s32.totalorder %s23, 1
        %s333 = scalar_select %p332, %s23, 1
        %s334 = smul.addr %s333, 16
        %s335 = smul.addr %s334, 4
        %s336 = scalar_lea.vmem %s1, %s335
        %p337 = pneg %p70
        %p338 = pneg %p67
        %p339 = scmp.lt.s32.totalorder %s23, 1
        %s340 = scalar_select %p339, %s23, 1
        %s341 = smul.addr %s340, 4
        %s342 = scalar_lea.vmem %s2, %s341
        %p343 = pneg %p96
        %p344 = pneg %p93
        %p345 = scmp.lt.s32.totalorder %s23, 1
        %s346 = scalar_select %p345, %s23, 1
        %s347 = smul.addr %s346, 8
        %s348 = smul.addr %s347, 4
        %s349 = scalar_lea.vmem %s3, %s348
        %p350 = pneg %p122
        %p351 = pneg %p119
        %p352 = pneg %p143
        %p353 = pneg %p140
        %p354 = pneg %p164
        %p355 = pneg %p161
        %p356 = pneg %p185
        %p357 = pneg %p182
        %p358 = pneg %p206
        %p359 = pneg %p203
        %p360 = pneg %p227
        %p361 = pneg %p224
        %p362 = pneg %p253
        %p363 = pneg %p250
        %s364 = sand.u32 %s240, 1
        %s365 = scalar_lea.sflag [#allocation3], %s364
        %s366 = sand.u32 %s240, 1
        %s367 = smul.addr %s366, 64
        %s368 = scalar_lea.vmem [#allocation2], %s367
        %p369 = scmp.lt.s32.totalorder %s23, 1
        %s370 = scalar_select %p369, %s23, 1
        %s371 = smul.addr %s370, 8
        %s372 = smul.addr %s371, 4
        %s373 = scalar_lea.vmem %s0, %s372
        %p374 = scmp.lt.s32.totalorder %s23, 1
        %s375 = scalar_select %p374, %s23, 1
        %s376 = smul.addr %s375, 16
        %s377 = smul.addr %s376, 4
        %s378 = scalar_lea.vmem %s1, %s377
        %p379 = scmp.lt.s32.totalorder %s23, 1
        %s380 = scalar_select %p379, %s23, 1
        %s381 = smul.addr %s380, 4
        %s382 = scalar_lea.vmem %s2, %s381
        %p383 = scmp.lt.s32.totalorder %s23, 1
        %s384 = scalar_select %p383, %s23, 1
        %s385 = smul.addr %s384, 8
        %s386 = smul.addr %s385, 4
        %s387 = scalar_lea.vmem %s3, %s386
        %v389 = vld [vmem:[%s373] sm:$0xf]
        %v390 = vld [vmem:[%s373 + $0x4] sm:$0xf]
        %v391 = vld [vmem:[%s373 + $0x8] sm:$0xf]
        %v392 = vld [vmem:[%s373 + $0xc] sm:$0xf]
        %v393 = vld [vmem:[%s373 + $0x10] sm:$0xf]
        %v394 = vld [vmem:[%s373 + $0x14] sm:$0xf]
        %v395 = vld [vmem:[%s373 + $0x18] sm:$0xf]
        %v396 = vld [vmem:[%s373 + $0x1c] sm:$0xf]
        %v397 = vld [vmem:[%s378] sm:$0xf]
        %v398 = vld [vmem:[%s378 + $0x4] sm:$0xf]
        %v399 = vld [vmem:[%s378 + $0x8] sm:$0xf]
        %v400 = vld [vmem:[%s378 + $0xc] sm:$0xf]
        %v401 = vld [vmem:[%s378 + $0x10] sm:$0xf]
        %v402 = vld [vmem:[%s378 + $0x14] sm:$0xf]
        %v403 = vld [vmem:[%s378 + $0x18] sm:$0xf]
        %v404 = vld [vmem:[%s378 + $0x1c] sm:$0xf]
        %v405 = vld [vmem:[%s378 + $0x20] sm:$0xf]
        %v406 = vld [vmem:[%s378 + $0x24] sm:$0xf]
        %v407 = vld [vmem:[%s378 + $0x28] sm:$0xf]
        %v408 = vld [vmem:[%s378 + $0x2c] sm:$0xf]
        %v409 = vld [vmem:[%s378 + $0x30] sm:$0xf]
        %v410 = vld [vmem:[%s378 + $0x34] sm:$0xf]
        %v411 = vld [vmem:[%s378 + $0x38] sm:$0xf]
        %v412 = vld [vmem:[%s378 + $0x3c] sm:$0xf]
        %v413 = vld [vmem:[%s4] sm:$0xf]
        %v414 = vld [vmem:[%s4 + $0x4] sm:$0xf]
        %v415 = vld [vmem:[%s4 + $0x8] sm:$0xf]
        %v416 = vld [vmem:[%s4 + $0xc] sm:$0xf]
        %v425 = vunpack.c.l.b16 %v389
        %v426 = vunpack.c.l.b16 %v390
        %v427 = vunpack.c.l.b16 %v391
        %v428 = vunpack.c.l.b16 %v392
        %v429 = vunpack.c.l.b16 %v393
        %v430 = vunpack.c.l.b16 %v394
        %v431 = vunpack.c.l.b16 %v395
        %v432 = vunpack.c.l.b16 %v396
        %v433 = vpack.c.b16 %v426, %v425
        %v434 = vpack.c.b16 %v428, %v427
        %v435 = vpack.c.b16 %v430, %v429
        %v436 = vpack.c.b16 %v432, %v431
        %v441 = vunpack.c.l.b16 %v413
        %v442 = vunpack.c.l.b16 %v414
        %v443 = vunpack.c.l.b16 %v415
        %v444 = vunpack.c.l.b16 %v416
        %v445 = vpack.c.b16 %v442, %v441
        %v446 = vpack.c.b16 %v444, %v443
        %vm449 = vcmask 261120
        %v451 = vsel %vm449, %v433, 0
        %v454 = vsel %vm449, %v434, 0
        %v457 = vsel %vm449, %v435, 0
        %v460 = vsel %vm449, %v436, 0
        %462 = vmatprep.subr.bf16.mxu0 0
        %463 = vmatpush1.bf16.msra.mxu0 %v445
        %464 = vmatprep.subr.bf16.mxu0 0
        %465 = vmatpush1.bf16.msra.mxu0 %v446
        %466 = vmatprep.subr.bf16.mxu0 0
        %467 = vmatpush1.bf16.msra.mxu0 0
        %468 = vmatprep.subr.bf16.mxu0 0
        %469 = vmatpush1.bf16.msra.mxu0 0
        %470 = vmatprep.subr.bf16.mxu0 0
        %471 = vmatpush1.bf16.msra.mxu0 0
        %472 = vmatprep.subr.bf16.mxu0 0
        %473 = vmatpush1.bf16.msra.mxu0 0
        %474 = vmatprep.subr.bf16.mxu0 0
        %475 = vmatpush1.bf16.msra.mxu0 0
        %476 = vmatprep.subr.bf16.mxu0 0
        %477 = vmatpush1.bf16.msra.mxu0 0
        %478 = vmatprep.subr.bf16.mxu0 0
        %479 = vmatpush1.bf16.msra.mxu0 0
        %480 = vmatprep.subr.bf16.mxu0 0
        %481 = vmatpush1.bf16.msra.mxu0 0
        %482 = vmatprep.subr.bf16.mxu0 0
        %483 = vmatpush1.bf16.msra.mxu0 0
        %484 = vmatprep.subr.bf16.mxu0 0
        %485 = vmatpush1.bf16.msra.mxu0 0
        %486 = vmatprep.subr.bf16.mxu0 0
        %487 = vmatpush1.bf16.msra.mxu0 0
        %488 = vmatprep.subr.bf16.mxu0 0
        %489 = vmatpush1.bf16.msra.mxu0 0
        %490 = vmatprep.subr.bf16.mxu0 0
        %491 = vmatpush1.bf16.msra.mxu0 0
        %492 = vmatprep.subr.bf16.mxu0 0
        %493 = vmatpush1.bf16.msra.mxu0 0
        %494 = vmatprep.mubr.bf16.mxu0 0
        %495 = vmatmul.mubr.bf16.gmra.mrb[0].mxu0 %v451
        %v496 = vpop.f32.mrb[0].mxu0
        %v497 = vadd.f32 0.0, %v496
        %v498 = vpop.f32.mrb[0].mxu0
        %v499 = vpop.f32.mrb[0].mxu0
        %v500 = vadd.f32 0.0, %v499
        %v501 = vpop.f32.mrb[0].mxu0
        %502 = vmatprep.mubr.bf16.mxu0 0
        %503 = vmatmul.mubr.bf16.gmra.mrb[0].mxu0 %v454
        %v504 = vpop.f32.mrb[0].mxu0
        %v505 = vadd.f32 0.0, %v504
        %v506 = vpop.f32.mrb[0].mxu0
        %v507 = vpop.f32.mrb[0].mxu0
        %v508 = vadd.f32 0.0, %v507
        %v509 = vpop.f32.mrb[0].mxu0
        %510 = vmatprep.mubr.bf16.mxu0 0
        %511 = vmatmul.mubr.bf16.gmra.mrb[0].mxu0 %v457
        %v512 = vpop.f32.mrb[0].mxu0
        %v513 = vadd.f32 0.0, %v512
        %v514 = vpop.f32.mrb[0].mxu0
        %v515 = vpop.f32.mrb[0].mxu0
        %v516 = vadd.f32 0.0, %v515
        %v517 = vpop.f32.mrb[0].mxu0
        %518 = vmatprep.mubr.bf16.mxu0 0
        %519 = vmatmul.mubr.bf16.gmra.mrb[0].mxu0 %v460
        %v520 = vpop.f32.mrb[0].mxu0
        %v521 = vadd.f32 0.0, %v520
        %v522 = vpop.f32.mrb[0].mxu0
        %v523 = vpop.f32.mrb[0].mxu0
        %v524 = vadd.f32 0.0, %v523
        %v525 = vpop.f32.mrb[0].mxu0
        %526 = vdwg.mxu0
        %v527 = vld [vmem:[%s6] sm:$0xf]
        %v528 = vld [vmem:[%s6 + $0x4] sm:$0xf]
        %v529 = vld [vmem:[%s6 + $0x8] sm:$0xf]
        %v530 = vld [vmem:[%s6 + $0xc] sm:$0xf]
        %v547 = vunpack.c.l.b16 %v397
        %v548 = vunpack.c.l.b16 %v398
        %v549 = vunpack.c.l.b16 %v399
        %v550 = vunpack.c.l.b16 %v400
        %v551 = vunpack.c.l.b16 %v401
        %v552 = vunpack.c.l.b16 %v402
        %v553 = vunpack.c.l.b16 %v403
        %v554 = vunpack.c.l.b16 %v404
        %v555 = vunpack.c.l.b16 %v405
        %v556 = vunpack.c.l.b16 %v406
        %v557 = vunpack.c.l.b16 %v407
        %v558 = vunpack.c.l.b16 %v408
        %v559 = vunpack.c.l.b16 %v409
        %v560 = vunpack.c.l.b16 %v410
        %v561 = vunpack.c.l.b16 %v411
        %v562 = vunpack.c.l.b16 %v412
        %v563 = vpack.c.b16 %v548, %v547
        %v564 = vpack.c.b16 %v550, %v549
        %v565 = vpack.c.b16 %v552, %v551
        %v566 = vpack.c.b16 %v554, %v553
        %v567 = vpack.c.b16 %v556, %v555
        %v568 = vpack.c.b16 %v558, %v557
        %v569 = vpack.c.b16 %v560, %v559
        %v570 = vpack.c.b16 %v562, %v561
        %v575 = vunpack.c.l.b16 %v527
        %v576 = vunpack.c.l.b16 %v528
        %v577 = vunpack.c.l.b16 %v529
        %v578 = vunpack.c.l.b16 %v530
        %v579 = vpack.c.b16 %v576, %v575
        %v580 = vpack.c.b16 %v578, %v577
        %v584 = vsel %vm449, %v563, 0
        %v587 = vsel %vm449, %v564, 0
        %v590 = vsel %vm449, %v565, 0
        %v593 = vsel %vm449, %v566, 0
        %v596 = vsel %vm449, %v567, 0
        %v599 = vsel %vm449, %v568, 0
        %v602 = vsel %vm449, %v569, 0
        %v605 = vsel %vm449, %v570, 0
        %607 = vmatprep.subr.bf16.mxu0 0
        %608 = vmatpush1.bf16.msra.mxu0 %v579
        %609 = vmatprep.subr.bf16.mxu0 0
        %610 = vmatpush1.bf16.msra.mxu0 %v580
        %611 = vmatprep.subr.bf16.mxu0 0
        %612 = vmatpush1.bf16.msra.mxu0 0
        %613 = vmatprep.subr.bf16.mxu0 0
        %614 = vmatpush1.bf16.msra.mxu0 0
        %615 = vmatprep.subr.bf16.mxu0 0
        %616 = vmatpush1.bf16.msra.mxu0 0
        %617 = vmatprep.subr.bf16.mxu0 0
        %618 = vmatpush1.bf16.msra.mxu0 0
        %619 = vmatprep.subr.bf16.mxu0 0
        %620 = vmatpush1.bf16.msra.mxu0 0
        %621 = vmatprep.subr.bf16.mxu0 0
        %622 = vmatpush1.bf16.msra.mxu0 0
        %623 = vmatprep.subr.bf16.mxu0 0
        %624 = vmatpush1.bf16.msra.mxu0 0
        %625 = vmatprep.subr.bf16.mxu0 0
        %626 = vmatpush1.bf16.msra.mxu0 0
        %627 = vmatprep.subr.bf16.mxu0 0
        %628 = vmatpush1.bf16.msra.mxu0 0
        %629 = vmatprep.subr.bf16.mxu0 0
        %630 = vmatpush1.bf16.msra.mxu0 0
        %631 = vmatprep.subr.bf16.mxu0 0
        %632 = vmatpush1.bf16.msra.mxu0 0
        %633 = vmatprep.subr.bf16.mxu0 0
        %634 = vmatpush1.bf16.msra.mxu0 0
        %635 = vmatprep.subr.bf16.mxu0 0
        %636 = vmatpush1.bf16.msra.mxu0 0
        %637 = vmatprep.subr.bf16.mxu0 0
        %638 = vmatpush1.bf16.msra.mxu0 0
        %639 = vmatprep.mubr.bf16.mxu0 0
        %640 = vmatmul.mubr.bf16.gmra.mrb[0].mxu0 %v584
        %v641 = vpop.f32.mrb[0].mxu0
        %v642 = vadd.f32 0.0, %v641
        %v643 = vpop.f32.mrb[0].mxu0
        %v644 = vpop.f32.mrb[0].mxu0
        %v645 = vadd.f32 0.0, %v644
        %v646 = vpop.f32.mrb[0].mxu0
        %647 = vmatprep.mubr.bf16.mxu0 0
        %648 = vmatmul.mubr.bf16.gmra.mrb[0].mxu0 %v587
        %v649 = vpop.f32.mrb[0].mxu0
        %v650 = vadd.f32 0.0, %v649
        %v651 = vpop.f32.mrb[0].mxu0
        %v652 = vpop.f32.mrb[0].mxu0
        %v653 = vadd.f32 0.0, %v652
        %v654 = vpop.f32.mrb[0].mxu0
        %655 = vmatprep.mubr.bf16.mxu0 0
        %656 = vmatmul.mubr.bf16.gmra.mrb[0].mxu0 %v590
        %v657 = vpop.f32.mrb[0].mxu0
        %v658 = vadd.f32 0.0, %v657
        %v659 = vpop.f32.mrb[0].mxu0
        %v660 = vpop.f32.mrb[0].mxu0
        %v661 = vadd.f32 0.0, %v660
        %v662 = vpop.f32.mrb[0].mxu0
        %663 = vmatprep.mubr.bf16.mxu0 0
        %664 = vmatmul.mubr.bf16.gmra.mrb[0].mxu0 %v593
        %v665 = vpop.f32.mrb[0].mxu0
        %v666 = vadd.f32 0.0, %v665
        %v667 = vpop.f32.mrb[0].mxu0
        %v668 = vpop.f32.mrb[0].mxu0
        %v669 = vadd.f32 0.0, %v668
        %v670 = vpop.f32.mrb[0].mxu0
        %671 = vmatprep.mubr.bf16.mxu0 0
        %672 = vmatmul.mubr.bf16.gmra.mrb[0].mxu0 %v596
        %v673 = vpop.f32.mrb[0].mxu0
        %v674 = vadd.f32 0.0, %v673
        %v675 = vpop.f32.mrb[0].mxu0
        %v676 = vpop.f32.mrb[0].mxu0
        %v677 = vadd.f32 0.0, %v676
        %v678 = vpop.f32.mrb[0].mxu0
        %679 = vmatprep.mubr.bf16.mxu0 0
        %680 = vmatmul.mubr.bf16.gmra.mrb[0].mxu0 %v599
        %v681 = vpop.f32.mrb[0].mxu0
        %v682 = vadd.f32 0.0, %v681
        %v683 = vpop.f32.mrb[0].mxu0
        %v684 = vpop.f32.mrb[0].mxu0
        %v685 = vadd.f32 0.0, %v684
        %v686 = vpop.f32.mrb[0].mxu0
        %687 = vmatprep.mubr.bf16.mxu0 0
        %688 = vmatmul.mubr.bf16.gmra.mrb[0].mxu0 %v602
        %v689 = vpop.f32.mrb[0].mxu0
        %v690 = vadd.f32 0.0, %v689
        %v691 = vpop.f32.mrb[0].mxu0
        %v692 = vpop.f32.mrb[0].mxu0
        %v693 = vadd.f32 0.0, %v692
        %v694 = vpop.f32.mrb[0].mxu0
        %695 = vmatprep.mubr.bf16.mxu0 0
        %696 = vmatmul.mubr.bf16.gmra.mrb[0].mxu0 %v605
        %v697 = vpop.f32.mrb[0].mxu0
        %v698 = vadd.f32 0.0, %v697
        %v699 = vpop.f32.mrb[0].mxu0
        %v700 = vpop.f32.mrb[0].mxu0
        %v701 = vadd.f32 0.0, %v700
        %v702 = vpop.f32.mrb[0].mxu0
        %703 = vdwg.mxu0
        %v704 = vld [vmem:[%s5] sm:$0x1]
        %v706 = vlaneseq
        %v707 = vshrl.u32 %v706, 7
        %v708 = vsub.s32 0, %v707
        %v709 = vrot.slane %v704, %v708
        %710 = vrot.lane.b32.xlu0 %v709, 32
        %v711 = vpop.permute.xlu0 %710
        %v713 = vadd.f32 %v497, %v711
        %v714 = vadd.f32 %v500, %v711
        %v715 = vadd.f32 %v505, %v711
        %v716 = vadd.f32 %v508, %v711
        %v717 = vadd.f32 %v513, %v711
        %v718 = vadd.f32 %v516, %v711
        %v719 = vadd.f32 %v521, %v711
        %v720 = vadd.f32 %v524, %v711
        %v721 = vxor.u32 %v713, 2147483648
        %v722 = vxor.u32 %v714, 2147483648
        %v723 = vxor.u32 %v715, 2147483648
        %v724 = vxor.u32 %v716, 2147483648
        %v725 = vxor.u32 %v717, 2147483648
        %v726 = vxor.u32 %v718, 2147483648
        %v727 = vxor.u32 %v719, 2147483648
        %v728 = vxor.u32 %v720, 2147483648
        %v729 = vmul.f32 %v721, 1.442695
        %v730 = vpow.pop %v729
        %v731 = vmul.f32 %v722, 1.442695
        %v732 = vpow.pop %v731
        %v733 = vmul.f32 %v723, 1.442695
        %v734 = vpow.pop %v733
        %v735 = vmul.f32 %v724, 1.442695
        %v736 = vpow.pop %v735
        %v737 = vmul.f32 %v725, 1.442695
        %v738 = vpow.pop %v737
        %v739 = vmul.f32 %v726, 1.442695
        %v740 = vpow.pop %v739
        %v741 = vmul.f32 %v727, 1.442695
        %v742 = vpow.pop %v741
        %v743 = vmul.f32 %v728, 1.442695
        %v744 = vpow.pop %v743
        %v745 = vadd.f32 %v730, 1.0
        %v746 = vadd.f32 %v732, 1.0
        %v747 = vadd.f32 %v734, 1.0
        %v748 = vadd.f32 %v736, 1.0
        %v749 = vadd.f32 %v738, 1.0
        %v750 = vadd.f32 %v740, 1.0
        %v751 = vadd.f32 %v742, 1.0
        %v752 = vadd.f32 %v744, 1.0
        %v753 = vrcp.pop %v745
        %v754 = vmul.f32 1.0, %v753
        %v755 = vrcp.pop %v746
        %v756 = vmul.f32 1.0, %v755
        %v757 = vrcp.pop %v747
        %v758 = vmul.f32 1.0, %v757
        %v759 = vrcp.pop %v748
        %v760 = vmul.f32 1.0, %v759
        %v761 = vrcp.pop %v749
        %v762 = vmul.f32 1.0, %v761
        %v763 = vrcp.pop %v750
        %v764 = vmul.f32 1.0, %v763
        %v765 = vrcp.pop %v751
        %v766 = vmul.f32 1.0, %v765
        %v767 = vrcp.pop %v752
        %v768 = vmul.f32 1.0, %v767
        %v769 = vld [vmem:[%s382] sm:$0x1]
        %v770 = vld [vmem:[%s382 + $0x1] sm:$0x1]
        %v771 = vld [vmem:[%s382 + $0x2] sm:$0x1]
        %v772 = vld [vmem:[%s382 + $0x3] sm:$0x1]
        %v773 = vpack.c.bf16 %v500, %v497
        %v774 = vpack.c.bf16 %v508, %v505
        %v775 = vpack.c.bf16 %v516, %v513
        %v776 = vpack.c.bf16 %v524, %v521
        %v777 = vpack.c.bf16 %v645, %v642
        %v778 = vpack.c.bf16 %v653, %v650
        %v779 = vpack.c.bf16 %v661, %v658
        %v780 = vpack.c.bf16 %v669, %v666
        %v781 = vpack.c.bf16 %v677, %v674
        %v782 = vpack.c.bf16 %v685, %v682
        %v783 = vpack.c.bf16 %v693, %v690
        %v784 = vpack.c.bf16 %v701, %v698
        %v785 = vld [vmem:[%s387] sm:$0xf]
        %v786 = vld [vmem:[%s387 + $0x4] sm:$0xf]
        %v787 = vunpack.c.l.bf16 %v785
        %v788 = vunpack.c.l.bf16 %v786
        %vm789 = vcmask 64512
        %v791 = vsel %vm789, %v773, 0
        %v794 = vsel %vm789, %v777, 0
        %v797 = vsel %vm789, %v778, 0
        %799 = vmatprep.subr.bf16.mxu0 0
        %800 = vmatpush1.bf16.xpose.msra.mxu0 %v794
        %801 = vmatprep.subr.bf16.mxu0 0
        %802 = vmatpush1.bf16.xpose.msra.mxu0 %v797
        %803 = vmatprep.subr.bf16.mxu0 0
        %804 = vmatpush1.bf16.xpose.msra.mxu0 0
        %805 = vmatprep.subr.bf16.mxu0 0
        %806 = vmatpush1.bf16.xpose.msra.mxu0 0
        %807 = vmatprep.subr.bf16.mxu0 0
        %808 = vmatpush1.bf16.xpose.msra.mxu0 0
        %809 = vmatprep.subr.bf16.mxu0 0
        %810 = vmatpush1.bf16.xpose.msra.mxu0 0
        %811 = vmatprep.subr.bf16.mxu0 0
        %812 = vmatpush1.bf16.xpose.msra.mxu0 0
        %813 = vmatprep.subr.bf16.mxu0 0
        %814 = vmatpush1.bf16.xpose.msra.mxu0 0
        %815 = vmatprep.subr.bf16.mxu0 0
        %816 = vmatpush1.bf16.xpose.msra.mxu0 0
        %817 = vmatprep.subr.bf16.mxu0 0
        %818 = vmatpush1.bf16.xpose.msra.mxu0 0
        %819 = vmatprep.subr.bf16.mxu0 0
        %820 = vmatpush1.bf16.xpose.msra.mxu0 0
        %821 = vmatprep.subr.bf16.mxu0 0
        %822 = vmatpush1.bf16.xpose.msra.mxu0 0
        %823 = vmatprep.subr.bf16.mxu0 0
        %824 = vmatpush1.bf16.xpose.msra.mxu0 0
        %825 = vmatprep.subr.bf16.mxu0 0
        %826 = vmatpush1.bf16.xpose.msra.mxu0 0
        %827 = vmatprep.subr.bf16.mxu0 0
        %828 = vmatpush1.bf16.xpose.msra.mxu0 0
        %829 = vmatprep.subr.bf16.mxu0 0
        %830 = vmatpush1.bf16.xpose.msra.mxu0 0
        %831 = vmatprep.mubr.bf16.mxu0 0
        %832 = vmatmul.mubr.bf16.gmra.mrb[0].mxu0 %v791
        %v833 = vpop.f32.mrb[0].mxu0
        %v834 = vadd.f32 %v787, %v833
        %v835 = vpop.f32.mrb[0].mxu0
        %v836 = vpop.f32.mrb[0].mxu0
        %v837 = vadd.f32 %v788, %v836
        %v838 = vpop.f32.mrb[0].mxu0
        %839 = vdwg.mxu0
        %v841 = vsel %vm789, %v774, 0
        %v844 = vsel %vm789, %v779, 0
        %v847 = vsel %vm789, %v780, 0
        %849 = vmatprep.subr.bf16.mxu0 0
        %850 = vmatpush1.bf16.xpose.msra.mxu0 %v844
        %851 = vmatprep.subr.bf16.mxu0 0
        %852 = vmatpush1.bf16.xpose.msra.mxu0 %v847
        %853 = vmatprep.subr.bf16.mxu0 0
        %854 = vmatpush1.bf16.xpose.msra.mxu0 0
        %855 = vmatprep.subr.bf16.mxu0 0
        %856 = vmatpush1.bf16.xpose.msra.mxu0 0
        %857 = vmatprep.subr.bf16.mxu0 0
        %858 = vmatpush1.bf16.xpose.msra.mxu0 0
        %859 = vmatprep.subr.bf16.mxu0 0
        %860 = vmatpush1.bf16.xpose.msra.mxu0 0
        %861 = vmatprep.subr.bf16.mxu0 0
        %862 = vmatpush1.bf16.xpose.msra.mxu0 0
        %863 = vmatprep.subr.bf16.mxu0 0
        %864 = vmatpush1.bf16.xpose.msra.mxu0 0
        %865 = vmatprep.subr.bf16.mxu0 0
        %866 = vmatpush1.bf16.xpose.msra.mxu0 0
        %867 = vmatprep.subr.bf16.mxu0 0
        %868 = vmatpush1.bf16.xpose.msra.mxu0 0
        %869 = vmatprep.subr.bf16.mxu0 0
        %870 = vmatpush1.bf16.xpose.msra.mxu0 0
        %871 = vmatprep.subr.bf16.mxu0 0
        %872 = vmatpush1.bf16.xpose.msra.mxu0 0
        %873 = vmatprep.subr.bf16.mxu0 0
        %874 = vmatpush1.bf16.xpose.msra.mxu0 0
        %875 = vmatprep.subr.bf16.mxu0 0
        %876 = vmatpush1.bf16.xpose.msra.mxu0 0
        %877 = vmatprep.subr.bf16.mxu0 0
        %878 = vmatpush1.bf16.xpose.msra.mxu0 0
        %879 = vmatprep.subr.bf16.mxu0 0
        %880 = vmatpush1.bf16.xpose.msra.mxu0 0
        %881 = vmatprep.mubr.bf16.mxu0 0
        %882 = vmatmul.mubr.bf16.gmra.mrb[0].mxu0 %v841
        %v883 = vpop.f32.mrb[0].mxu0
        %v884 = vadd.f32 %v787, %v883
        %v885 = vpop.f32.mrb[0].mxu0
        %v886 = vpop.f32.mrb[0].mxu0
        %v887 = vadd.f32 %v788, %v886
        %v888 = vpop.f32.mrb[0].mxu0
        %889 = vdwg.mxu0
        %v891 = vsel %vm789, %v775, 0
        %v894 = vsel %vm789, %v781, 0
        %v897 = vsel %vm789, %v782, 0
        %899 = vmatprep.subr.bf16.mxu0 0
        %900 = vmatpush1.bf16.xpose.msra.mxu0 %v894
        %901 = vmatprep.subr.bf16.mxu0 0
        %902 = vmatpush1.bf16.xpose.msra.mxu0 %v897
        %903 = vmatprep.subr.bf16.mxu0 0
        %904 = vmatpush1.bf16.xpose.msra.mxu0 0
        %905 = vmatprep.subr.bf16.mxu0 0
        %906 = vmatpush1.bf16.xpose.msra.mxu0 0
        %907 = vmatprep.subr.bf16.mxu0 0
        %908 = vmatpush1.bf16.xpose.msra.mxu0 0
        %909 = vmatprep.subr.bf16.mxu0 0
        %910 = vmatpush1.bf16.xpose.msra.mxu0 0
        %911 = vmatprep.subr.bf16.mxu0 0
        %912 = vmatpush1.bf16.xpose.msra.mxu0 0
        %913 = vmatprep.subr.bf16.mxu0 0
        %914 = vmatpush1.bf16.xpose.msra.mxu0 0
        %915 = vmatprep.subr.bf16.mxu0 0
        %916 = vmatpush1.bf16.xpose.msra.mxu0 0
        %917 = vmatprep.subr.bf16.mxu0 0
        %918 = vmatpush1.bf16.xpose.msra.mxu0 0
        %919 = vmatprep.subr.bf16.mxu0 0
        %920 = vmatpush1.bf16.xpose.msra.mxu0 0
        %921 = vmatprep.subr.bf16.mxu0 0
        %922 = vmatpush1.bf16.xpose.msra.mxu0 0
        %923 = vmatprep.subr.bf16.mxu0 0
        %924 = vmatpush1.bf16.xpose.msra.mxu0 0
        %925 = vmatprep.subr.bf16.mxu0 0
        %926 = vmatpush1.bf16.xpose.msra.mxu0 0
        %927 = vmatprep.subr.bf16.mxu0 0
        %928 = vmatpush1.bf16.xpose.msra.mxu0 0
        %929 = vmatprep.subr.bf16.mxu0 0
        %930 = vmatpush1.bf16.xpose.msra.mxu0 0
        %931 = vmatprep.mubr.bf16.mxu0 0
        %932 = vmatmul.mubr.bf16.gmra.mrb[0].mxu0 %v891
        %v933 = vpop.f32.mrb[0].mxu0
        %v934 = vadd.f32 %v787, %v933
        %v935 = vpop.f32.mrb[0].mxu0
        %v936 = vpop.f32.mrb[0].mxu0
        %v937 = vadd.f32 %v788, %v936
        %v938 = vpop.f32.mrb[0].mxu0
        %939 = vdwg.mxu0
        %v941 = vsel %vm789, %v776, 0
        %v944 = vsel %vm789, %v783, 0
        %v947 = vsel %vm789, %v784, 0
        %949 = vmatprep.subr.bf16.mxu0 0
        %950 = vmatpush1.bf16.xpose.msra.mxu0 %v944
        %951 = vmatprep.subr.bf16.mxu0 0
        %952 = vmatpush1.bf16.xpose.msra.mxu0 %v947
        %953 = vmatprep.subr.bf16.mxu0 0
        %954 = vmatpush1.bf16.xpose.msra.mxu0 0
        %955 = vmatprep.subr.bf16.mxu0 0
        %956 = vmatpush1.bf16.xpose.msra.mxu0 0
        %957 = vmatprep.subr.bf16.mxu0 0
        %958 = vmatpush1.bf16.xpose.msra.mxu0 0
        %959 = vmatprep.subr.bf16.mxu0 0
        %960 = vmatpush1.bf16.xpose.msra.mxu0 0
        %961 = vmatprep.subr.bf16.mxu0 0
        %962 = vmatpush1.bf16.xpose.msra.mxu0 0
        %963 = vmatprep.subr.bf16.mxu0 0
        %964 = vmatpush1.bf16.xpose.msra.mxu0 0
        %965 = vmatprep.subr.bf16.mxu0 0
        %966 = vmatpush1.bf16.xpose.msra.mxu0 0
        %967 = vmatprep.subr.bf16.mxu0 0
        %968 = vmatpush1.bf16.xpose.msra.mxu0 0
        %969 = vmatprep.subr.bf16.mxu0 0
        %970 = vmatpush1.bf16.xpose.msra.mxu0 0
        %971 = vmatprep.subr.bf16.mxu0 0
        %972 = vmatpush1.bf16.xpose.msra.mxu0 0
        %973 = vmatprep.subr.bf16.mxu0 0
        %974 = vmatpush1.bf16.xpose.msra.mxu0 0
        %975 = vmatprep.subr.bf16.mxu0 0
        %976 = vmatpush1.bf16.xpose.msra.mxu0 0
        %977 = vmatprep.subr.bf16.mxu0 0
        %978 = vmatpush1.bf16.xpose.msra.mxu0 0
        %979 = vmatprep.subr.bf16.mxu0 0
        %980 = vmatpush1.bf16.xpose.msra.mxu0 0
        %981 = vmatprep.mubr.bf16.mxu0 0
        %982 = vmatmul.mubr.bf16.gmra.mrb[0].mxu0 %v941
        %v983 = vpop.f32.mrb[0].mxu0
        %v984 = vadd.f32 %v787, %v983
        %v985 = vpop.f32.mrb[0].mxu0
        %v986 = vpop.f32.mrb[0].mxu0
        %v987 = vadd.f32 %v788, %v986
        %v988 = vpop.f32.mrb[0].mxu0
        %989 = vdwg.mxu0
        %v994 = vlaneseq
        %v995 = vshrl.u32 %v994, 7
        %v996 = vsub.s32 0, %v995
        %v997 = vrot.slane %v769, %v996
        %v998 = vlaneseq
        %v999 = vshrl.u32 %v998, 7
        %v1000 = vsub.s32 0, %v999
        %v1001 = vrot.slane %v770, %v1000
        %v1002 = vlaneseq
        %v1003 = vshrl.u32 %v1002, 7
        %v1004 = vsub.s32 0, %v1003
        %v1005 = vrot.slane %v771, %v1004
        %v1006 = vlaneseq
        %v1007 = vshrl.u32 %v1006, 7
        %v1008 = vsub.s32 0, %v1007
        %v1009 = vrot.slane %v772, %v1008
        %v1014 = vadd.f32 %v834, %v997
        %v1015 = vadd.f32 %v837, %v997
        %v1016 = vadd.f32 %v884, %v1001
        %v1017 = vadd.f32 %v887, %v1001
        %v1018 = vadd.f32 %v934, %v1005
        %v1019 = vadd.f32 %v937, %v1005
        %v1020 = vadd.f32 %v984, %v1009
        %v1021 = vadd.f32 %v987, %v1009
        %v1022 = vsel %vm449, %v1014, -inf
        %1023 = vmax.xlane.f32.xlu0 %v1022
        %v1024 = vpop.xlane.xlu0 %1023
        %v1025 = vsel %vm449, %v1015, -inf
        %1026 = vmax.xlane.f32.xlu0 %v1025
        %v1027 = vpop.xlane.xlu0 %1026
        %v1028 = vsel %vm449, %v1016, -inf
        %1029 = vmax.xlane.f32.xlu0 %v1028
        %v1030 = vpop.xlane.xlu0 %1029
        %v1031 = vsel %vm449, %v1017, -inf
        %1032 = vmax.xlane.f32.xlu0 %v1031
        %v1033 = vpop.xlane.xlu0 %1032
        %v1034 = vsel %vm449, %v1018, -inf
        %1035 = vmax.xlane.f32.xlu0 %v1034
        %v1036 = vpop.xlane.xlu0 %1035
        %v1037 = vsel %vm449, %v1019, -inf
        %1038 = vmax.xlane.f32.xlu0 %v1037
        %v1039 = vpop.xlane.xlu0 %1038
        %v1040 = vsel %vm449, %v1020, -inf
        %1041 = vmax.xlane.f32.xlu0 %v1040
        %v1042 = vpop.xlane.xlu0 %1041
        %v1043 = vsel %vm449, %v1021, -inf
        %1044 = vmax.xlane.f32.xlu0 %v1043
        %v1045 = vpop.xlane.xlu0 %1044
        %v1046 = vsub.f32 %v1014, %v1024
        %v1047 = vsub.f32 %v1015, %v1027
        %v1048 = vsub.f32 %v1016, %v1030
        %v1049 = vsub.f32 %v1017, %v1033
        %v1050 = vsub.f32 %v1018, %v1036
        %v1051 = vsub.f32 %v1019, %v1039
        %v1052 = vsub.f32 %v1020, %v1042
        %v1053 = vsub.f32 %v1021, %v1045
        %v1054 = vmul.f32 %v1046, 1.442695
        %v1055 = vpow.pop %v1054
        %v1056 = vmul.f32 %v1047, 1.442695
        %v1057 = vpow.pop %v1056
        %v1058 = vmul.f32 %v1048, 1.442695
        %v1059 = vpow.pop %v1058
        %v1060 = vmul.f32 %v1049, 1.442695
        %v1061 = vpow.pop %v1060
        %v1062 = vmul.f32 %v1050, 1.442695
        %v1063 = vpow.pop %v1062
        %v1064 = vmul.f32 %v1051, 1.442695
        %v1065 = vpow.pop %v1064
        %v1066 = vmul.f32 %v1052, 1.442695
        %v1067 = vpow.pop %v1066
        %v1068 = vmul.f32 %v1053, 1.442695
        %v1069 = vpow.pop %v1068
        %v1070 = vsel %vm449, %v1055, 0.0
        %1071 = vadd.xlane.f32.xlu0 %v1070
        %v1072 = vpop.xlane.xlu0 %1071
        %v1073 = vsel %vm449, %v1057, 0.0
        %1074 = vadd.xlane.f32.xlu0 %v1073
        %v1075 = vpop.xlane.xlu0 %1074
        %v1076 = vsel %vm449, %v1059, 0.0
        %1077 = vadd.xlane.f32.xlu0 %v1076
        %v1078 = vpop.xlane.xlu0 %1077
        %v1079 = vsel %vm449, %v1061, 0.0
        %1080 = vadd.xlane.f32.xlu0 %v1079
        %v1081 = vpop.xlane.xlu0 %1080
        %v1082 = vsel %vm449, %v1063, 0.0
        %1083 = vadd.xlane.f32.xlu0 %v1082
        %v1084 = vpop.xlane.xlu0 %1083
        %v1085 = vsel %vm449, %v1065, 0.0
        %1086 = vadd.xlane.f32.xlu0 %v1085
        %v1087 = vpop.xlane.xlu0 %1086
        %v1088 = vsel %vm449, %v1067, 0.0
        %1089 = vadd.xlane.f32.xlu0 %v1088
        %v1090 = vpop.xlane.xlu0 %1089
        %v1091 = vsel %vm449, %v1069, 0.0
        %1092 = vadd.xlane.f32.xlu0 %v1091
        %v1093 = vpop.xlane.xlu0 %1092
        %v1094 = vpack.c.bf16 %v1057, %v1055
        %v1095 = vpack.c.bf16 %v1061, %v1059
        %v1096 = vpack.c.bf16 %v1065, %v1063
        %v1097 = vpack.c.bf16 %v1069, %v1067
        %1100 = vrot.lane.b32.xlu0 %v777, 96
        %v1101 = vpop.permute.xlu0 %1100
        %1102 = vrot.lane.b32.xlu0 %v778, 96
        %v1103 = vpop.permute.xlu0 %1102
        %v1107 = vsel %vm449, %v1094, 0
        %1109 = vmatprep.subr.bf16.mxu0 0
        %1110 = vmatpush1.bf16.msra.mxu0 %v1101
        %1111 = vmatprep.subr.bf16.mxu0 0
        %1112 = vmatpush1.bf16.msra.mxu0 %v1103
        %1113 = vmatprep.subr.bf16.mxu0 0
        %1114 = vmatpush1.bf16.msra.mxu0 0
        %1115 = vmatprep.subr.bf16.mxu0 0
        %1116 = vmatpush1.bf16.msra.mxu0 0
        %1117 = vmatprep.subr.bf16.mxu0 0
        %1118 = vmatpush1.bf16.msra.mxu0 0
        %1119 = vmatprep.subr.bf16.mxu0 0
        %1120 = vmatpush1.bf16.msra.mxu0 0
        %1121 = vmatprep.subr.bf16.mxu0 0
        %1122 = vmatpush1.bf16.msra.mxu0 0
        %1123 = vmatprep.subr.bf16.mxu0 0
        %1124 = vmatpush1.bf16.msra.mxu0 0
        %1125 = vmatprep.subr.bf16.mxu0 0
        %1126 = vmatpush1.bf16.msra.mxu0 0
        %1127 = vmatprep.subr.bf16.mxu0 0
        %1128 = vmatpush1.bf16.msra.mxu0 0
        %1129 = vmatprep.subr.bf16.mxu0 0
        %1130 = vmatpush1.bf16.msra.mxu0 0
        %1131 = vmatprep.subr.bf16.mxu0 0
        %1132 = vmatpush1.bf16.msra.mxu0 0
        %1133 = vmatprep.subr.bf16.mxu0 0
        %1134 = vmatpush1.bf16.msra.mxu0 0
        %1135 = vmatprep.subr.bf16.mxu0 0
        %1136 = vmatpush1.bf16.msra.mxu0 0
        %1137 = vmatprep.subr.bf16.mxu0 0
        %1138 = vmatpush1.bf16.msra.mxu0 0
        %1139 = vmatprep.subr.bf16.mxu0 0
        %1140 = vmatpush1.bf16.msra.mxu0 0
        %1141 = vmatprep.mubr.bf16.mxu0 0
        %1142 = vmatmul.mubr.bf16.gmra.mrb[0].mxu0 %v1107
        %v1143 = vpop.f32.mrb[0].mxu0
        %v1144 = vadd.f32 0.0, %v1143
        %v1145 = vpop.f32.mrb[0].mxu0
        %v1146 = vpop.f32.mrb[0].mxu0
        %v1147 = vadd.f32 0.0, %v1146
        %v1148 = vpop.f32.mrb[0].mxu0
        %1149 = vdwg.mxu0
        %1152 = vrot.lane.b32.xlu0 %v779, 96
        %v1153 = vpop.permute.xlu0 %1152
        %1154 = vrot.lane.b32.xlu0 %v780, 96
        %v1155 = vpop.permute.xlu0 %1154
        %v1159 = vsel %vm449, %v1095, 0
        %1161 = vmatprep.subr.bf16.mxu0 0
        %1162 = vmatpush1.bf16.msra.mxu0 %v1153
        %1163 = vmatprep.subr.bf16.mxu0 0
        %1164 = vmatpush1.bf16.msra.mxu0 %v1155
        %1165 = vmatprep.subr.bf16.mxu0 0
        %1166 = vmatpush1.bf16.msra.mxu0 0
        %1167 = vmatprep.subr.bf16.mxu0 0
        %1168 = vmatpush1.bf16.msra.mxu0 0
        %1169 = vmatprep.subr.bf16.mxu0 0
        %1170 = vmatpush1.bf16.msra.mxu0 0
        %1171 = vmatprep.subr.bf16.mxu0 0
        %1172 = vmatpush1.bf16.msra.mxu0 0
        %1173 = vmatprep.subr.bf16.mxu0 0
        %1174 = vmatpush1.bf16.msra.mxu0 0
        %1175 = vmatprep.subr.bf16.mxu0 0
        %1176 = vmatpush1.bf16.msra.mxu0 0
        %1177 = vmatprep.subr.bf16.mxu0 0
        %1178 = vmatpush1.bf16.msra.mxu0 0
        %1179 = vmatprep.subr.bf16.mxu0 0
        %1180 = vmatpush1.bf16.msra.mxu0 0
        %1181 = vmatprep.subr.bf16.mxu0 0
        %1182 = vmatpush1.bf16.msra.mxu0 0
        %1183 = vmatprep.subr.bf16.mxu0 0
        %1184 = vmatpush1.bf16.msra.mxu0 0
        %1185 = vmatprep.subr.bf16.mxu0 0
        %1186 = vmatpush1.bf16.msra.mxu0 0
        %1187 = vmatprep.subr.bf16.mxu0 0
        %1188 = vmatpush1.bf16.msra.mxu0 0
        %1189 = vmatprep.subr.bf16.mxu0 0
        %1190 = vmatpush1.bf16.msra.mxu0 0
        %1191 = vmatprep.subr.bf16.mxu0 0
        %1192 = vmatpush1.bf16.msra.mxu0 0
        %1193 = vmatprep.mubr.bf16.mxu0 0
        %1194 = vmatmul.mubr.bf16.gmra.mrb[0].mxu0 %v1159
        %v1195 = vpop.f32.mrb[0].mxu0
        %v1196 = vadd.f32 0.0, %v1195
        %v1197 = vpop.f32.mrb[0].mxu0
        %v1198 = vpop.f32.mrb[0].mxu0
        %v1199 = vadd.f32 0.0, %v1198
        %v1200 = vpop.f32.mrb[0].mxu0
        %1201 = vdwg.mxu0
        %1204 = vrot.lane.b32.xlu0 %v781, 96
        %v1205 = vpop.permute.xlu0 %1204
        %1206 = vrot.lane.b32.xlu0 %v782, 96
        %v1207 = vpop.permute.xlu0 %1206
        %v1211 = vsel %vm449, %v1096, 0
        %1213 = vmatprep.subr.bf16.mxu0 0
        %1214 = vmatpush1.bf16.msra.mxu0 %v1205
        %1215 = vmatprep.subr.bf16.mxu0 0
        %1216 = vmatpush1.bf16.msra.mxu0 %v1207
        %1217 = vmatprep.subr.bf16.mxu0 0
        %1218 = vmatpush1.bf16.msra.mxu0 0
        %1219 = vmatprep.subr.bf16.mxu0 0
        %1220 = vmatpush1.bf16.msra.mxu0 0
        %1221 = vmatprep.subr.bf16.mxu0 0
        %1222 = vmatpush1.bf16.msra.mxu0 0
        %1223 = vmatprep.subr.bf16.mxu0 0
        %1224 = vmatpush1.bf16.msra.mxu0 0
        %1225 = vmatprep.subr.bf16.mxu0 0
        %1226 = vmatpush1.bf16.msra.mxu0 0
        %1227 = vmatprep.subr.bf16.mxu0 0
        %1228 = vmatpush1.bf16.msra.mxu0 0
        %1229 = vmatprep.subr.bf16.mxu0 0
        %1230 = vmatpush1.bf16.msra.mxu0 0
        %1231 = vmatprep.subr.bf16.mxu0 0
        %1232 = vmatpush1.bf16.msra.mxu0 0
        %1233 = vmatprep.subr.bf16.mxu0 0
        %1234 = vmatpush1.bf16.msra.mxu0 0
        %1235 = vmatprep.subr.bf16.mxu0 0
        %1236 = vmatpush1.bf16.msra.mxu0 0
        %1237 = vmatprep.subr.bf16.mxu0 0
        %1238 = vmatpush1.bf16.msra.mxu0 0
        %1239 = vmatprep.subr.bf16.mxu0 0
        %1240 = vmatpush1.bf16.msra.mxu0 0
        %1241 = vmatprep.subr.bf16.mxu0 0
        %1242 = vmatpush1.bf16.msra.mxu0 0
        %1243 = vmatprep.subr.bf16.mxu0 0
        %1244 = vmatpush1.bf16.msra.mxu0 0
        %1245 = vmatprep.mubr.bf16.mxu0 0
        %1246 = vmatmul.mubr.bf16.gmra.mrb[0].mxu0 %v1211
        %v1247 = vpop.f32.mrb[0].mxu0
        %v1248 = vadd.f32 0.0, %v1247
        %v1249 = vpop.f32.mrb[0].mxu0
        %v1250 = vpop.f32.mrb[0].mxu0
        %v1251 = vadd.f32 0.0, %v1250
        %v1252 = vpop.f32.mrb[0].mxu0
        %1253 = vdwg.mxu0
        %1256 = vrot.lane.b32.xlu0 %v783, 96
        %v1257 = vpop.permute.xlu0 %1256
        %1258 = vrot.lane.b32.xlu0 %v784, 96
        %v1259 = vpop.permute.xlu0 %1258
        %v1263 = vsel %vm449, %v1097, 0
        %1265 = vmatprep.subr.bf16.mxu0 0
        %1266 = vmatpush1.bf16.msra.mxu0 %v1257
        %1267 = vmatprep.subr.bf16.mxu0 0
        %1268 = vmatpush1.bf16.msra.mxu0 %v1259
        %1269 = vmatprep.subr.bf16.mxu0 0
        %1270 = vmatpush1.bf16.msra.mxu0 0
        %1271 = vmatprep.subr.bf16.mxu0 0
        %1272 = vmatpush1.bf16.msra.mxu0 0
        %1273 = vmatprep.subr.bf16.mxu0 0
        %1274 = vmatpush1.bf16.msra.mxu0 0
        %1275 = vmatprep.subr.bf16.mxu0 0
        %1276 = vmatpush1.bf16.msra.mxu0 0
        %1277 = vmatprep.subr.bf16.mxu0 0
        %1278 = vmatpush1.bf16.msra.mxu0 0
        %1279 = vmatprep.subr.bf16.mxu0 0
        %1280 = vmatpush1.bf16.msra.mxu0 0
        %1281 = vmatprep.subr.bf16.mxu0 0
        %1282 = vmatpush1.bf16.msra.mxu0 0
        %1283 = vmatprep.subr.bf16.mxu0 0
        %1284 = vmatpush1.bf16.msra.mxu0 0
        %1285 = vmatprep.subr.bf16.mxu0 0
        %1286 = vmatpush1.bf16.msra.mxu0 0
        %1287 = vmatprep.subr.bf16.mxu0 0
        %1288 = vmatpush1.bf16.msra.mxu0 0
        %1289 = vmatprep.subr.bf16.mxu0 0
        %1290 = vmatpush1.bf16.msra.mxu0 0
        %1291 = vmatprep.subr.bf16.mxu0 0
        %1292 = vmatpush1.bf16.msra.mxu0 0
        %1293 = vmatprep.subr.bf16.mxu0 0
        %1294 = vmatpush1.bf16.msra.mxu0 0
        %1295 = vmatprep.subr.bf16.mxu0 0
        %1296 = vmatpush1.bf16.msra.mxu0 0
        %1297 = vmatprep.mubr.bf16.mxu0 0
        %1298 = vmatmul.mubr.bf16.gmra.mrb[0].mxu0 %v1263
        %v1299 = vpop.f32.mrb[0].mxu0
        %v1300 = vadd.f32 0.0, %v1299
        %v1301 = vpop.f32.mrb[0].mxu0
        %v1302 = vpop.f32.mrb[0].mxu0
        %v1303 = vadd.f32 0.0, %v1302
        %v1304 = vpop.f32.mrb[0].mxu0
        %1305 = vdwg.mxu0
        %v1306 = vrcp.pop %v1072
        %v1307 = vrcp.pop %v1075
        %v1308 = vrcp.pop %v1078
        %v1309 = vrcp.pop %v1081
        %v1310 = vrcp.pop %v1084
        %v1311 = vrcp.pop %v1087
        %v1312 = vrcp.pop %v1090
        %v1313 = vrcp.pop %v1093
        %v1314 = vmul.f32 %v1144, %v1306
        %v1315 = vmul.f32 %v1147, %v1307
        %v1316 = vmul.f32 %v1196, %v1308
        %v1317 = vmul.f32 %v1199, %v1309
        %v1318 = vmul.f32 %v1248, %v1310
        %v1319 = vmul.f32 %v1251, %v1311
        %v1320 = vmul.f32 %v1300, %v1312
        %v1321 = vmul.f32 %v1303, %v1313
        %1330 = vrot.lane.b32.xlu0 %v754, 96
        %v1331 = vpop.permute.xlu0 %1330
        %1332 = vrot.lane.b32.xlu0 %v756, 96
        %v1333 = vpop.permute.xlu0 %1332
        %1334 = vrot.lane.b32.xlu0 %v758, 96
        %v1335 = vpop.permute.xlu0 %1334
        %1336 = vrot.lane.b32.xlu0 %v760, 96
        %v1337 = vpop.permute.xlu0 %1336
        %1338 = vrot.lane.b32.xlu0 %v762, 96
        %v1339 = vpop.permute.xlu0 %1338
        %1340 = vrot.lane.b32.xlu0 %v764, 96
        %v1341 = vpop.permute.xlu0 %1340
        %1342 = vrot.lane.b32.xlu0 %v766, 96
        %v1343 = vpop.permute.xlu0 %1342
        %1344 = vrot.lane.b32.xlu0 %v768, 96
        %v1345 = vpop.permute.xlu0 %1344
        %v1354 = vmul.f32 %v1314, %v1331
        %v1355 = vmul.f32 %v1315, %v1333
        %v1356 = vmul.f32 %v1316, %v1335
        %v1357 = vmul.f32 %v1317, %v1337
        %v1358 = vmul.f32 %v1318, %v1339
        %v1359 = vmul.f32 %v1319, %v1341
        %v1360 = vmul.f32 %v1320, %v1343
        %v1361 = vmul.f32 %v1321, %v1345
        %v1362 = vpack.c.bf16 %v1355, %v1354
        %v1363 = vpack.c.bf16 %v1357, %v1356
        %v1364 = vpack.c.bf16 %v1359, %v1358
        %v1365 = vpack.c.bf16 %v1361, %v1360
        %v1366 = vld [vmem:[%s7] sm:$0xf]
        %s1367 = scalar_lea.vmem %s387, 8
        %v1368 = vld [vmem:[%s1367] sm:$0xf]
        %v1369 = vld [vmem:[%s1367 + $0x4] sm:$0xf]
        %v1370 = vunpack.c.l.bf16 %v1368
        %v1371 = vunpack.c.l.bf16 %v1369
        %1373 = vrot.lane.b32.xlu0 %v773, 120
        %v1374 = vpop.permute.xlu0 %1373
        %1375 = vrot.lane.b32.xlu0 %v777, 120
        %v1376 = vpop.permute.xlu0 %1375
        %1377 = vrot.lane.b32.xlu0 %v778, 120
        %v1378 = vpop.permute.xlu0 %1377
        %v1380 = vsel %vm789, %v1374, 0
        %v1383 = vsel %vm789, %v1376, 0
        %v1386 = vsel %vm789, %v1378, 0
        %1388 = vmatprep.subr.bf16.mxu0 0
        %1389 = vmatpush1.bf16.xpose.msra.mxu0 %v1383
        %1390 = vmatprep.subr.bf16.mxu0 0
        %1391 = vmatpush1.bf16.xpose.msra.mxu0 %v1386
        %1392 = vmatprep.subr.bf16.mxu0 0
        %1393 = vmatpush1.bf16.xpose.msra.mxu0 0
        %1394 = vmatprep.subr.bf16.mxu0 0
        %1395 = vmatpush1.bf16.xpose.msra.mxu0 0
        %1396 = vmatprep.subr.bf16.mxu0 0
        %1397 = vmatpush1.bf16.xpose.msra.mxu0 0
        %1398 = vmatprep.subr.bf16.mxu0 0
        %1399 = vmatpush1.bf16.xpose.msra.mxu0 0
        %1400 = vmatprep.subr.bf16.mxu0 0
        %1401 = vmatpush1.bf16.xpose.msra.mxu0 0
        %1402 = vmatprep.subr.bf16.mxu0 0
        %1403 = vmatpush1.bf16.xpose.msra.mxu0 0
        %1404 = vmatprep.subr.bf16.mxu0 0
        %1405 = vmatpush1.bf16.xpose.msra.mxu0 0
        %1406 = vmatprep.subr.bf16.mxu0 0
        %1407 = vmatpush1.bf16.xpose.msra.mxu0 0
        %1408 = vmatprep.subr.bf16.mxu0 0
        %1409 = vmatpush1.bf16.xpose.msra.mxu0 0
        %1410 = vmatprep.subr.bf16.mxu0 0
        %1411 = vmatpush1.bf16.xpose.msra.mxu0 0
        %1412 = vmatprep.subr.bf16.mxu0 0
        %1413 = vmatpush1.bf16.xpose.msra.mxu0 0
        %1414 = vmatprep.subr.bf16.mxu0 0
        %1415 = vmatpush1.bf16.xpose.msra.mxu0 0
        %1416 = vmatprep.subr.bf16.mxu0 0
        %1417 = vmatpush1.bf16.xpose.msra.mxu0 0
        %1418 = vmatprep.subr.bf16.mxu0 0
        %1419 = vmatpush1.bf16.xpose.msra.mxu0 0
        %1420 = vmatprep.mubr.bf16.mxu0 0
        %1421 = vmatmul.mubr.bf16.gmra.mrb[0].mxu0 %v1380
        %v1422 = vpop.f32.mrb[0].mxu0
        %v1423 = vadd.f32 %v1370, %v1422
        %v1424 = vpop.f32.mrb[0].mxu0
        %v1425 = vpop.f32.mrb[0].mxu0
        %v1426 = vadd.f32 %v1371, %v1425
        %v1427 = vpop.f32.mrb[0].mxu0
        %1428 = vdwg.mxu0
        %1430 = vrot.lane.b32.xlu0 %v774, 120
        %v1431 = vpop.permute.xlu0 %1430
        %1432 = vrot.lane.b32.xlu0 %v779, 120
        %v1433 = vpop.permute.xlu0 %1432
        %1434 = vrot.lane.b32.xlu0 %v780, 120
        %v1435 = vpop.permute.xlu0 %1434
        %v1437 = vsel %vm789, %v1431, 0
        %v1440 = vsel %vm789, %v1433, 0
        %v1443 = vsel %vm789, %v1435, 0
        %1445 = vmatprep.subr.bf16.mxu0 0
        %1446 = vmatpush1.bf16.xpose.msra.mxu0 %v1440
        %1447 = vmatprep.subr.bf16.mxu0 0
        %1448 = vmatpush1.bf16.xpose.msra.mxu0 %v1443
        %1449 = vmatprep.subr.bf16.mxu0 0
        %1450 = vmatpush1.bf16.xpose.msra.mxu0 0
        %1451 = vmatprep.subr.bf16.mxu0 0
        %1452 = vmatpush1.bf16.xpose.msra.mxu0 0
        %1453 = vmatprep.subr.bf16.mxu0 0
        %1454 = vmatpush1.bf16.xpose.msra.mxu0 0
        %1455 = vmatprep.subr.bf16.mxu0 0
        %1456 = vmatpush1.bf16.xpose.msra.mxu0 0
        %1457 = vmatprep.subr.bf16.mxu0 0
        %1458 = vmatpush1.bf16.xpose.msra.mxu0 0
        %1459 = vmatprep.subr.bf16.mxu0 0
        %1460 = vmatpush1.bf16.xpose.msra.mxu0 0
        %1461 = vmatprep.subr.bf16.mxu0 0
        %1462 = vmatpush1.bf16.xpose.msra.mxu0 0
        %1463 = vmatprep.subr.bf16.mxu0 0
        %1464 = vmatpush1.bf16.xpose.msra.mxu0 0
        %1465 = vmatprep.subr.bf16.mxu0 0
        %1466 = vmatpush1.bf16.xpose.msra.mxu0 0
        %1467 = vmatprep.subr.bf16.mxu0 0
        %1468 = vmatpush1.bf16.xpose.msra.mxu0 0
        %1469 = vmatprep.subr.bf16.mxu0 0
        %1470 = vmatpush1.bf16.xpose.msra.mxu0 0
        %1471 = vmatprep.subr.bf16.mxu0 0
        %1472 = vmatpush1.bf16.xpose.msra.mxu0 0
        %1473 = vmatprep.subr.bf16.mxu0 0
        %1474 = vmatpush1.bf16.xpose.msra.mxu0 0
        %1475 = vmatprep.subr.bf16.mxu0 0
        %1476 = vmatpush1.bf16.xpose.msra.mxu0 0
        %1477 = vmatprep.mubr.bf16.mxu0 0
        %1478 = vmatmul.mubr.bf16.gmra.mrb[0].mxu0 %v1437
        %v1479 = vpop.f32.mrb[0].mxu0
        %v1480 = vadd.f32 %v1370, %v1479
        %v1481 = vpop.f32.mrb[0].mxu0
        %v1482 = vpop.f32.mrb[0].mxu0
        %v1483 = vadd.f32 %v1371, %v1482
        %v1484 = vpop.f32.mrb[0].mxu0
        %1485 = vdwg.mxu0
        %1487 = vrot.lane.b32.xlu0 %v775, 120
        %v1488 = vpop.permute.xlu0 %1487
        %1489 = vrot.lane.b32.xlu0 %v781, 120
        %v1490 = vpop.permute.xlu0 %1489
        %1491 = vrot.lane.b32.xlu0 %v782, 120
        %v1492 = vpop.permute.xlu0 %1491
        %v1494 = vsel %vm789, %v1488, 0
        %v1497 = vsel %vm789, %v1490, 0
        %v1500 = vsel %vm789, %v1492, 0
        %1502 = vmatprep.subr.bf16.mxu0 0
        %1503 = vmatpush1.bf16.xpose.msra.mxu0 %v1497
        %1504 = vmatprep.subr.bf16.mxu0 0
        %1505 = vmatpush1.bf16.xpose.msra.mxu0 %v1500
        %1506 = vmatprep.subr.bf16.mxu0 0
        %1507 = vmatpush1.bf16.xpose.msra.mxu0 0
        %1508 = vmatprep.subr.bf16.mxu0 0
        %1509 = vmatpush1.bf16.xpose.msra.mxu0 0
        %1510 = vmatprep.subr.bf16.mxu0 0
        %1511 = vmatpush1.bf16.xpose.msra.mxu0 0
        %1512 = vmatprep.subr.bf16.mxu0 0
        %1513 = vmatpush1.bf16.xpose.msra.mxu0 0
        %1514 = vmatprep.subr.bf16.mxu0 0
        %1515 = vmatpush1.bf16.xpose.msra.mxu0 0
        %1516 = vmatprep.subr.bf16.mxu0 0
        %1517 = vmatpush1.bf16.xpose.msra.mxu0 0
        %1518 = vmatprep.subr.bf16.mxu0 0
        %1519 = vmatpush1.bf16.xpose.msra.mxu0 0
        %1520 = vmatprep.subr.bf16.mxu0 0
        %1521 = vmatpush1.bf16.xpose.msra.mxu0 0
        %1522 = vmatprep.subr.bf16.mxu0 0
        %1523 = vmatpush1.bf16.xpose.msra.mxu0 0
        %1524 = vmatprep.subr.bf16.mxu0 0
        %1525 = vmatpush1.bf16.xpose.msra.mxu0 0
        %1526 = vmatprep.subr.bf16.mxu0 0
        %1527 = vmatpush1.bf16.xpose.msra.mxu0 0
        %1528 = vmatprep.subr.bf16.mxu0 0
        %1529 = vmatpush1.bf16.xpose.msra.mxu0 0
        %1530 = vmatprep.subr.bf16.mxu0 0
        %1531 = vmatpush1.bf16.xpose.msra.mxu0 0
        %1532 = vmatprep.subr.bf16.mxu0 0
        %1533 = vmatpush1.bf16.xpose.msra.mxu0 0
        %1534 = vmatprep.mubr.bf16.mxu0 0
        %1535 = vmatmul.mubr.bf16.gmra.mrb[0].mxu0 %v1494
        %v1536 = vpop.f32.mrb[0].mxu0
        %v1537 = vadd.f32 %v1370, %v1536
        %v1538 = vpop.f32.mrb[0].mxu0
        %v1539 = vpop.f32.mrb[0].mxu0
        %v1540 = vadd.f32 %v1371, %v1539
        %v1541 = vpop.f32.mrb[0].mxu0
        %1542 = vdwg.mxu0
        %1544 = vrot.lane.b32.xlu0 %v776, 120
        %v1545 = vpop.permute.xlu0 %1544
        %1546 = vrot.lane.b32.xlu0 %v783, 120
        %v1547 = vpop.permute.xlu0 %1546
        %1548 = vrot.lane.b32.xlu0 %v784, 120
        %v1549 = vpop.permute.xlu0 %1548
        %v1551 = vsel %vm789, %v1545, 0
        %v1554 = vsel %vm789, %v1547, 0
        %v1557 = vsel %vm789, %v1549, 0
        %1559 = vmatprep.subr.bf16.mxu0 0
        %1560 = vmatpush1.bf16.xpose.msra.mxu0 %v1554
        %1561 = vmatprep.subr.bf16.mxu0 0
        %1562 = vmatpush1.bf16.xpose.msra.mxu0 %v1557
        %1563 = vmatprep.subr.bf16.mxu0 0
        %1564 = vmatpush1.bf16.xpose.msra.mxu0 0
        %1565 = vmatprep.subr.bf16.mxu0 0
        %1566 = vmatpush1.bf16.xpose.msra.mxu0 0
        %1567 = vmatprep.subr.bf16.mxu0 0
        %1568 = vmatpush1.bf16.xpose.msra.mxu0 0
        %1569 = vmatprep.subr.bf16.mxu0 0
        %1570 = vmatpush1.bf16.xpose.msra.mxu0 0
        %1571 = vmatprep.subr.bf16.mxu0 0
        %1572 = vmatpush1.bf16.xpose.msra.mxu0 0
        %1573 = vmatprep.subr.bf16.mxu0 0
        %1574 = vmatpush1.bf16.xpose.msra.mxu0 0
        %1575 = vmatprep.subr.bf16.mxu0 0
        %1576 = vmatpush1.bf16.xpose.msra.mxu0 0
        %1577 = vmatprep.subr.bf16.mxu0 0
        %1578 = vmatpush1.bf16.xpose.msra.mxu0 0
        %1579 = vmatprep.subr.bf16.mxu0 0
        %1580 = vmatpush1.bf16.xpose.msra.mxu0 0
        %1581 = vmatprep.subr.bf16.mxu0 0
        %1582 = vmatpush1.bf16.xpose.msra.mxu0 0
        %1583 = vmatprep.subr.bf16.mxu0 0
        %1584 = vmatpush1.bf16.xpose.msra.mxu0 0
        %1585 = vmatprep.subr.bf16.mxu0 0
        %1586 = vmatpush1.bf16.xpose.msra.mxu0 0
        %1587 = vmatprep.subr.bf16.mxu0 0
        %1588 = vmatpush1.bf16.xpose.msra.mxu0 0
        %1589 = vmatprep.subr.bf16.mxu0 0
        %1590 = vmatpush1.bf16.xpose.msra.mxu0 0
        %1591 = vmatprep.mubr.bf16.mxu0 0
        %1592 = vmatmul.mubr.bf16.gmra.mrb[0].mxu0 %v1551
        %v1593 = vpop.f32.mrb[0].mxu0
        %v1594 = vadd.f32 %v1370, %v1593
        %v1595 = vpop.f32.mrb[0].mxu0
        %v1596 = vpop.f32.mrb[0].mxu0
        %v1597 = vadd.f32 %v1371, %v1596
        %v1598 = vpop.f32.mrb[0].mxu0
        %1599 = vdwg.mxu0
        %v1600 = vadd.f32 %v1423, %v997
        %v1601 = vadd.f32 %v1426, %v997
        %v1602 = vadd.f32 %v1480, %v1001
        %v1603 = vadd.f32 %v1483, %v1001
        %v1604 = vadd.f32 %v1537, %v1005
        %v1605 = vadd.f32 %v1540, %v1005
        %v1606 = vadd.f32 %v1594, %v1009
        %v1607 = vadd.f32 %v1597, %v1009
        %v1608 = vsel %vm449, %v1600, -inf
        %1609 = vmax.xlane.f32.xlu0 %v1608
        %v1610 = vpop.xlane.xlu0 %1609
        %v1611 = vsel %vm449, %v1601, -inf
        %1612 = vmax.xlane.f32.xlu0 %v1611
        %v1613 = vpop.xlane.xlu0 %1612
        %v1614 = vsel %vm449, %v1602, -inf
        %1615 = vmax.xlane.f32.xlu0 %v1614
        %v1616 = vpop.xlane.xlu0 %1615
        %v1617 = vsel %vm449, %v1603, -inf
        %1618 = vmax.xlane.f32.xlu0 %v1617
        %v1619 = vpop.xlane.xlu0 %1618
        %v1620 = vsel %vm449, %v1604, -inf
        %1621 = vmax.xlane.f32.xlu0 %v1620
        %v1622 = vpop.xlane.xlu0 %1621
        %v1623 = vsel %vm449, %v1605, -inf
        %1624 = vmax.xlane.f32.xlu0 %v1623
        %v1625 = vpop.xlane.xlu0 %1624
        %v1626 = vsel %vm449, %v1606, -inf
        %1627 = vmax.xlane.f32.xlu0 %v1626
        %v1628 = vpop.xlane.xlu0 %1627
        %v1629 = vsel %vm449, %v1607, -inf
        %1630 = vmax.xlane.f32.xlu0 %v1629
        %v1631 = vpop.xlane.xlu0 %1630
        %v1632 = vsub.f32 %v1600, %v1610
        %v1633 = vsub.f32 %v1601, %v1613
        %v1634 = vsub.f32 %v1602, %v1616
        %v1635 = vsub.f32 %v1603, %v1619
        %v1636 = vsub.f32 %v1604, %v1622
        %v1637 = vsub.f32 %v1605, %v1625
        %v1638 = vsub.f32 %v1606, %v1628
        %v1639 = vsub.f32 %v1607, %v1631
        %v1640 = vmul.f32 %v1632, 1.442695
        %v1641 = vpow.pop %v1640
        %v1642 = vmul.f32 %v1633, 1.442695
        %v1643 = vpow.pop %v1642
        %v1644 = vmul.f32 %v1634, 1.442695
        %v1645 = vpow.pop %v1644
        %v1646 = vmul.f32 %v1635, 1.442695
        %v1647 = vpow.pop %v1646
        %v1648 = vmul.f32 %v1636, 1.442695
        %v1649 = vpow.pop %v1648
        %v1650 = vmul.f32 %v1637, 1.442695
        %v1651 = vpow.pop %v1650
        %v1652 = vmul.f32 %v1638, 1.442695
        %v1653 = vpow.pop %v1652
        %v1654 = vmul.f32 %v1639, 1.442695
        %v1655 = vpow.pop %v1654
        %v1656 = vsel %vm449, %v1641, 0.0
        %1657 = vadd.xlane.f32.xlu0 %v1656
        %v1658 = vpop.xlane.xlu0 %1657
        %v1659 = vsel %vm449, %v1643, 0.0
        %1660 = vadd.xlane.f32.xlu0 %v1659
        %v1661 = vpop.xlane.xlu0 %1660
        %v1662 = vsel %vm449, %v1645, 0.0
        %1663 = vadd.xlane.f32.xlu0 %v1662
        %v1664 = vpop.xlane.xlu0 %1663
        %v1665 = vsel %vm449, %v1647, 0.0
        %1666 = vadd.xlane.f32.xlu0 %v1665
        %v1667 = vpop.xlane.xlu0 %1666
        %v1668 = vsel %vm449, %v1649, 0.0
        %1669 = vadd.xlane.f32.xlu0 %v1668
        %v1670 = vpop.xlane.xlu0 %1669
        %v1671 = vsel %vm449, %v1651, 0.0
        %1672 = vadd.xlane.f32.xlu0 %v1671
        %v1673 = vpop.xlane.xlu0 %1672
        %v1674 = vsel %vm449, %v1653, 0.0
        %1675 = vadd.xlane.f32.xlu0 %v1674
        %v1676 = vpop.xlane.xlu0 %1675
        %v1677 = vsel %vm449, %v1655, 0.0
        %1678 = vadd.xlane.f32.xlu0 %v1677
        %v1679 = vpop.xlane.xlu0 %1678
        %v1680 = vpack.c.bf16 %v1643, %v1641
        %v1681 = vpack.c.bf16 %v1647, %v1645
        %v1682 = vpack.c.bf16 %v1651, %v1649
        %v1683 = vpack.c.bf16 %v1655, %v1653
        %1684 = vrot.lane.b32.xlu0 %v777, 88
        %v1685 = vpop.permute.xlu0 %1684
        %1686 = vrot.lane.b32.xlu0 %v778, 88
        %v1687 = vpop.permute.xlu0 %1686
        %v1691 = vsel %vm449, %v1680, 0
        %1693 = vmatprep.subr.bf16.mxu0 0
        %1694 = vmatpush1.bf16.msra.mxu0 %v1685
        %1695 = vmatprep.subr.bf16.mxu0 0
        %1696 = vmatpush1.bf16.msra.mxu0 %v1687
        %1697 = vmatprep.subr.bf16.mxu0 0
        %1698 = vmatpush1.bf16.msra.mxu0 0
        %1699 = vmatprep.subr.bf16.mxu0 0
        %1700 = vmatpush1.bf16.msra.mxu0 0
        %1701 = vmatprep.subr.bf16.mxu0 0
        %1702 = vmatpush1.bf16.msra.mxu0 0
        %1703 = vmatprep.subr.bf16.mxu0 0
        %1704 = vmatpush1.bf16.msra.mxu0 0
        %1705 = vmatprep.subr.bf16.mxu0 0
        %1706 = vmatpush1.bf16.msra.mxu0 0
        %1707 = vmatprep.subr.bf16.mxu0 0
        %1708 = vmatpush1.bf16.msra.mxu0 0
        %1709 = vmatprep.subr.bf16.mxu0 0
        %1710 = vmatpush1.bf16.msra.mxu0 0
        %1711 = vmatprep.subr.bf16.mxu0 0
        %1712 = vmatpush1.bf16.msra.mxu0 0
        %1713 = vmatprep.subr.bf16.mxu0 0
        %1714 = vmatpush1.bf16.msra.mxu0 0
        %1715 = vmatprep.subr.bf16.mxu0 0
        %1716 = vmatpush1.bf16.msra.mxu0 0
        %1717 = vmatprep.subr.bf16.mxu0 0
        %1718 = vmatpush1.bf16.msra.mxu0 0
        %1719 = vmatprep.subr.bf16.mxu0 0
        %1720 = vmatpush1.bf16.msra.mxu0 0
        %1721 = vmatprep.subr.bf16.mxu0 0
        %1722 = vmatpush1.bf16.msra.mxu0 0
        %1723 = vmatprep.subr.bf16.mxu0 0
        %1724 = vmatpush1.bf16.msra.mxu0 0
        %1725 = vmatprep.mubr.bf16.mxu0 0
        %1726 = vmatmul.mubr.bf16.gmra.mrb[0].mxu0 %v1691
        %v1727 = vpop.f32.mrb[0].mxu0
        %v1728 = vadd.f32 0.0, %v1727
        %v1729 = vpop.f32.mrb[0].mxu0
        %v1730 = vpop.f32.mrb[0].mxu0
        %v1731 = vadd.f32 0.0, %v1730
        %v1732 = vpop.f32.mrb[0].mxu0
        %1733 = vdwg.mxu0
        %1734 = vrot.lane.b32.xlu0 %v779, 88
        %v1735 = vpop.permute.xlu0 %1734
        %1736 = vrot.lane.b32.xlu0 %v780, 88
        %v1737 = vpop.permute.xlu0 %1736
        %v1741 = vsel %vm449, %v1681, 0
        %1743 = vmatprep.subr.bf16.mxu0 0
        %1744 = vmatpush1.bf16.msra.mxu0 %v1735
        %1745 = vmatprep.subr.bf16.mxu0 0
        %1746 = vmatpush1.bf16.msra.mxu0 %v1737
        %1747 = vmatprep.subr.bf16.mxu0 0
        %1748 = vmatpush1.bf16.msra.mxu0 0
        %1749 = vmatprep.subr.bf16.mxu0 0
        %1750 = vmatpush1.bf16.msra.mxu0 0
        %1751 = vmatprep.subr.bf16.mxu0 0
        %1752 = vmatpush1.bf16.msra.mxu0 0
        %1753 = vmatprep.subr.bf16.mxu0 0
        %1754 = vmatpush1.bf16.msra.mxu0 0
        %1755 = vmatprep.subr.bf16.mxu0 0
        %1756 = vmatpush1.bf16.msra.mxu0 0
        %1757 = vmatprep.subr.bf16.mxu0 0
        %1758 = vmatpush1.bf16.msra.mxu0 0
        %1759 = vmatprep.subr.bf16.mxu0 0
        %1760 = vmatpush1.bf16.msra.mxu0 0
        %1761 = vmatprep.subr.bf16.mxu0 0
        %1762 = vmatpush1.bf16.msra.mxu0 0
        %1763 = vmatprep.subr.bf16.mxu0 0
        %1764 = vmatpush1.bf16.msra.mxu0 0
        %1765 = vmatprep.subr.bf16.mxu0 0
        %1766 = vmatpush1.bf16.msra.mxu0 0
        %1767 = vmatprep.subr.bf16.mxu0 0
        %1768 = vmatpush1.bf16.msra.mxu0 0
        %1769 = vmatprep.subr.bf16.mxu0 0
        %1770 = vmatpush1.bf16.msra.mxu0 0
        %1771 = vmatprep.subr.bf16.mxu0 0
        %1772 = vmatpush1.bf16.msra.mxu0 0
        %1773 = vmatprep.subr.bf16.mxu0 0
        %1774 = vmatpush1.bf16.msra.mxu0 0
        %1775 = vmatprep.mubr.bf16.mxu0 0
        %1776 = vmatmul.mubr.bf16.gmra.mrb[0].mxu0 %v1741
        %v1777 = vpop.f32.mrb[0].mxu0
        %v1778 = vadd.f32 0.0, %v1777
        %v1779 = vpop.f32.mrb[0].mxu0
        %v1780 = vpop.f32.mrb[0].mxu0
        %v1781 = vadd.f32 0.0, %v1780
        %v1782 = vpop.f32.mrb[0].mxu0
        %1783 = vdwg.mxu0
        %1784 = vrot.lane.b32.xlu0 %v781, 88
        %v1785 = vpop.permute.xlu0 %1784
        %1786 = vrot.lane.b32.xlu0 %v782, 88
        %v1787 = vpop.permute.xlu0 %1786
        %v1791 = vsel %vm449, %v1682, 0
        %1793 = vmatprep.subr.bf16.mxu0 0
        %1794 = vmatpush1.bf16.msra.mxu0 %v1785
        %1795 = vmatprep.subr.bf16.mxu0 0
        %1796 = vmatpush1.bf16.msra.mxu0 %v1787
        %1797 = vmatprep.subr.bf16.mxu0 0
        %1798 = vmatpush1.bf16.msra.mxu0 0
        %1799 = vmatprep.subr.bf16.mxu0 0
        %1800 = vmatpush1.bf16.msra.mxu0 0
        %1801 = vmatprep.subr.bf16.mxu0 0
        %1802 = vmatpush1.bf16.msra.mxu0 0
        %1803 = vmatprep.subr.bf16.mxu0 0
        %1804 = vmatpush1.bf16.msra.mxu0 0
        %1805 = vmatprep.subr.bf16.mxu0 0
        %1806 = vmatpush1.bf16.msra.mxu0 0
        %1807 = vmatprep.subr.bf16.mxu0 0
        %1808 = vmatpush1.bf16.msra.mxu0 0
        %1809 = vmatprep.subr.bf16.mxu0 0
        %1810 = vmatpush1.bf16.msra.mxu0 0
        %1811 = vmatprep.subr.bf16.mxu0 0
        %1812 = vmatpush1.bf16.msra.mxu0 0
        %1813 = vmatprep.subr.bf16.mxu0 0
        %1814 = vmatpush1.bf16.msra.mxu0 0
        %1815 = vmatprep.subr.bf16.mxu0 0
        %1816 = vmatpush1.bf16.msra.mxu0 0
        %1817 = vmatprep.subr.bf16.mxu0 0
        %1818 = vmatpush1.bf16.msra.mxu0 0
        %1819 = vmatprep.subr.bf16.mxu0 0
        %1820 = vmatpush1.bf16.msra.mxu0 0
        %1821 = vmatprep.subr.bf16.mxu0 0
        %1822 = vmatpush1.bf16.msra.mxu0 0
        %1823 = vmatprep.subr.bf16.mxu0 0
        %1824 = vmatpush1.bf16.msra.mxu0 0
        %1825 = vmatprep.mubr.bf16.mxu0 0
        %1826 = vmatmul.mubr.bf16.gmra.mrb[0].mxu0 %v1791
        %v1827 = vpop.f32.mrb[0].mxu0
        %v1828 = vadd.f32 0.0, %v1827
        %v1829 = vpop.f32.mrb[0].mxu0
        %v1830 = vpop.f32.mrb[0].mxu0
        %v1831 = vadd.f32 0.0, %v1830
        %v1832 = vpop.f32.mrb[0].mxu0
        %1833 = vdwg.mxu0
        %1834 = vrot.lane.b32.xlu0 %v783, 88
        %v1835 = vpop.permute.xlu0 %1834
        %1836 = vrot.lane.b32.xlu0 %v784, 88
        %v1837 = vpop.permute.xlu0 %1836
        %v1841 = vsel %vm449, %v1683, 0
        %1843 = vmatprep.subr.bf16.mxu0 0
        %1844 = vmatpush1.bf16.msra.mxu0 %v1835
        %1845 = vmatprep.subr.bf16.mxu0 0
        %1846 = vmatpush1.bf16.msra.mxu0 %v1837
        %1847 = vmatprep.subr.bf16.mxu0 0
        %1848 = vmatpush1.bf16.msra.mxu0 0
        %1849 = vmatprep.subr.bf16.mxu0 0
        %1850 = vmatpush1.bf16.msra.mxu0 0
        %1851 = vmatprep.subr.bf16.mxu0 0
        %1852 = vmatpush1.bf16.msra.mxu0 0
        %1853 = vmatprep.subr.bf16.mxu0 0
        %1854 = vmatpush1.bf16.msra.mxu0 0
        %1855 = vmatprep.subr.bf16.mxu0 0
        %1856 = vmatpush1.bf16.msra.mxu0 0
        %1857 = vmatprep.subr.bf16.mxu0 0
        %1858 = vmatpush1.bf16.msra.mxu0 0
        %1859 = vmatprep.subr.bf16.mxu0 0
        %1860 = vmatpush1.bf16.msra.mxu0 0
        %1861 = vmatprep.subr.bf16.mxu0 0
        %1862 = vmatpush1.bf16.msra.mxu0 0
        %1863 = vmatprep.subr.bf16.mxu0 0
        %1864 = vmatpush1.bf16.msra.mxu0 0
        %1865 = vmatprep.subr.bf16.mxu0 0
        %1866 = vmatpush1.bf16.msra.mxu0 0
        %1867 = vmatprep.subr.bf16.mxu0 0
        %1868 = vmatpush1.bf16.msra.mxu0 0
        %1869 = vmatprep.subr.bf16.mxu0 0
        %1870 = vmatpush1.bf16.msra.mxu0 0
        %1871 = vmatprep.subr.bf16.mxu0 0
        %1872 = vmatpush1.bf16.msra.mxu0 0
        %1873 = vmatprep.subr.bf16.mxu0 0
        %1874 = vmatpush1.bf16.msra.mxu0 0
        %1875 = vmatprep.mubr.bf16.mxu0 0
        %1876 = vmatmul.mubr.bf16.gmra.mrb[0].mxu0 %v1841
        %v1877 = vpop.f32.mrb[0].mxu0
        %v1878 = vadd.f32 0.0, %v1877
        %v1879 = vpop.f32.mrb[0].mxu0
        %v1880 = vpop.f32.mrb[0].mxu0
        %v1881 = vadd.f32 0.0, %v1880
        %v1882 = vpop.f32.mrb[0].mxu0
        %1883 = vdwg.mxu0
        %v1884 = vrcp.pop %v1658
        %v1885 = vrcp.pop %v1661
        %v1886 = vrcp.pop %v1664
        %v1887 = vrcp.pop %v1667
        %v1888 = vrcp.pop %v1670
        %v1889 = vrcp.pop %v1673
        %v1890 = vrcp.pop %v1676
        %v1891 = vrcp.pop %v1679
        %v1892 = vmul.f32 %v1728, %v1884
        %v1893 = vmul.f32 %v1731, %v1885
        %v1894 = vmul.f32 %v1778, %v1886
        %v1895 = vmul.f32 %v1781, %v1887
        %v1896 = vmul.f32 %v1828, %v1888
        %v1897 = vmul.f32 %v1831, %v1889
        %v1898 = vmul.f32 %v1878, %v1890
        %v1899 = vmul.f32 %v1881, %v1891
        %1900 = vrot.lane.b32.xlu0 %v754, 88
        %v1901 = vpop.permute.xlu0 %1900
        %1902 = vrot.lane.b32.xlu0 %v756, 88
        %v1903 = vpop.permute.xlu0 %1902
        %1904 = vrot.lane.b32.xlu0 %v758, 88
        %v1905 = vpop.permute.xlu0 %1904
        %1906 = vrot.lane.b32.xlu0 %v760, 88
        %v1907 = vpop.permute.xlu0 %1906
        %1908 = vrot.lane.b32.xlu0 %v762, 88
        %v1909 = vpop.permute.xlu0 %1908
        %1910 = vrot.lane.b32.xlu0 %v764, 88
        %v1911 = vpop.permute.xlu0 %1910
        %1912 = vrot.lane.b32.xlu0 %v766, 88
        %v1913 = vpop.permute.xlu0 %1912
        %1914 = vrot.lane.b32.xlu0 %v768, 88
        %v1915 = vpop.permute.xlu0 %1914
        %v1924 = vmul.f32 %v1892, %v1901
        %v1925 = vmul.f32 %v1893, %v1903
        %v1926 = vmul.f32 %v1894, %v1905
        %v1927 = vmul.f32 %v1895, %v1907
        %v1928 = vmul.f32 %v1896, %v1909
        %v1929 = vmul.f32 %v1897, %v1911
        %v1930 = vmul.f32 %v1898, %v1913
        %v1931 = vmul.f32 %v1899, %v1915
        %v1932 = vpack.c.bf16 %v1925, %v1924
        %v1933 = vpack.c.bf16 %v1927, %v1926
        %v1934 = vpack.c.bf16 %v1929, %v1928
        %v1935 = vpack.c.bf16 %v1931, %v1930
        %v1936 = vld [vmem:[%s7 + $0x4] sm:$0xf]
        %v1938 = vsel %vm789, %v1932, 0
        %v1941 = vsel %vm789, %v1933, 0
        %v1944 = vsel %vm789, %v1934, 0
        %v1947 = vsel %vm789, %v1935, 0
        %vm1949 = vcmask 1043456
        %v1951 = vsel %vm1949, %v1936, 0
        %1953 = vmatprep.subr.bf16.mxu0 0
        %1954 = vmatpush1.bf16.msra.mxu0 %v1951
        %1955 = vmatprep.subr.bf16.mxu0 0
        %1956 = vmatpush1.bf16.msra.mxu0 0
        %1957 = vmatprep.subr.bf16.mxu0 0
        %1958 = vmatpush1.bf16.msra.mxu0 0
        %1959 = vmatprep.subr.bf16.mxu0 0
        %1960 = vmatpush1.bf16.msra.mxu0 0
        %1961 = vmatprep.subr.bf16.mxu0 0
        %1962 = vmatpush1.bf16.msra.mxu0 0
        %1963 = vmatprep.subr.bf16.mxu0 0
        %1964 = vmatpush1.bf16.msra.mxu0 0
        %1965 = vmatprep.subr.bf16.mxu0 0
        %1966 = vmatpush1.bf16.msra.mxu0 0
        %1967 = vmatprep.subr.bf16.mxu0 0
        %1968 = vmatpush1.bf16.msra.mxu0 0
        %1969 = vmatprep.subr.bf16.mxu0 0
        %1970 = vmatpush1.bf16.msra.mxu0 0
        %1971 = vmatprep.subr.bf16.mxu0 0
        %1972 = vmatpush1.bf16.msra.mxu0 0
        %1973 = vmatprep.subr.bf16.mxu0 0
        %1974 = vmatpush1.bf16.msra.mxu0 0
        %1975 = vmatprep.subr.bf16.mxu0 0
        %1976 = vmatpush1.bf16.msra.mxu0 0
        %1977 = vmatprep.subr.bf16.mxu0 0
        %1978 = vmatpush1.bf16.msra.mxu0 0
        %1979 = vmatprep.subr.bf16.mxu0 0
        %1980 = vmatpush1.bf16.msra.mxu0 0
        %1981 = vmatprep.subr.bf16.mxu0 0
        %1982 = vmatpush1.bf16.msra.mxu0 0
        %1983 = vmatprep.subr.bf16.mxu0 0
        %1984 = vmatpush1.bf16.msra.mxu0 0
        %1985 = vmatprep.mubr.bf16.mxu0 0
        %1986 = vmatmul.mubr.bf16.gmra.mrb[0].mxu0 %v1938
        %v1987 = vpop.f32.mrb[0].mxu0
        %v1988 = vadd.f32 0.0, %v1987
        %v1989 = vpop.f32.mrb[0].mxu0
        %v1990 = vpop.f32.mrb[0].mxu0
        %v1991 = vadd.f32 0.0, %v1990
        %v1992 = vpop.f32.mrb[0].mxu0
        %1993 = vmatprep.mubr.bf16.mxu0 0
        %1994 = vmatmul.mubr.bf16.gmra.mrb[0].mxu0 %v1941
        %v1995 = vpop.f32.mrb[0].mxu0
        %v1996 = vadd.f32 0.0, %v1995
        %v1997 = vpop.f32.mrb[0].mxu0
        %v1998 = vpop.f32.mrb[0].mxu0
        %v1999 = vadd.f32 0.0, %v1998
        %v2000 = vpop.f32.mrb[0].mxu0
        %2001 = vmatprep.mubr.bf16.mxu0 0
        %2002 = vmatmul.mubr.bf16.gmra.mrb[0].mxu0 %v1944
        %v2003 = vpop.f32.mrb[0].mxu0
        %v2004 = vadd.f32 0.0, %v2003
        %v2005 = vpop.f32.mrb[0].mxu0
        %v2006 = vpop.f32.mrb[0].mxu0
        %v2007 = vadd.f32 0.0, %v2006
        %v2008 = vpop.f32.mrb[0].mxu0
        %2009 = vmatprep.mubr.bf16.mxu0 0
        %2010 = vmatmul.mubr.bf16.gmra.mrb[0].mxu0 %v1947
        %v2011 = vpop.f32.mrb[0].mxu0
        %v2012 = vadd.f32 0.0, %v2011
        %v2013 = vpop.f32.mrb[0].mxu0
        %v2014 = vpop.f32.mrb[0].mxu0
        %v2015 = vadd.f32 0.0, %v2014
        %v2016 = vpop.f32.mrb[0].mxu0
        %2017 = vdwg.mxu0
        %v2019 = vsel %vm789, %v1362, 0
        %v2022 = vsel %vm789, %v1363, 0
        %v2025 = vsel %vm789, %v1364, 0
        %v2028 = vsel %vm789, %v1365, 0
        %v2031 = vsel %vm1949, %v1366, 0
        %2033 = vmatprep.subr.bf16.mxu0 0
        %2034 = vmatpush1.bf16.msra.mxu0 %v2031
        %2035 = vmatprep.subr.bf16.mxu0 0
        %2036 = vmatpush1.bf16.msra.mxu0 0
        %2037 = vmatprep.subr.bf16.mxu0 0
        %2038 = vmatpush1.bf16.msra.mxu0 0
        %2039 = vmatprep.subr.bf16.mxu0 0
        %2040 = vmatpush1.bf16.msra.mxu0 0
        %2041 = vmatprep.subr.bf16.mxu0 0
        %2042 = vmatpush1.bf16.msra.mxu0 0
        %2043 = vmatprep.subr.bf16.mxu0 0
        %2044 = vmatpush1.bf16.msra.mxu0 0
        %2045 = vmatprep.subr.bf16.mxu0 0
        %2046 = vmatpush1.bf16.msra.mxu0 0
        %2047 = vmatprep.subr.bf16.mxu0 0
        %2048 = vmatpush1.bf16.msra.mxu0 0
        %2049 = vmatprep.subr.bf16.mxu0 0
        %2050 = vmatpush1.bf16.msra.mxu0 0
        %2051 = vmatprep.subr.bf16.mxu0 0
        %2052 = vmatpush1.bf16.msra.mxu0 0
        %2053 = vmatprep.subr.bf16.mxu0 0
        %2054 = vmatpush1.bf16.msra.mxu0 0
        %2055 = vmatprep.subr.bf16.mxu0 0
        %2056 = vmatpush1.bf16.msra.mxu0 0
        %2057 = vmatprep.subr.bf16.mxu0 0
        %2058 = vmatpush1.bf16.msra.mxu0 0
        %2059 = vmatprep.subr.bf16.mxu0 0
        %2060 = vmatpush1.bf16.msra.mxu0 0
        %2061 = vmatprep.subr.bf16.mxu0 0
        %2062 = vmatpush1.bf16.msra.mxu0 0
        %2063 = vmatprep.subr.bf16.mxu0 0
        %2064 = vmatpush1.bf16.msra.mxu0 0
        %2065 = vmatprep.mubr.bf16.mxu0 0
        %2066 = vmatmul.mubr.bf16.gmra.mrb[0].mxu0 %v2019
        %v2067 = vpop.f32.mrb[0].mxu0
        %v2068 = vadd.f32 %v1988, %v2067
        %v2069 = vpop.f32.mrb[0].mxu0
        %v2070 = vpop.f32.mrb[0].mxu0
        %v2071 = vadd.f32 %v1991, %v2070
        %v2072 = vpop.f32.mrb[0].mxu0
        %2073 = vmatprep.mubr.bf16.mxu0 0
        %2074 = vmatmul.mubr.bf16.gmra.mrb[0].mxu0 %v2022
        %v2075 = vpop.f32.mrb[0].mxu0
        %v2076 = vadd.f32 %v1996, %v2075
        %v2077 = vpop.f32.mrb[0].mxu0
        %v2078 = vpop.f32.mrb[0].mxu0
        %v2079 = vadd.f32 %v1999, %v2078
        %v2080 = vpop.f32.mrb[0].mxu0
        %2081 = vmatprep.mubr.bf16.mxu0 0
        %2082 = vmatmul.mubr.bf16.gmra.mrb[0].mxu0 %v2025
        %v2083 = vpop.f32.mrb[0].mxu0
        %v2084 = vadd.f32 %v2004, %v2083
        %v2085 = vpop.f32.mrb[0].mxu0
        %v2086 = vpop.f32.mrb[0].mxu0
        %v2087 = vadd.f32 %v2007, %v2086
        %v2088 = vpop.f32.mrb[0].mxu0
        %2089 = vmatprep.mubr.bf16.mxu0 0
        %2090 = vmatmul.mubr.bf16.gmra.mrb[0].mxu0 %v2028
        %v2091 = vpop.f32.mrb[0].mxu0
        %v2092 = vadd.f32 %v2012, %v2091
        %v2093 = vpop.f32.mrb[0].mxu0
        %v2094 = vpop.f32.mrb[0].mxu0
        %v2095 = vadd.f32 %v2015, %v2094
        %v2096 = vpop.f32.mrb[0].mxu0
        %2097 = vdwg.mxu0
        %s2098 = scalar_lea.vmem %s387, 16
        %v2099 = vld [vmem:[%s2098] sm:$0xf]
        %v2100 = vld [vmem:[%s2098 + $0x4] sm:$0xf]
        %v2101 = vunpack.c.l.bf16 %v2099
        %v2102 = vunpack.c.l.bf16 %v2100
        %2103 = vrot.lane.b32.xlu0 %v773, 112
        %v2104 = vpop.permute.xlu0 %2103
        %2105 = vrot.lane.b32.xlu0 %v777, 112
        %v2106 = vpop.permute.xlu0 %2105
        %2107 = vrot.lane.b32.xlu0 %v778, 112
        %v2108 = vpop.permute.xlu0 %2107
        %v2110 = vsel %vm789, %v2104, 0
        %v2113 = vsel %vm789, %v2106, 0
        %v2116 = vsel %vm789, %v2108, 0
        %2118 = vmatprep.subr.bf16.mxu0 0
        %2119 = vmatpush1.bf16.xpose.msra.mxu0 %v2113
        %2120 = vmatprep.subr.bf16.mxu0 0
        %2121 = vmatpush1.bf16.xpose.msra.mxu0 %v2116
        %2122 = vmatprep.subr.bf16.mxu0 0
        %2123 = vmatpush1.bf16.xpose.msra.mxu0 0
        %2124 = vmatprep.subr.bf16.mxu0 0
        %2125 = vmatpush1.bf16.xpose.msra.mxu0 0
        %2126 = vmatprep.subr.bf16.mxu0 0
        %2127 = vmatpush1.bf16.xpose.msra.mxu0 0
        %2128 = vmatprep.subr.bf16.mxu0 0
        %2129 = vmatpush1.bf16.xpose.msra.mxu0 0
        %2130 = vmatprep.subr.bf16.mxu0 0
        %2131 = vmatpush1.bf16.xpose.msra.mxu0 0
        %2132 = vmatprep.subr.bf16.mxu0 0
        %2133 = vmatpush1.bf16.xpose.msra.mxu0 0
        %2134 = vmatprep.subr.bf16.mxu0 0
        %2135 = vmatpush1.bf16.xpose.msra.mxu0 0
        %2136 = vmatprep.subr.bf16.mxu0 0
        %2137 = vmatpush1.bf16.xpose.msra.mxu0 0
        %2138 = vmatprep.subr.bf16.mxu0 0
        %2139 = vmatpush1.bf16.xpose.msra.mxu0 0
        %2140 = vmatprep.subr.bf16.mxu0 0
        %2141 = vmatpush1.bf16.xpose.msra.mxu0 0
        %2142 = vmatprep.subr.bf16.mxu0 0
        %2143 = vmatpush1.bf16.xpose.msra.mxu0 0
        %2144 = vmatprep.subr.bf16.mxu0 0
        %2145 = vmatpush1.bf16.xpose.msra.mxu0 0
        %2146 = vmatprep.subr.bf16.mxu0 0
        %2147 = vmatpush1.bf16.xpose.msra.mxu0 0
        %2148 = vmatprep.subr.bf16.mxu0 0
        %2149 = vmatpush1.bf16.xpose.msra.mxu0 0
        %2150 = vmatprep.mubr.bf16.mxu0 0
        %2151 = vmatmul.mubr.bf16.gmra.mrb[0].mxu0 %v2110
        %v2152 = vpop.f32.mrb[0].mxu0
        %v2153 = vadd.f32 %v2101, %v2152
        %v2154 = vpop.f32.mrb[0].mxu0
        %v2155 = vpop.f32.mrb[0].mxu0
        %v2156 = vadd.f32 %v2102, %v2155
        %v2157 = vpop.f32.mrb[0].mxu0
        %2158 = vdwg.mxu0
        %2159 = vrot.lane.b32.xlu0 %v774, 112
        %v2160 = vpop.permute.xlu0 %2159
        %2161 = vrot.lane.b32.xlu0 %v779, 112
        %v2162 = vpop.permute.xlu0 %2161
        %2163 = vrot.lane.b32.xlu0 %v780, 112
        %v2164 = vpop.permute.xlu0 %2163
        %v2166 = vsel %vm789, %v2160, 0
        %v2169 = vsel %vm789, %v2162, 0
        %v2172 = vsel %vm789, %v2164, 0
        %2174 = vmatprep.subr.bf16.mxu0 0
        %2175 = vmatpush1.bf16.xpose.msra.mxu0 %v2169
        %2176 = vmatprep.subr.bf16.mxu0 0
        %2177 = vmatpush1.bf16.xpose.msra.mxu0 %v2172
        %2178 = vmatprep.subr.bf16.mxu0 0
        %2179 = vmatpush1.bf16.xpose.msra.mxu0 0
        %2180 = vmatprep.subr.bf16.mxu0 0
        %2181 = vmatpush1.bf16.xpose.msra.mxu0 0
        %2182 = vmatprep.subr.bf16.mxu0 0
        %2183 = vmatpush1.bf16.xpose.msra.mxu0 0
        %2184 = vmatprep.subr.bf16.mxu0 0
        %2185 = vmatpush1.bf16.xpose.msra.mxu0 0
        %2186 = vmatprep.subr.bf16.mxu0 0
        %2187 = vmatpush1.bf16.xpose.msra.mxu0 0
        %2188 = vmatprep.subr.bf16.mxu0 0
        %2189 = vmatpush1.bf16.xpose.msra.mxu0 0
        %2190 = vmatprep.subr.bf16.mxu0 0
        %2191 = vmatpush1.bf16.xpose.msra.mxu0 0
        %2192 = vmatprep.subr.bf16.mxu0 0
        %2193 = vmatpush1.bf16.xpose.msra.mxu0 0
        %2194 = vmatprep.subr.bf16.mxu0 0
        %2195 = vmatpush1.bf16.xpose.msra.mxu0 0
        %2196 = vmatprep.subr.bf16.mxu0 0
        %2197 = vmatpush1.bf16.xpose.msra.mxu0 0
        %2198 = vmatprep.subr.bf16.mxu0 0
        %2199 = vmatpush1.bf16.xpose.msra.mxu0 0
        %2200 = vmatprep.subr.bf16.mxu0 0
        %2201 = vmatpush1.bf16.xpose.msra.mxu0 0
        %2202 = vmatprep.subr.bf16.mxu0 0
        %2203 = vmatpush1.bf16.xpose.msra.mxu0 0
        %2204 = vmatprep.subr.bf16.mxu0 0
        %2205 = vmatpush1.bf16.xpose.msra.mxu0 0
        %2206 = vmatprep.mubr.bf16.mxu0 0
        %2207 = vmatmul.mubr.bf16.gmra.mrb[0].mxu0 %v2166
        %v2208 = vpop.f32.mrb[0].mxu0
        %v2209 = vadd.f32 %v2101, %v2208
        %v2210 = vpop.f32.mrb[0].mxu0
        %v2211 = vpop.f32.mrb[0].mxu0
        %v2212 = vadd.f32 %v2102, %v2211
        %v2213 = vpop.f32.mrb[0].mxu0
        %2214 = vdwg.mxu0
        %2215 = vrot.lane.b32.xlu0 %v775, 112
        %v2216 = vpop.permute.xlu0 %2215
        %2217 = vrot.lane.b32.xlu0 %v781, 112
        %v2218 = vpop.permute.xlu0 %2217
        %2219 = vrot.lane.b32.xlu0 %v782, 112
        %v2220 = vpop.permute.xlu0 %2219
        %v2222 = vsel %vm789, %v2216, 0
        %v2225 = vsel %vm789, %v2218, 0
        %v2228 = vsel %vm789, %v2220, 0
        %2230 = vmatprep.subr.bf16.mxu0 0
        %2231 = vmatpush1.bf16.xpose.msra.mxu0 %v2225
        %2232 = vmatprep.subr.bf16.mxu0 0
        %2233 = vmatpush1.bf16.xpose.msra.mxu0 %v2228
        %2234 = vmatprep.subr.bf16.mxu0 0
        %2235 = vmatpush1.bf16.xpose.msra.mxu0 0
        %2236 = vmatprep.subr.bf16.mxu0 0
        %2237 = vmatpush1.bf16.xpose.msra.mxu0 0
        %2238 = vmatprep.subr.bf16.mxu0 0
        %2239 = vmatpush1.bf16.xpose.msra.mxu0 0
        %2240 = vmatprep.subr.bf16.mxu0 0
        %2241 = vmatpush1.bf16.xpose.msra.mxu0 0
        %2242 = vmatprep.subr.bf16.mxu0 0
        %2243 = vmatpush1.bf16.xpose.msra.mxu0 0
        %2244 = vmatprep.subr.bf16.mxu0 0
        %2245 = vmatpush1.bf16.xpose.msra.mxu0 0
        %2246 = vmatprep.subr.bf16.mxu0 0
        %2247 = vmatpush1.bf16.xpose.msra.mxu0 0
        %2248 = vmatprep.subr.bf16.mxu0 0
        %2249 = vmatpush1.bf16.xpose.msra.mxu0 0
        %2250 = vmatprep.subr.bf16.mxu0 0
        %2251 = vmatpush1.bf16.xpose.msra.mxu0 0
        %2252 = vmatprep.subr.bf16.mxu0 0
        %2253 = vmatpush1.bf16.xpose.msra.mxu0 0
        %2254 = vmatprep.subr.bf16.mxu0 0
        %2255 = vmatpush1.bf16.xpose.msra.mxu0 0
        %2256 = vmatprep.subr.bf16.mxu0 0
        %2257 = vmatpush1.bf16.xpose.msra.mxu0 0
        %2258 = vmatprep.subr.bf16.mxu0 0
        %2259 = vmatpush1.bf16.xpose.msra.mxu0 0
        %2260 = vmatprep.subr.bf16.mxu0 0
        %2261 = vmatpush1.bf16.xpose.msra.mxu0 0
        %2262 = vmatprep.mubr.bf16.mxu0 0
        %2263 = vmatmul.mubr.bf16.gmra.mrb[0].mxu0 %v2222
        %v2264 = vpop.f32.mrb[0].mxu0
        %v2265 = vadd.f32 %v2101, %v2264
        %v2266 = vpop.f32.mrb[0].mxu0
        %v2267 = vpop.f32.mrb[0].mxu0
        %v2268 = vadd.f32 %v2102, %v2267
        %v2269 = vpop.f32.mrb[0].mxu0
        %2270 = vdwg.mxu0
        %2271 = vrot.lane.b32.xlu0 %v776, 112
        %v2272 = vpop.permute.xlu0 %2271
        %2273 = vrot.lane.b32.xlu0 %v783, 112
        %v2274 = vpop.permute.xlu0 %2273
        %2275 = vrot.lane.b32.xlu0 %v784, 112
        %v2276 = vpop.permute.xlu0 %2275
        %v2278 = vsel %vm789, %v2272, 0
        %v2281 = vsel %vm789, %v2274, 0
        %v2284 = vsel %vm789, %v2276, 0
        %2286 = vmatprep.subr.bf16.mxu0 0
        %2287 = vmatpush1.bf16.xpose.msra.mxu0 %v2281
        %2288 = vmatprep.subr.bf16.mxu0 0
        %2289 = vmatpush1.bf16.xpose.msra.mxu0 %v2284
        %2290 = vmatprep.subr.bf16.mxu0 0
        %2291 = vmatpush1.bf16.xpose.msra.mxu0 0
        %2292 = vmatprep.subr.bf16.mxu0 0
        %2293 = vmatpush1.bf16.xpose.msra.mxu0 0
        %2294 = vmatprep.subr.bf16.mxu0 0
        %2295 = vmatpush1.bf16.xpose.msra.mxu0 0
        %2296 = vmatprep.subr.bf16.mxu0 0
        %2297 = vmatpush1.bf16.xpose.msra.mxu0 0
        %2298 = vmatprep.subr.bf16.mxu0 0
        %2299 = vmatpush1.bf16.xpose.msra.mxu0 0
        %2300 = vmatprep.subr.bf16.mxu0 0
        %2301 = vmatpush1.bf16.xpose.msra.mxu0 0
        %2302 = vmatprep.subr.bf16.mxu0 0
        %2303 = vmatpush1.bf16.xpose.msra.mxu0 0
        %2304 = vmatprep.subr.bf16.mxu0 0
        %2305 = vmatpush1.bf16.xpose.msra.mxu0 0
        %2306 = vmatprep.subr.bf16.mxu0 0
        %2307 = vmatpush1.bf16.xpose.msra.mxu0 0
        %2308 = vmatprep.subr.bf16.mxu0 0
        %2309 = vmatpush1.bf16.xpose.msra.mxu0 0
        %2310 = vmatprep.subr.bf16.mxu0 0
        %2311 = vmatpush1.bf16.xpose.msra.mxu0 0
        %2312 = vmatprep.subr.bf16.mxu0 0
        %2313 = vmatpush1.bf16.xpose.msra.mxu0 0
        %2314 = vmatprep.subr.bf16.mxu0 0
        %2315 = vmatpush1.bf16.xpose.msra.mxu0 0
        %2316 = vmatprep.subr.bf16.mxu0 0
        %2317 = vmatpush1.bf16.xpose.msra.mxu0 0
        %2318 = vmatprep.mubr.bf16.mxu0 0
        %2319 = vmatmul.mubr.bf16.gmra.mrb[0].mxu0 %v2278
        %v2320 = vpop.f32.mrb[0].mxu0
        %v2321 = vadd.f32 %v2101, %v2320
        %v2322 = vpop.f32.mrb[0].mxu0
        %v2323 = vpop.f32.mrb[0].mxu0
        %v2324 = vadd.f32 %v2102, %v2323
        %v2325 = vpop.f32.mrb[0].mxu0
        %2326 = vdwg.mxu0
        %v2327 = vadd.f32 %v2153, %v997
        %v2328 = vadd.f32 %v2156, %v997
        %v2329 = vadd.f32 %v2209, %v1001
        %v2330 = vadd.f32 %v2212, %v1001
        %v2331 = vadd.f32 %v2265, %v1005
        %v2332 = vadd.f32 %v2268, %v1005
        %v2333 = vadd.f32 %v2321, %v1009
        %v2334 = vadd.f32 %v2324, %v1009
        %v2335 = vsel %vm449, %v2327, -inf
        %2336 = vmax.xlane.f32.xlu0 %v2335
        %v2337 = vpop.xlane.xlu0 %2336
        %v2338 = vsel %vm449, %v2328, -inf
        %2339 = vmax.xlane.f32.xlu0 %v2338
        %v2340 = vpop.xlane.xlu0 %2339
        %v2341 = vsel %vm449, %v2329, -inf
        %2342 = vmax.xlane.f32.xlu0 %v2341
        %v2343 = vpop.xlane.xlu0 %2342
        %v2344 = vsel %vm449, %v2330, -inf
        %2345 = vmax.xlane.f32.xlu0 %v2344
        %v2346 = vpop.xlane.xlu0 %2345
        %v2347 = vsel %vm449, %v2331, -inf
        %2348 = vmax.xlane.f32.xlu0 %v2347
        %v2349 = vpop.xlane.xlu0 %2348
        %v2350 = vsel %vm449, %v2332, -inf
        %2351 = vmax.xlane.f32.xlu0 %v2350
        %v2352 = vpop.xlane.xlu0 %2351
        %v2353 = vsel %vm449, %v2333, -inf
        %2354 = vmax.xlane.f32.xlu0 %v2353
        %v2355 = vpop.xlane.xlu0 %2354
        %v2356 = vsel %vm449, %v2334, -inf
        %2357 = vmax.xlane.f32.xlu0 %v2356
        %v2358 = vpop.xlane.xlu0 %2357
        %v2359 = vsub.f32 %v2327, %v2337
        %v2360 = vsub.f32 %v2328, %v2340
        %v2361 = vsub.f32 %v2329, %v2343
        %v2362 = vsub.f32 %v2330, %v2346
        %v2363 = vsub.f32 %v2331, %v2349
        %v2364 = vsub.f32 %v2332, %v2352
        %v2365 = vsub.f32 %v2333, %v2355
        %v2366 = vsub.f32 %v2334, %v2358
        %v2367 = vmul.f32 %v2359, 1.442695
        %v2368 = vpow.pop %v2367
        %v2369 = vmul.f32 %v2360, 1.442695
        %v2370 = vpow.pop %v2369
        %v2371 = vmul.f32 %v2361, 1.442695
        %v2372 = vpow.pop %v2371
        %v2373 = vmul.f32 %v2362, 1.442695
        %v2374 = vpow.pop %v2373
        %v2375 = vmul.f32 %v2363, 1.442695
        %v2376 = vpow.pop %v2375
        %v2377 = vmul.f32 %v2364, 1.442695
        %v2378 = vpow.pop %v2377
        %v2379 = vmul.f32 %v2365, 1.442695
        %v2380 = vpow.pop %v2379
        %v2381 = vmul.f32 %v2366, 1.442695
        %v2382 = vpow.pop %v2381
        %v2383 = vsel %vm449, %v2368, 0.0
        %2384 = vadd.xlane.f32.xlu0 %v2383
        %v2385 = vpop.xlane.xlu0 %2384
        %v2386 = vsel %vm449, %v2370, 0.0
        %2387 = vadd.xlane.f32.xlu0 %v2386
        %v2388 = vpop.xlane.xlu0 %2387
        %v2389 = vsel %vm449, %v2372, 0.0
        %2390 = vadd.xlane.f32.xlu0 %v2389
        %v2391 = vpop.xlane.xlu0 %2390
        %v2392 = vsel %vm449, %v2374, 0.0
        %2393 = vadd.xlane.f32.xlu0 %v2392
        %v2394 = vpop.xlane.xlu0 %2393
        %v2395 = vsel %vm449, %v2376, 0.0
        %2396 = vadd.xlane.f32.xlu0 %v2395
        %v2397 = vpop.xlane.xlu0 %2396
        %v2398 = vsel %vm449, %v2378, 0.0
        %2399 = vadd.xlane.f32.xlu0 %v2398
        %v2400 = vpop.xlane.xlu0 %2399
        %v2401 = vsel %vm449, %v2380, 0.0
        %2402 = vadd.xlane.f32.xlu0 %v2401
        %v2403 = vpop.xlane.xlu0 %2402
        %v2404 = vsel %vm449, %v2382, 0.0
        %2405 = vadd.xlane.f32.xlu0 %v2404
        %v2406 = vpop.xlane.xlu0 %2405
        %v2407 = vpack.c.bf16 %v2370, %v2368
        %v2408 = vpack.c.bf16 %v2374, %v2372
        %v2409 = vpack.c.bf16 %v2378, %v2376
        %v2410 = vpack.c.bf16 %v2382, %v2380
        %2411 = vrot.lane.b32.xlu0 %v777, 80
        %v2412 = vpop.permute.xlu0 %2411
        %2413 = vrot.lane.b32.xlu0 %v778, 80
        %v2414 = vpop.permute.xlu0 %2413
        %v2418 = vsel %vm449, %v2407, 0
        %2420 = vmatprep.subr.bf16.mxu0 0
        %2421 = vmatpush1.bf16.msra.mxu0 %v2412
        %2422 = vmatprep.subr.bf16.mxu0 0
        %2423 = vmatpush1.bf16.msra.mxu0 %v2414
        %2424 = vmatprep.subr.bf16.mxu0 0
        %2425 = vmatpush1.bf16.msra.mxu0 0
        %2426 = vmatprep.subr.bf16.mxu0 0
        %2427 = vmatpush1.bf16.msra.mxu0 0
        %2428 = vmatprep.subr.bf16.mxu0 0
        %2429 = vmatpush1.bf16.msra.mxu0 0
        %2430 = vmatprep.subr.bf16.mxu0 0
        %2431 = vmatpush1.bf16.msra.mxu0 0
        %2432 = vmatprep.subr.bf16.mxu0 0
        %2433 = vmatpush1.bf16.msra.mxu0 0
        %2434 = vmatprep.subr.bf16.mxu0 0
        %2435 = vmatpush1.bf16.msra.mxu0 0
        %2436 = vmatprep.subr.bf16.mxu0 0
        %2437 = vmatpush1.bf16.msra.mxu0 0
        %2438 = vmatprep.subr.bf16.mxu0 0
        %2439 = vmatpush1.bf16.msra.mxu0 0
        %2440 = vmatprep.subr.bf16.mxu0 0
        %2441 = vmatpush1.bf16.msra.mxu0 0
        %2442 = vmatprep.subr.bf16.mxu0 0
        %2443 = vmatpush1.bf16.msra.mxu0 0
        %2444 = vmatprep.subr.bf16.mxu0 0
        %2445 = vmatpush1.bf16.msra.mxu0 0
        %2446 = vmatprep.subr.bf16.mxu0 0
        %2447 = vmatpush1.bf16.msra.mxu0 0
        %2448 = vmatprep.subr.bf16.mxu0 0
        %2449 = vmatpush1.bf16.msra.mxu0 0
        %2450 = vmatprep.subr.bf16.mxu0 0
        %2451 = vmatpush1.bf16.msra.mxu0 0
        %2452 = vmatprep.mubr.bf16.mxu0 0
        %2453 = vmatmul.mubr.bf16.gmra.mrb[0].mxu0 %v2418
        %v2454 = vpop.f32.mrb[0].mxu0
        %v2455 = vadd.f32 0.0, %v2454
        %v2456 = vpop.f32.mrb[0].mxu0
        %v2457 = vpop.f32.mrb[0].mxu0
        %v2458 = vadd.f32 0.0, %v2457
        %v2459 = vpop.f32.mrb[0].mxu0
        %2460 = vdwg.mxu0
        %2461 = vrot.lane.b32.xlu0 %v779, 80
        %v2462 = vpop.permute.xlu0 %2461
        %2463 = vrot.lane.b32.xlu0 %v780, 80
        %v2464 = vpop.permute.xlu0 %2463
        %v2468 = vsel %vm449, %v2408, 0
        %2470 = vmatprep.subr.bf16.mxu0 0
        %2471 = vmatpush1.bf16.msra.mxu0 %v2462
        %2472 = vmatprep.subr.bf16.mxu0 0
        %2473 = vmatpush1.bf16.msra.mxu0 %v2464
        %2474 = vmatprep.subr.bf16.mxu0 0
        %2475 = vmatpush1.bf16.msra.mxu0 0
        %2476 = vmatprep.subr.bf16.mxu0 0
        %2477 = vmatpush1.bf16.msra.mxu0 0
        %2478 = vmatprep.subr.bf16.mxu0 0
        %2479 = vmatpush1.bf16.msra.mxu0 0
        %2480 = vmatprep.subr.bf16.mxu0 0
        %2481 = vmatpush1.bf16.msra.mxu0 0
        %2482 = vmatprep.subr.bf16.mxu0 0
        %2483 = vmatpush1.bf16.msra.mxu0 0
        %2484 = vmatprep.subr.bf16.mxu0 0
        %2485 = vmatpush1.bf16.msra.mxu0 0
        %2486 = vmatprep.subr.bf16.mxu0 0
        %2487 = vmatpush1.bf16.msra.mxu0 0
        %2488 = vmatprep.subr.bf16.mxu0 0
        %2489 = vmatpush1.bf16.msra.mxu0 0
        %2490 = vmatprep.subr.bf16.mxu0 0
        %2491 = vmatpush1.bf16.msra.mxu0 0
        %2492 = vmatprep.subr.bf16.mxu0 0
        %2493 = vmatpush1.bf16.msra.mxu0 0
        %2494 = vmatprep.subr.bf16.mxu0 0
        %2495 = vmatpush1.bf16.msra.mxu0 0
        %2496 = vmatprep.subr.bf16.mxu0 0
        %2497 = vmatpush1.bf16.msra.mxu0 0
        %2498 = vmatprep.subr.bf16.mxu0 0
        %2499 = vmatpush1.bf16.msra.mxu0 0
        %2500 = vmatprep.subr.bf16.mxu0 0
        %2501 = vmatpush1.bf16.msra.mxu0 0
        %2502 = vmatprep.mubr.bf16.mxu0 0
        %2503 = vmatmul.mubr.bf16.gmra.mrb[0].mxu0 %v2468
        %v2504 = vpop.f32.mrb[0].mxu0
        %v2505 = vadd.f32 0.0, %v2504
        %v2506 = vpop.f32.mrb[0].mxu0
        %v2507 = vpop.f32.mrb[0].mxu0
        %v2508 = vadd.f32 0.0, %v2507
        %v2509 = vpop.f32.mrb[0].mxu0
        %2510 = vdwg.mxu0
        %2511 = vrot.lane.b32.xlu0 %v781, 80
        %v2512 = vpop.permute.xlu0 %2511
        %2513 = vrot.lane.b32.xlu0 %v782, 80
        %v2514 = vpop.permute.xlu0 %2513
        %v2518 = vsel %vm449, %v2409, 0
        %2520 = vmatprep.subr.bf16.mxu0 0
        %2521 = vmatpush1.bf16.msra.mxu0 %v2512
        %2522 = vmatprep.subr.bf16.mxu0 0
        %2523 = vmatpush1.bf16.msra.mxu0 %v2514
        %2524 = vmatprep.subr.bf16.mxu0 0
        %2525 = vmatpush1.bf16.msra.mxu0 0
        %2526 = vmatprep.subr.bf16.mxu0 0
        %2527 = vmatpush1.bf16.msra.mxu0 0
        %2528 = vmatprep.subr.bf16.mxu0 0
        %2529 = vmatpush1.bf16.msra.mxu0 0
        %2530 = vmatprep.subr.bf16.mxu0 0
        %2531 = vmatpush1.bf16.msra.mxu0 0
        %2532 = vmatprep.subr.bf16.mxu0 0
        %2533 = vmatpush1.bf16.msra.mxu0 0
        %2534 = vmatprep.subr.bf16.mxu0 0
        %2535 = vmatpush1.bf16.msra.mxu0 0
        %2536 = vmatprep.subr.bf16.mxu0 0
        %2537 = vmatpush1.bf16.msra.mxu0 0
        %2538 = vmatprep.subr.bf16.mxu0 0
        %2539 = vmatpush1.bf16.msra.mxu0 0
        %2540 = vmatprep.subr.bf16.mxu0 0
        %2541 = vmatpush1.bf16.msra.mxu0 0
        %2542 = vmatprep.subr.bf16.mxu0 0
        %2543 = vmatpush1.bf16.msra.mxu0 0
        %2544 = vmatprep.subr.bf16.mxu0 0
        %2545 = vmatpush1.bf16.msra.mxu0 0
        %2546 = vmatprep.subr.bf16.mxu0 0
        %2547 = vmatpush1.bf16.msra.mxu0 0
        %2548 = vmatprep.subr.bf16.mxu0 0
        %2549 = vmatpush1.bf16.msra.mxu0 0
        %2550 = vmatprep.subr.bf16.mxu0 0
        %2551 = vmatpush1.bf16.msra.mxu0 0
        %2552 = vmatprep.mubr.bf16.mxu0 0
        %2553 = vmatmul.mubr.bf16.gmra.mrb[0].mxu0 %v2518
        %v2554 = vpop.f32.mrb[0].mxu0
        %v2555 = vadd.f32 0.0, %v2554
        %v2556 = vpop.f32.mrb[0].mxu0
        %v2557 = vpop.f32.mrb[0].mxu0
        %v2558 = vadd.f32 0.0, %v2557
        %v2559 = vpop.f32.mrb[0].mxu0
        %2560 = vdwg.mxu0
        %2561 = vrot.lane.b32.xlu0 %v783, 80
        %v2562 = vpop.permute.xlu0 %2561
        %2563 = vrot.lane.b32.xlu0 %v784, 80
        %v2564 = vpop.permute.xlu0 %2563
        %v2568 = vsel %vm449, %v2410, 0
        %2570 = vmatprep.subr.bf16.mxu0 0
        %2571 = vmatpush1.bf16.msra.mxu0 %v2562
        %2572 = vmatprep.subr.bf16.mxu0 0
        %2573 = vmatpush1.bf16.msra.mxu0 %v2564
        %2574 = vmatprep.subr.bf16.mxu0 0
        %2575 = vmatpush1.bf16.msra.mxu0 0
        %2576 = vmatprep.subr.bf16.mxu0 0
        %2577 = vmatpush1.bf16.msra.mxu0 0
        %2578 = vmatprep.subr.bf16.mxu0 0
        %2579 = vmatpush1.bf16.msra.mxu0 0
        %2580 = vmatprep.subr.bf16.mxu0 0
        %2581 = vmatpush1.bf16.msra.mxu0 0
        %2582 = vmatprep.subr.bf16.mxu0 0
        %2583 = vmatpush1.bf16.msra.mxu0 0
        %2584 = vmatprep.subr.bf16.mxu0 0
        %2585 = vmatpush1.bf16.msra.mxu0 0
        %2586 = vmatprep.subr.bf16.mxu0 0
        %2587 = vmatpush1.bf16.msra.mxu0 0
        %2588 = vmatprep.subr.bf16.mxu0 0
        %2589 = vmatpush1.bf16.msra.mxu0 0
        %2590 = vmatprep.subr.bf16.mxu0 0
        %2591 = vmatpush1.bf16.msra.mxu0 0
        %2592 = vmatprep.subr.bf16.mxu0 0
        %2593 = vmatpush1.bf16.msra.mxu0 0
        %2594 = vmatprep.subr.bf16.mxu0 0
        %2595 = vmatpush1.bf16.msra.mxu0 0
        %2596 = vmatprep.subr.bf16.mxu0 0
        %2597 = vmatpush1.bf16.msra.mxu0 0
        %2598 = vmatprep.subr.bf16.mxu0 0
        %2599 = vmatpush1.bf16.msra.mxu0 0
        %2600 = vmatprep.subr.bf16.mxu0 0
        %2601 = vmatpush1.bf16.msra.mxu0 0
        %2602 = vmatprep.mubr.bf16.mxu0 0
        %2603 = vmatmul.mubr.bf16.gmra.mrb[0].mxu0 %v2568
        %v2604 = vpop.f32.mrb[0].mxu0
        %v2605 = vadd.f32 0.0, %v2604
        %v2606 = vpop.f32.mrb[0].mxu0
        %v2607 = vpop.f32.mrb[0].mxu0
        %v2608 = vadd.f32 0.0, %v2607
        %v2609 = vpop.f32.mrb[0].mxu0
        %2610 = vdwg.mxu0
        %v2611 = vrcp.pop %v2385
        %v2612 = vrcp.pop %v2388
        %v2613 = vrcp.pop %v2391
        %v2614 = vrcp.pop %v2394
        %v2615 = vrcp.pop %v2397
        %v2616 = vrcp.pop %v2400
        %v2617 = vrcp.pop %v2403
        %v2618 = vrcp.pop %v2406
        %v2619 = vmul.f32 %v2455, %v2611
        %v2620 = vmul.f32 %v2458, %v2612
        %v2621 = vmul.f32 %v2505, %v2613
        %v2622 = vmul.f32 %v2508, %v2614
        %v2623 = vmul.f32 %v2555, %v2615
        %v2624 = vmul.f32 %v2558, %v2616
        %v2625 = vmul.f32 %v2605, %v2617
        %v2626 = vmul.f32 %v2608, %v2618
        %2627 = vrot.lane.b32.xlu0 %v754, 80
        %v2628 = vpop.permute.xlu0 %2627
        %2629 = vrot.lane.b32.xlu0 %v756, 80
        %v2630 = vpop.permute.xlu0 %2629
        %2631 = vrot.lane.b32.xlu0 %v758, 80
        %v2632 = vpop.permute.xlu0 %2631
        %2633 = vrot.lane.b32.xlu0 %v760, 80
        %v2634 = vpop.permute.xlu0 %2633
        %2635 = vrot.lane.b32.xlu0 %v762, 80
        %v2636 = vpop.permute.xlu0 %2635
        %2637 = vrot.lane.b32.xlu0 %v764, 80
        %v2638 = vpop.permute.xlu0 %2637
        %2639 = vrot.lane.b32.xlu0 %v766, 80
        %v2640 = vpop.permute.xlu0 %2639
        %2641 = vrot.lane.b32.xlu0 %v768, 80
        %v2642 = vpop.permute.xlu0 %2641
        %v2651 = vmul.f32 %v2619, %v2628
        %v2652 = vmul.f32 %v2620, %v2630
        %v2653 = vmul.f32 %v2621, %v2632
        %v2654 = vmul.f32 %v2622, %v2634
        %v2655 = vmul.f32 %v2623, %v2636
        %v2656 = vmul.f32 %v2624, %v2638
        %v2657 = vmul.f32 %v2625, %v2640
        %v2658 = vmul.f32 %v2626, %v2642
        %v2659 = vpack.c.bf16 %v2652, %v2651
        %v2660 = vpack.c.bf16 %v2654, %v2653
        %v2661 = vpack.c.bf16 %v2656, %v2655
        %v2662 = vpack.c.bf16 %v2658, %v2657
        %v2663 = vld [vmem:[%s7 + $0x8] sm:$0xf]
        %v2665 = vsel %vm789, %v2659, 0
        %v2668 = vsel %vm789, %v2660, 0
        %v2671 = vsel %vm789, %v2661, 0
        %v2674 = vsel %vm789, %v2662, 0
        %v2677 = vsel %vm1949, %v2663, 0
        %2679 = vmatprep.subr.bf16.mxu0 0
        %2680 = vmatpush1.bf16.msra.mxu0 %v2677
        %2681 = vmatprep.subr.bf16.mxu0 0
        %2682 = vmatpush1.bf16.msra.mxu0 0
        %2683 = vmatprep.subr.bf16.mxu0 0
        %2684 = vmatpush1.bf16.msra.mxu0 0
        %2685 = vmatprep.subr.bf16.mxu0 0
        %2686 = vmatpush1.bf16.msra.mxu0 0
        %2687 = vmatprep.subr.bf16.mxu0 0
        %2688 = vmatpush1.bf16.msra.mxu0 0
        %2689 = vmatprep.subr.bf16.mxu0 0
        %2690 = vmatpush1.bf16.msra.mxu0 0
        %2691 = vmatprep.subr.bf16.mxu0 0
        %2692 = vmatpush1.bf16.msra.mxu0 0
        %2693 = vmatprep.subr.bf16.mxu0 0
        %2694 = vmatpush1.bf16.msra.mxu0 0
        %2695 = vmatprep.subr.bf16.mxu0 0
        %2696 = vmatpush1.bf16.msra.mxu0 0
        %2697 = vmatprep.subr.bf16.mxu0 0
        %2698 = vmatpush1.bf16.msra.mxu0 0
        %2699 = vmatprep.subr.bf16.mxu0 0
        %2700 = vmatpush1.bf16.msra.mxu0 0
        %2701 = vmatprep.subr.bf16.mxu0 0
        %2702 = vmatpush1.bf16.msra.mxu0 0
        %2703 = vmatprep.subr.bf16.mxu0 0
        %2704 = vmatpush1.bf16.msra.mxu0 0
        %2705 = vmatprep.subr.bf16.mxu0 0
        %2706 = vmatpush1.bf16.msra.mxu0 0
        %2707 = vmatprep.subr.bf16.mxu0 0
        %2708 = vmatpush1.bf16.msra.mxu0 0
        %2709 = vmatprep.subr.bf16.mxu0 0
        %2710 = vmatpush1.bf16.msra.mxu0 0
        %2711 = vmatprep.mubr.bf16.mxu0 0
        %2712 = vmatmul.mubr.bf16.gmra.mrb[0].mxu0 %v2665
        %v2713 = vpop.f32.mrb[0].mxu0
        %v2714 = vadd.f32 0.0, %v2713
        %v2715 = vpop.f32.mrb[0].mxu0
        %v2716 = vpop.f32.mrb[0].mxu0
        %v2717 = vadd.f32 0.0, %v2716
        %v2718 = vpop.f32.mrb[0].mxu0
        %2719 = vmatprep.mubr.bf16.mxu0 0
        %2720 = vmatmul.mubr.bf16.gmra.mrb[0].mxu0 %v2668
        %v2721 = vpop.f32.mrb[0].mxu0
        %v2722 = vadd.f32 0.0, %v2721
        %v2723 = vpop.f32.mrb[0].mxu0
        %v2724 = vpop.f32.mrb[0].mxu0
        %v2725 = vadd.f32 0.0, %v2724
        %v2726 = vpop.f32.mrb[0].mxu0
        %2727 = vmatprep.mubr.bf16.mxu0 0
        %2728 = vmatmul.mubr.bf16.gmra.mrb[0].mxu0 %v2671
        %v2729 = vpop.f32.mrb[0].mxu0
        %v2730 = vadd.f32 0.0, %v2729
        %v2731 = vpop.f32.mrb[0].mxu0
        %v2732 = vpop.f32.mrb[0].mxu0
        %v2733 = vadd.f32 0.0, %v2732
        %v2734 = vpop.f32.mrb[0].mxu0
        %2735 = vmatprep.mubr.bf16.mxu0 0
        %2736 = vmatmul.mubr.bf16.gmra.mrb[0].mxu0 %v2674
        %v2737 = vpop.f32.mrb[0].mxu0
        %v2738 = vadd.f32 0.0, %v2737
        %v2739 = vpop.f32.mrb[0].mxu0
        %v2740 = vpop.f32.mrb[0].mxu0
        %v2741 = vadd.f32 0.0, %v2740
        %v2742 = vpop.f32.mrb[0].mxu0
        %2743 = vdwg.mxu0
        %v2744 = vadd.f32 %v2068, %v2714
        %v2745 = vadd.f32 %v2071, %v2717
        %v2746 = vadd.f32 %v2076, %v2722
        %v2747 = vadd.f32 %v2079, %v2725
        %v2748 = vadd.f32 %v2084, %v2730
        %v2749 = vadd.f32 %v2087, %v2733
        %v2750 = vadd.f32 %v2092, %v2738
        %v2751 = vadd.f32 %v2095, %v2741
        %s2752 = scalar_lea.vmem %s387, 24
        %v2753 = vld [vmem:[%s2752] sm:$0xf]
        %v2754 = vld [vmem:[%s2752 + $0x4] sm:$0xf]
        %v2755 = vunpack.c.l.bf16 %v2753
        %v2756 = vunpack.c.l.bf16 %v2754
        %2757 = vrot.lane.b32.xlu0 %v773, 104
        %v2758 = vpop.permute.xlu0 %2757
        %2759 = vrot.lane.b32.xlu0 %v777, 104
        %v2760 = vpop.permute.xlu0 %2759
        %2761 = vrot.lane.b32.xlu0 %v778, 104
        %v2762 = vpop.permute.xlu0 %2761
        %v2764 = vsel %vm789, %v2758, 0
        %v2767 = vsel %vm789, %v2760, 0
        %v2770 = vsel %vm789, %v2762, 0
        %2772 = vmatprep.subr.bf16.mxu0 0
        %2773 = vmatpush1.bf16.xpose.msra.mxu0 %v2767
        %2774 = vmatprep.subr.bf16.mxu0 0
        %2775 = vmatpush1.bf16.xpose.msra.mxu0 %v2770
        %2776 = vmatprep.subr.bf16.mxu0 0
        %2777 = vmatpush1.bf16.xpose.msra.mxu0 0
        %2778 = vmatprep.subr.bf16.mxu0 0
        %2779 = vmatpush1.bf16.xpose.msra.mxu0 0
        %2780 = vmatprep.subr.bf16.mxu0 0
        %2781 = vmatpush1.bf16.xpose.msra.mxu0 0
        %2782 = vmatprep.subr.bf16.mxu0 0
        %2783 = vmatpush1.bf16.xpose.msra.mxu0 0
        %2784 = vmatprep.subr.bf16.mxu0 0
        %2785 = vmatpush1.bf16.xpose.msra.mxu0 0
        %2786 = vmatprep.subr.bf16.mxu0 0
        %2787 = vmatpush1.bf16.xpose.msra.mxu0 0
        %2788 = vmatprep.subr.bf16.mxu0 0
        %2789 = vmatpush1.bf16.xpose.msra.mxu0 0
        %2790 = vmatprep.subr.bf16.mxu0 0
        %2791 = vmatpush1.bf16.xpose.msra.mxu0 0
        %2792 = vmatprep.subr.bf16.mxu0 0
        %2793 = vmatpush1.bf16.xpose.msra.mxu0 0
        %2794 = vmatprep.subr.bf16.mxu0 0
        %2795 = vmatpush1.bf16.xpose.msra.mxu0 0
        %2796 = vmatprep.subr.bf16.mxu0 0
        %2797 = vmatpush1.bf16.xpose.msra.mxu0 0
        %2798 = vmatprep.subr.bf16.mxu0 0
        %2799 = vmatpush1.bf16.xpose.msra.mxu0 0
        %2800 = vmatprep.subr.bf16.mxu0 0
        %2801 = vmatpush1.bf16.xpose.msra.mxu0 0
        %2802 = vmatprep.subr.bf16.mxu0 0
        %2803 = vmatpush1.bf16.xpose.msra.mxu0 0
        %2804 = vmatprep.mubr.bf16.mxu0 0
        %2805 = vmatmul.mubr.bf16.gmra.mrb[0].mxu0 %v2764
        %v2806 = vpop.f32.mrb[0].mxu0
        %v2807 = vadd.f32 %v2755, %v2806
        %v2808 = vpop.f32.mrb[0].mxu0
        %v2809 = vpop.f32.mrb[0].mxu0
        %v2810 = vadd.f32 %v2756, %v2809
        %v2811 = vpop.f32.mrb[0].mxu0
        %2812 = vdwg.mxu0
        %2813 = vrot.lane.b32.xlu0 %v774, 104
        %v2814 = vpop.permute.xlu0 %2813
        %2815 = vrot.lane.b32.xlu0 %v779, 104
        %v2816 = vpop.permute.xlu0 %2815
        %2817 = vrot.lane.b32.xlu0 %v780, 104
        %v2818 = vpop.permute.xlu0 %2817
        %v2820 = vsel %vm789, %v2814, 0
        %v2823 = vsel %vm789, %v2816, 0
        %v2826 = vsel %vm789, %v2818, 0
        %2828 = vmatprep.subr.bf16.mxu0 0
        %2829 = vmatpush1.bf16.xpose.msra.mxu0 %v2823
        %2830 = vmatprep.subr.bf16.mxu0 0
        %2831 = vmatpush1.bf16.xpose.msra.mxu0 %v2826
        %2832 = vmatprep.subr.bf16.mxu0 0
        %2833 = vmatpush1.bf16.xpose.msra.mxu0 0
        %2834 = vmatprep.subr.bf16.mxu0 0
        %2835 = vmatpush1.bf16.xpose.msra.mxu0 0
        %2836 = vmatprep.subr.bf16.mxu0 0
        %2837 = vmatpush1.bf16.xpose.msra.mxu0 0
        %2838 = vmatprep.subr.bf16.mxu0 0
        %2839 = vmatpush1.bf16.xpose.msra.mxu0 0
        %2840 = vmatprep.subr.bf16.mxu0 0
        %2841 = vmatpush1.bf16.xpose.msra.mxu0 0
        %2842 = vmatprep.subr.bf16.mxu0 0
        %2843 = vmatpush1.bf16.xpose.msra.mxu0 0
        %2844 = vmatprep.subr.bf16.mxu0 0
        %2845 = vmatpush1.bf16.xpose.msra.mxu0 0
        %2846 = vmatprep.subr.bf16.mxu0 0
        %2847 = vmatpush1.bf16.xpose.msra.mxu0 0
        %2848 = vmatprep.subr.bf16.mxu0 0
        %2849 = vmatpush1.bf16.xpose.msra.mxu0 0
        %2850 = vmatprep.subr.bf16.mxu0 0
        %2851 = vmatpush1.bf16.xpose.msra.mxu0 0
        %2852 = vmatprep.subr.bf16.mxu0 0
        %2853 = vmatpush1.bf16.xpose.msra.mxu0 0
        %2854 = vmatprep.subr.bf16.mxu0 0
        %2855 = vmatpush1.bf16.xpose.msra.mxu0 0
        %2856 = vmatprep.subr.bf16.mxu0 0
        %2857 = vmatpush1.bf16.xpose.msra.mxu0 0
        %2858 = vmatprep.subr.bf16.mxu0 0
        %2859 = vmatpush1.bf16.xpose.msra.mxu0 0
        %2860 = vmatprep.mubr.bf16.mxu0 0
        %2861 = vmatmul.mubr.bf16.gmra.mrb[0].mxu0 %v2820
        %v2862 = vpop.f32.mrb[0].mxu0
        %v2863 = vadd.f32 %v2755, %v2862
        %v2864 = vpop.f32.mrb[0].mxu0
        %v2865 = vpop.f32.mrb[0].mxu0
        %v2866 = vadd.f32 %v2756, %v2865
        %v2867 = vpop.f32.mrb[0].mxu0
        %2868 = vdwg.mxu0
        %2869 = vrot.lane.b32.xlu0 %v775, 104
        %v2870 = vpop.permute.xlu0 %2869
        %2871 = vrot.lane.b32.xlu0 %v781, 104
        %v2872 = vpop.permute.xlu0 %2871
        %2873 = vrot.lane.b32.xlu0 %v782, 104
        %v2874 = vpop.permute.xlu0 %2873
        %v2876 = vsel %vm789, %v2870, 0
        %v2879 = vsel %vm789, %v2872, 0
        %v2882 = vsel %vm789, %v2874, 0
        %2884 = vmatprep.subr.bf16.mxu0 0
        %2885 = vmatpush1.bf16.xpose.msra.mxu0 %v2879
        %2886 = vmatprep.subr.bf16.mxu0 0
        %2887 = vmatpush1.bf16.xpose.msra.mxu0 %v2882
        %2888 = vmatprep.subr.bf16.mxu0 0
        %2889 = vmatpush1.bf16.xpose.msra.mxu0 0
        %2890 = vmatprep.subr.bf16.mxu0 0
        %2891 = vmatpush1.bf16.xpose.msra.mxu0 0
        %2892 = vmatprep.subr.bf16.mxu0 0
        %2893 = vmatpush1.bf16.xpose.msra.mxu0 0
        %2894 = vmatprep.subr.bf16.mxu0 0
        %2895 = vmatpush1.bf16.xpose.msra.mxu0 0
        %2896 = vmatprep.subr.bf16.mxu0 0
        %2897 = vmatpush1.bf16.xpose.msra.mxu0 0
        %2898 = vmatprep.subr.bf16.mxu0 0
        %2899 = vmatpush1.bf16.xpose.msra.mxu0 0
        %2900 = vmatprep.subr.bf16.mxu0 0
        %2901 = vmatpush1.bf16.xpose.msra.mxu0 0
        %2902 = vmatprep.subr.bf16.mxu0 0
        %2903 = vmatpush1.bf16.xpose.msra.mxu0 0
        %2904 = vmatprep.subr.bf16.mxu0 0
        %2905 = vmatpush1.bf16.xpose.msra.mxu0 0
        %2906 = vmatprep.subr.bf16.mxu0 0
        %2907 = vmatpush1.bf16.xpose.msra.mxu0 0
        %2908 = vmatprep.subr.bf16.mxu0 0
        %2909 = vmatpush1.bf16.xpose.msra.mxu0 0
        %2910 = vmatprep.subr.bf16.mxu0 0
        %2911 = vmatpush1.bf16.xpose.msra.mxu0 0
        %2912 = vmatprep.subr.bf16.mxu0 0
        %2913 = vmatpush1.bf16.xpose.msra.mxu0 0
        %2914 = vmatprep.subr.bf16.mxu0 0
        %2915 = vmatpush1.bf16.xpose.msra.mxu0 0
        %2916 = vmatprep.mubr.bf16.mxu0 0
        %2917 = vmatmul.mubr.bf16.gmra.mrb[0].mxu0 %v2876
        %v2918 = vpop.f32.mrb[0].mxu0
        %v2919 = vadd.f32 %v2755, %v2918
        %v2920 = vpop.f32.mrb[0].mxu0
        %v2921 = vpop.f32.mrb[0].mxu0
        %v2922 = vadd.f32 %v2756, %v2921
        %v2923 = vpop.f32.mrb[0].mxu0
        %2924 = vdwg.mxu0
        %2925 = vrot.lane.b32.xlu0 %v776, 104
        %v2926 = vpop.permute.xlu0 %2925
        %2927 = vrot.lane.b32.xlu0 %v783, 104
        %v2928 = vpop.permute.xlu0 %2927
        %2929 = vrot.lane.b32.xlu0 %v784, 104
        %v2930 = vpop.permute.xlu0 %2929
        %v2932 = vsel %vm789, %v2926, 0
        %v2935 = vsel %vm789, %v2928, 0
        %v2938 = vsel %vm789, %v2930, 0
        %2940 = vmatprep.subr.bf16.mxu0 0
        %2941 = vmatpush1.bf16.xpose.msra.mxu0 %v2935
        %2942 = vmatprep.subr.bf16.mxu0 0
        %2943 = vmatpush1.bf16.xpose.msra.mxu0 %v2938
        %2944 = vmatprep.subr.bf16.mxu0 0
        %2945 = vmatpush1.bf16.xpose.msra.mxu0 0
        %2946 = vmatprep.subr.bf16.mxu0 0
        %2947 = vmatpush1.bf16.xpose.msra.mxu0 0
        %2948 = vmatprep.subr.bf16.mxu0 0
        %2949 = vmatpush1.bf16.xpose.msra.mxu0 0
        %2950 = vmatprep.subr.bf16.mxu0 0
        %2951 = vmatpush1.bf16.xpose.msra.mxu0 0
        %2952 = vmatprep.subr.bf16.mxu0 0
        %2953 = vmatpush1.bf16.xpose.msra.mxu0 0
        %2954 = vmatprep.subr.bf16.mxu0 0
        %2955 = vmatpush1.bf16.xpose.msra.mxu0 0
        %2956 = vmatprep.subr.bf16.mxu0 0
        %2957 = vmatpush1.bf16.xpose.msra.mxu0 0
        %2958 = vmatprep.subr.bf16.mxu0 0
        %2959 = vmatpush1.bf16.xpose.msra.mxu0 0
        %2960 = vmatprep.subr.bf16.mxu0 0
        %2961 = vmatpush1.bf16.xpose.msra.mxu0 0
        %2962 = vmatprep.subr.bf16.mxu0 0
        %2963 = vmatpush1.bf16.xpose.msra.mxu0 0
        %2964 = vmatprep.subr.bf16.mxu0 0
        %2965 = vmatpush1.bf16.xpose.msra.mxu0 0
        %2966 = vmatprep.subr.bf16.mxu0 0
        %2967 = vmatpush1.bf16.xpose.msra.mxu0 0
        %2968 = vmatprep.subr.bf16.mxu0 0
        %2969 = vmatpush1.bf16.xpose.msra.mxu0 0
        %2970 = vmatprep.subr.bf16.mxu0 0
        %2971 = vmatpush1.bf16.xpose.msra.mxu0 0
        %2972 = vmatprep.mubr.bf16.mxu0 0
        %2973 = vmatmul.mubr.bf16.gmra.mrb[0].mxu0 %v2932
        %v2974 = vpop.f32.mrb[0].mxu0
        %v2975 = vadd.f32 %v2755, %v2974
        %v2976 = vpop.f32.mrb[0].mxu0
        %v2977 = vpop.f32.mrb[0].mxu0
        %v2978 = vadd.f32 %v2756, %v2977
        %v2979 = vpop.f32.mrb[0].mxu0
        %2980 = vdwg.mxu0
        %v2981 = vadd.f32 %v2807, %v997
        %v2982 = vadd.f32 %v2810, %v997
        %v2983 = vadd.f32 %v2863, %v1001
        %v2984 = vadd.f32 %v2866, %v1001
        %v2985 = vadd.f32 %v2919, %v1005
        %v2986 = vadd.f32 %v2922, %v1005
        %v2987 = vadd.f32 %v2975, %v1009
        %v2988 = vadd.f32 %v2978, %v1009
        %v2989 = vsel %vm449, %v2981, -inf
        %2990 = vmax.xlane.f32.xlu0 %v2989
        %v2991 = vpop.xlane.xlu0 %2990
        %v2992 = vsel %vm449, %v2982, -inf
        %2993 = vmax.xlane.f32.xlu0 %v2992
        %v2994 = vpop.xlane.xlu0 %2993
        %v2995 = vsel %vm449, %v2983, -inf
        %2996 = vmax.xlane.f32.xlu0 %v2995
        %v2997 = vpop.xlane.xlu0 %2996
        %v2998 = vsel %vm449, %v2984, -inf
        %2999 = vmax.xlane.f32.xlu0 %v2998
        %v3000 = vpop.xlane.xlu0 %2999
        %v3001 = vsel %vm449, %v2985, -inf
        %3002 = vmax.xlane.f32.xlu0 %v3001
        %v3003 = vpop.xlane.xlu0 %3002
        %v3004 = vsel %vm449, %v2986, -inf
        %3005 = vmax.xlane.f32.xlu0 %v3004
        %v3006 = vpop.xlane.xlu0 %3005
        %v3007 = vsel %vm449, %v2987, -inf
        %3008 = vmax.xlane.f32.xlu0 %v3007
        %v3009 = vpop.xlane.xlu0 %3008
        %v3010 = vsel %vm449, %v2988, -inf
        %3011 = vmax.xlane.f32.xlu0 %v3010
        %v3012 = vpop.xlane.xlu0 %3011
        %v3013 = vsub.f32 %v2981, %v2991
        %v3014 = vsub.f32 %v2982, %v2994
        %v3015 = vsub.f32 %v2983, %v2997
        %v3016 = vsub.f32 %v2984, %v3000
        %v3017 = vsub.f32 %v2985, %v3003
        %v3018 = vsub.f32 %v2986, %v3006
        %v3019 = vsub.f32 %v2987, %v3009
        %v3020 = vsub.f32 %v2988, %v3012
        %v3021 = vmul.f32 %v3013, 1.442695
        %v3022 = vpow.pop %v3021
        %v3023 = vmul.f32 %v3014, 1.442695
        %v3024 = vpow.pop %v3023
        %v3025 = vmul.f32 %v3015, 1.442695
        %v3026 = vpow.pop %v3025
        %v3027 = vmul.f32 %v3016, 1.442695
        %v3028 = vpow.pop %v3027
        %v3029 = vmul.f32 %v3017, 1.442695
        %v3030 = vpow.pop %v3029
        %v3031 = vmul.f32 %v3018, 1.442695
        %v3032 = vpow.pop %v3031
        %v3033 = vmul.f32 %v3019, 1.442695
        %v3034 = vpow.pop %v3033
        %v3035 = vmul.f32 %v3020, 1.442695
        %v3036 = vpow.pop %v3035
        %v3037 = vsel %vm449, %v3022, 0.0
        %3038 = vadd.xlane.f32.xlu0 %v3037
        %v3039 = vpop.xlane.xlu0 %3038
        %v3040 = vsel %vm449, %v3024, 0.0
        %3041 = vadd.xlane.f32.xlu0 %v3040
        %v3042 = vpop.xlane.xlu0 %3041
        %v3043 = vsel %vm449, %v3026, 0.0
        %3044 = vadd.xlane.f32.xlu0 %v3043
        %v3045 = vpop.xlane.xlu0 %3044
        %v3046 = vsel %vm449, %v3028, 0.0
        %3047 = vadd.xlane.f32.xlu0 %v3046
        %v3048 = vpop.xlane.xlu0 %3047
        %v3049 = vsel %vm449, %v3030, 0.0
        %3050 = vadd.xlane.f32.xlu0 %v3049
        %v3051 = vpop.xlane.xlu0 %3050
        %v3052 = vsel %vm449, %v3032, 0.0
        %3053 = vadd.xlane.f32.xlu0 %v3052
        %v3054 = vpop.xlane.xlu0 %3053
        %v3055 = vsel %vm449, %v3034, 0.0
        %3056 = vadd.xlane.f32.xlu0 %v3055
        %v3057 = vpop.xlane.xlu0 %3056
        %v3058 = vsel %vm449, %v3036, 0.0
        %3059 = vadd.xlane.f32.xlu0 %v3058
        %v3060 = vpop.xlane.xlu0 %3059
        %v3061 = vpack.c.bf16 %v3024, %v3022
        %v3062 = vpack.c.bf16 %v3028, %v3026
        %v3063 = vpack.c.bf16 %v3032, %v3030
        %v3064 = vpack.c.bf16 %v3036, %v3034
        %3065 = vrot.lane.b32.xlu0 %v777, 72
        %v3066 = vpop.permute.xlu0 %3065
        %3067 = vrot.lane.b32.xlu0 %v778, 72
        %v3068 = vpop.permute.xlu0 %3067
        %v3072 = vsel %vm449, %v3061, 0
        %3074 = vmatprep.subr.bf16.mxu0 0
        %3075 = vmatpush1.bf16.msra.mxu0 %v3066
        %3076 = vmatprep.subr.bf16.mxu0 0
        %3077 = vmatpush1.bf16.msra.mxu0 %v3068
        %3078 = vmatprep.subr.bf16.mxu0 0
        %3079 = vmatpush1.bf16.msra.mxu0 0
        %3080 = vmatprep.subr.bf16.mxu0 0
        %3081 = vmatpush1.bf16.msra.mxu0 0
        %3082 = vmatprep.subr.bf16.mxu0 0
        %3083 = vmatpush1.bf16.msra.mxu0 0
        %3084 = vmatprep.subr.bf16.mxu0 0
        %3085 = vmatpush1.bf16.msra.mxu0 0
        %3086 = vmatprep.subr.bf16.mxu0 0
        %3087 = vmatpush1.bf16.msra.mxu0 0
        %3088 = vmatprep.subr.bf16.mxu0 0
        %3089 = vmatpush1.bf16.msra.mxu0 0
        %3090 = vmatprep.subr.bf16.mxu0 0
        %3091 = vmatpush1.bf16.msra.mxu0 0
        %3092 = vmatprep.subr.bf16.mxu0 0
        %3093 = vmatpush1.bf16.msra.mxu0 0
        %3094 = vmatprep.subr.bf16.mxu0 0
        %3095 = vmatpush1.bf16.msra.mxu0 0
        %3096 = vmatprep.subr.bf16.mxu0 0
        %3097 = vmatpush1.bf16.msra.mxu0 0
        %3098 = vmatprep.subr.bf16.mxu0 0
        %3099 = vmatpush1.bf16.msra.mxu0 0
        %3100 = vmatprep.subr.bf16.mxu0 0
        %3101 = vmatpush1.bf16.msra.mxu0 0
        %3102 = vmatprep.subr.bf16.mxu0 0
        %3103 = vmatpush1.bf16.msra.mxu0 0
        %3104 = vmatprep.subr.bf16.mxu0 0
        %3105 = vmatpush1.bf16.msra.mxu0 0
        %3106 = vmatprep.mubr.bf16.mxu0 0
        %3107 = vmatmul.mubr.bf16.gmra.mrb[0].mxu0 %v3072
        %v3108 = vpop.f32.mrb[0].mxu0
        %v3109 = vadd.f32 0.0, %v3108
        %v3110 = vpop.f32.mrb[0].mxu0
        %v3111 = vpop.f32.mrb[0].mxu0
        %v3112 = vadd.f32 0.0, %v3111
        %v3113 = vpop.f32.mrb[0].mxu0
        %3114 = vdwg.mxu0
        %3115 = vrot.lane.b32.xlu0 %v779, 72
        %v3116 = vpop.permute.xlu0 %3115
        %3117 = vrot.lane.b32.xlu0 %v780, 72
        %v3118 = vpop.permute.xlu0 %3117
        %v3122 = vsel %vm449, %v3062, 0
        %3124 = vmatprep.subr.bf16.mxu0 0
        %3125 = vmatpush1.bf16.msra.mxu0 %v3116
        %3126 = vmatprep.subr.bf16.mxu0 0
        %3127 = vmatpush1.bf16.msra.mxu0 %v3118
        %3128 = vmatprep.subr.bf16.mxu0 0
        %3129 = vmatpush1.bf16.msra.mxu0 0
        %3130 = vmatprep.subr.bf16.mxu0 0
        %3131 = vmatpush1.bf16.msra.mxu0 0
        %3132 = vmatprep.subr.bf16.mxu0 0
        %3133 = vmatpush1.bf16.msra.mxu0 0
        %3134 = vmatprep.subr.bf16.mxu0 0
        %3135 = vmatpush1.bf16.msra.mxu0 0
        %3136 = vmatprep.subr.bf16.mxu0 0
        %3137 = vmatpush1.bf16.msra.mxu0 0
        %3138 = vmatprep.subr.bf16.mxu0 0
        %3139 = vmatpush1.bf16.msra.mxu0 0
        %3140 = vmatprep.subr.bf16.mxu0 0
        %3141 = vmatpush1.bf16.msra.mxu0 0
        %3142 = vmatprep.subr.bf16.mxu0 0
        %3143 = vmatpush1.bf16.msra.mxu0 0
        %3144 = vmatprep.subr.bf16.mxu0 0
        %3145 = vmatpush1.bf16.msra.mxu0 0
        %3146 = vmatprep.subr.bf16.mxu0 0
        %3147 = vmatpush1.bf16.msra.mxu0 0
        %3148 = vmatprep.subr.bf16.mxu0 0
        %3149 = vmatpush1.bf16.msra.mxu0 0
        %3150 = vmatprep.subr.bf16.mxu0 0
        %3151 = vmatpush1.bf16.msra.mxu0 0
        %3152 = vmatprep.subr.bf16.mxu0 0
        %3153 = vmatpush1.bf16.msra.mxu0 0
        %3154 = vmatprep.subr.bf16.mxu0 0
        %3155 = vmatpush1.bf16.msra.mxu0 0
        %3156 = vmatprep.mubr.bf16.mxu0 0
        %3157 = vmatmul.mubr.bf16.gmra.mrb[0].mxu0 %v3122
        %v3158 = vpop.f32.mrb[0].mxu0
        %v3159 = vadd.f32 0.0, %v3158
        %v3160 = vpop.f32.mrb[0].mxu0
        %v3161 = vpop.f32.mrb[0].mxu0
        %v3162 = vadd.f32 0.0, %v3161
        %v3163 = vpop.f32.mrb[0].mxu0
        %3164 = vdwg.mxu0
        %3165 = vrot.lane.b32.xlu0 %v781, 72
        %v3166 = vpop.permute.xlu0 %3165
        %3167 = vrot.lane.b32.xlu0 %v782, 72
        %v3168 = vpop.permute.xlu0 %3167
        %v3172 = vsel %vm449, %v3063, 0
        %3174 = vmatprep.subr.bf16.mxu0 0
        %3175 = vmatpush1.bf16.msra.mxu0 %v3166
        %3176 = vmatprep.subr.bf16.mxu0 0
        %3177 = vmatpush1.bf16.msra.mxu0 %v3168
        %3178 = vmatprep.subr.bf16.mxu0 0
        %3179 = vmatpush1.bf16.msra.mxu0 0
        %3180 = vmatprep.subr.bf16.mxu0 0
        %3181 = vmatpush1.bf16.msra.mxu0 0
        %3182 = vmatprep.subr.bf16.mxu0 0
        %3183 = vmatpush1.bf16.msra.mxu0 0
        %3184 = vmatprep.subr.bf16.mxu0 0
        %3185 = vmatpush1.bf16.msra.mxu0 0
        %3186 = vmatprep.subr.bf16.mxu0 0
        %3187 = vmatpush1.bf16.msra.mxu0 0
        %3188 = vmatprep.subr.bf16.mxu0 0
        %3189 = vmatpush1.bf16.msra.mxu0 0
        %3190 = vmatprep.subr.bf16.mxu0 0
        %3191 = vmatpush1.bf16.msra.mxu0 0
        %3192 = vmatprep.subr.bf16.mxu0 0
        %3193 = vmatpush1.bf16.msra.mxu0 0
        %3194 = vmatprep.subr.bf16.mxu0 0
        %3195 = vmatpush1.bf16.msra.mxu0 0
        %3196 = vmatprep.subr.bf16.mxu0 0
        %3197 = vmatpush1.bf16.msra.mxu0 0
        %3198 = vmatprep.subr.bf16.mxu0 0
        %3199 = vmatpush1.bf16.msra.mxu0 0
        %3200 = vmatprep.subr.bf16.mxu0 0
        %3201 = vmatpush1.bf16.msra.mxu0 0
        %3202 = vmatprep.subr.bf16.mxu0 0
        %3203 = vmatpush1.bf16.msra.mxu0 0
        %3204 = vmatprep.subr.bf16.mxu0 0
        %3205 = vmatpush1.bf16.msra.mxu0 0
        %3206 = vmatprep.mubr.bf16.mxu0 0
        %3207 = vmatmul.mubr.bf16.gmra.mrb[0].mxu0 %v3172
        %v3208 = vpop.f32.mrb[0].mxu0
        %v3209 = vadd.f32 0.0, %v3208
        %v3210 = vpop.f32.mrb[0].mxu0
        %v3211 = vpop.f32.mrb[0].mxu0
        %v3212 = vadd.f32 0.0, %v3211
        %v3213 = vpop.f32.mrb[0].mxu0
        %3214 = vdwg.mxu0
        %3215 = vrot.lane.b32.xlu0 %v783, 72
        %v3216 = vpop.permute.xlu0 %3215
        %3217 = vrot.lane.b32.xlu0 %v784, 72
        %v3218 = vpop.permute.xlu0 %3217
        %v3222 = vsel %vm449, %v3064, 0
        %3224 = vmatprep.subr.bf16.mxu0 0
        %3225 = vmatpush1.bf16.msra.mxu0 %v3216
        %3226 = vmatprep.subr.bf16.mxu0 0
        %3227 = vmatpush1.bf16.msra.mxu0 %v3218
        %3228 = vmatprep.subr.bf16.mxu0 0
        %3229 = vmatpush1.bf16.msra.mxu0 0
        %3230 = vmatprep.subr.bf16.mxu0 0
        %3231 = vmatpush1.bf16.msra.mxu0 0
        %3232 = vmatprep.subr.bf16.mxu0 0
        %3233 = vmatpush1.bf16.msra.mxu0 0
        %3234 = vmatprep.subr.bf16.mxu0 0
        %3235 = vmatpush1.bf16.msra.mxu0 0
        %3236 = vmatprep.subr.bf16.mxu0 0
        %3237 = vmatpush1.bf16.msra.mxu0 0
        %3238 = vmatprep.subr.bf16.mxu0 0
        %3239 = vmatpush1.bf16.msra.mxu0 0
        %3240 = vmatprep.subr.bf16.mxu0 0
        %3241 = vmatpush1.bf16.msra.mxu0 0
        %3242 = vmatprep.subr.bf16.mxu0 0
        %3243 = vmatpush1.bf16.msra.mxu0 0
        %3244 = vmatprep.subr.bf16.mxu0 0
        %3245 = vmatpush1.bf16.msra.mxu0 0
        %3246 = vmatprep.subr.bf16.mxu0 0
        %3247 = vmatpush1.bf16.msra.mxu0 0
        %3248 = vmatprep.subr.bf16.mxu0 0
        %3249 = vmatpush1.bf16.msra.mxu0 0
        %3250 = vmatprep.subr.bf16.mxu0 0
        %3251 = vmatpush1.bf16.msra.mxu0 0
        %3252 = vmatprep.subr.bf16.mxu0 0
        %3253 = vmatpush1.bf16.msra.mxu0 0
        %3254 = vmatprep.subr.bf16.mxu0 0
        %3255 = vmatpush1.bf16.msra.mxu0 0
        %3256 = vmatprep.mubr.bf16.mxu0 0
        %3257 = vmatmul.mubr.bf16.gmra.mrb[0].mxu0 %v3222
        %v3258 = vpop.f32.mrb[0].mxu0
        %v3259 = vadd.f32 0.0, %v3258
        %v3260 = vpop.f32.mrb[0].mxu0
        %v3261 = vpop.f32.mrb[0].mxu0
        %v3262 = vadd.f32 0.0, %v3261
        %v3263 = vpop.f32.mrb[0].mxu0
        %3264 = vdwg.mxu0
        %v3265 = vrcp.pop %v3039
        %v3266 = vrcp.pop %v3042
        %v3267 = vrcp.pop %v3045
        %v3268 = vrcp.pop %v3048
        %v3269 = vrcp.pop %v3051
        %v3270 = vrcp.pop %v3054
        %v3271 = vrcp.pop %v3057
        %v3272 = vrcp.pop %v3060
        %v3273 = vmul.f32 %v3109, %v3265
        %v3274 = vmul.f32 %v3112, %v3266
        %v3275 = vmul.f32 %v3159, %v3267
        %v3276 = vmul.f32 %v3162, %v3268
        %v3277 = vmul.f32 %v3209, %v3269
        %v3278 = vmul.f32 %v3212, %v3270
        %v3279 = vmul.f32 %v3259, %v3271
        %v3280 = vmul.f32 %v3262, %v3272
        %3281 = vrot.lane.b32.xlu0 %v754, 72
        %v3282 = vpop.permute.xlu0 %3281
        %3283 = vrot.lane.b32.xlu0 %v756, 72
        %v3284 = vpop.permute.xlu0 %3283
        %3285 = vrot.lane.b32.xlu0 %v758, 72
        %v3286 = vpop.permute.xlu0 %3285
        %3287 = vrot.lane.b32.xlu0 %v760, 72
        %v3288 = vpop.permute.xlu0 %3287
        %3289 = vrot.lane.b32.xlu0 %v762, 72
        %v3290 = vpop.permute.xlu0 %3289
        %3291 = vrot.lane.b32.xlu0 %v764, 72
        %v3292 = vpop.permute.xlu0 %3291
        %3293 = vrot.lane.b32.xlu0 %v766, 72
        %v3294 = vpop.permute.xlu0 %3293
        %3295 = vrot.lane.b32.xlu0 %v768, 72
        %v3296 = vpop.permute.xlu0 %3295
        %v3305 = vmul.f32 %v3273, %v3282
        %v3306 = vmul.f32 %v3274, %v3284
        %v3307 = vmul.f32 %v3275, %v3286
        %v3308 = vmul.f32 %v3276, %v3288
        %v3309 = vmul.f32 %v3277, %v3290
        %v3310 = vmul.f32 %v3278, %v3292
        %v3311 = vmul.f32 %v3279, %v3294
        %v3312 = vmul.f32 %v3280, %v3296
        %v3313 = vpack.c.bf16 %v3306, %v3305
        %v3314 = vpack.c.bf16 %v3308, %v3307
        %v3315 = vpack.c.bf16 %v3310, %v3309
        %v3316 = vpack.c.bf16 %v3312, %v3311
        %v3317 = vld [vmem:[%s7 + $0xc] sm:$0xf]
        %v3319 = vsel %vm789, %v3313, 0
        %v3322 = vsel %vm789, %v3314, 0
        %v3325 = vsel %vm789, %v3315, 0
        %v3328 = vsel %vm789, %v3316, 0
        %v3331 = vsel %vm1949, %v3317, 0
        %3333 = vmatprep.subr.bf16.mxu0 0
        %3334 = vmatpush1.bf16.msra.mxu0 %v3331
        %3335 = vmatprep.subr.bf16.mxu0 0
        %3336 = vmatpush1.bf16.msra.mxu0 0
        %3337 = vmatprep.subr.bf16.mxu0 0
        %3338 = vmatpush1.bf16.msra.mxu0 0
        %3339 = vmatprep.subr.bf16.mxu0 0
        %3340 = vmatpush1.bf16.msra.mxu0 0
        %3341 = vmatprep.subr.bf16.mxu0 0
        %3342 = vmatpush1.bf16.msra.mxu0 0
        %3343 = vmatprep.subr.bf16.mxu0 0
        %3344 = vmatpush1.bf16.msra.mxu0 0
        %3345 = vmatprep.subr.bf16.mxu0 0
        %3346 = vmatpush1.bf16.msra.mxu0 0
        %3347 = vmatprep.subr.bf16.mxu0 0
        %3348 = vmatpush1.bf16.msra.mxu0 0
        %3349 = vmatprep.subr.bf16.mxu0 0
        %3350 = vmatpush1.bf16.msra.mxu0 0
        %3351 = vmatprep.subr.bf16.mxu0 0
        %3352 = vmatpush1.bf16.msra.mxu0 0
        %3353 = vmatprep.subr.bf16.mxu0 0
        %3354 = vmatpush1.bf16.msra.mxu0 0
        %3355 = vmatprep.subr.bf16.mxu0 0
        %3356 = vmatpush1.bf16.msra.mxu0 0
        %3357 = vmatprep.subr.bf16.mxu0 0
        %3358 = vmatpush1.bf16.msra.mxu0 0
        %3359 = vmatprep.subr.bf16.mxu0 0
        %3360 = vmatpush1.bf16.msra.mxu0 0
        %3361 = vmatprep.subr.bf16.mxu0 0
        %3362 = vmatpush1.bf16.msra.mxu0 0
        %3363 = vmatprep.subr.bf16.mxu0 0
        %3364 = vmatpush1.bf16.msra.mxu0 0
        %3365 = vmatprep.mubr.bf16.mxu0 0
        %3366 = vmatmul.mubr.bf16.gmra.mrb[0].mxu0 %v3319
        %v3367 = vpop.f32.mrb[0].mxu0
        %v3368 = vadd.f32 0.0, %v3367
        %v3369 = vpop.f32.mrb[0].mxu0
        %v3370 = vpop.f32.mrb[0].mxu0
        %v3371 = vadd.f32 0.0, %v3370
        %v3372 = vpop.f32.mrb[0].mxu0
        %3373 = vmatprep.mubr.bf16.mxu0 0
        %3374 = vmatmul.mubr.bf16.gmra.mrb[0].mxu0 %v3322
        %v3375 = vpop.f32.mrb[0].mxu0
        %v3376 = vadd.f32 0.0, %v3375
        %v3377 = vpop.f32.mrb[0].mxu0
        %v3378 = vpop.f32.mrb[0].mxu0
        %v3379 = vadd.f32 0.0, %v3378
        %v3380 = vpop.f32.mrb[0].mxu0
        %3381 = vmatprep.mubr.bf16.mxu0 0
        %3382 = vmatmul.mubr.bf16.gmra.mrb[0].mxu0 %v3325
        %v3383 = vpop.f32.mrb[0].mxu0
        %v3384 = vadd.f32 0.0, %v3383
        %v3385 = vpop.f32.mrb[0].mxu0
        %v3386 = vpop.f32.mrb[0].mxu0
        %v3387 = vadd.f32 0.0, %v3386
        %v3388 = vpop.f32.mrb[0].mxu0
        %3389 = vmatprep.mubr.bf16.mxu0 0
        %3390 = vmatmul.mubr.bf16.gmra.mrb[0].mxu0 %v3328
        %v3391 = vpop.f32.mrb[0].mxu0
        %v3392 = vadd.f32 0.0, %v3391
        %v3393 = vpop.f32.mrb[0].mxu0
        %v3394 = vpop.f32.mrb[0].mxu0
        %v3395 = vadd.f32 0.0, %v3394
        %v3396 = vpop.f32.mrb[0].mxu0
        %3397 = vdwg.mxu0
        %v3398 = vadd.f32 %v2744, %v3368
        %v3399 = vadd.f32 %v2745, %v3371
        %v3400 = vadd.f32 %v2746, %v3376
        %v3401 = vadd.f32 %v2747, %v3379
        %v3402 = vadd.f32 %v2748, %v3384
        %v3403 = vadd.f32 %v2749, %v3387
        %v3404 = vadd.f32 %v2750, %v3392
        %v3405 = vadd.f32 %v2751, %v3395
        %v3406 = vld [vmem:[%s8] sm:$0x1]
        %v3408 = vlaneseq
        %v3409 = vshrl.u32 %v3408, 7
        %v3410 = vsub.s32 0, %v3409
        %v3411 = vrot.slane %v3406, %v3410
        %v3413 = vadd.f32 %v3398, %v3411
        %v3414 = vadd.f32 %v3399, %v3411
        %v3415 = vadd.f32 %v3400, %v3411
        %v3416 = vadd.f32 %v3401, %v3411
        %v3417 = vadd.f32 %v3402, %v3411
        %v3418 = vadd.f32 %v3403, %v3411
        %v3419 = vadd.f32 %v3404, %v3411
        %v3420 = vadd.f32 %v3405, %v3411
        %3421 = vst [vmem:[%s368] sm:$0xff] %v3413
        %3422 = vst [vmem:[%s368 + $0x8] sm:$0xff] %v3414
        %3423 = vst [vmem:[%s368 + $0x10] sm:$0xff] %v3415
        %3424 = vst [vmem:[%s368 + $0x18] sm:$0xff] %v3416
        %3425 = vst [vmem:[%s368 + $0x20] sm:$0xff] %v3417
        %3426 = vst [vmem:[%s368 + $0x28] sm:$0xff] %v3418
        %3427 = vst [vmem:[%s368 + $0x30] sm:$0xff] %v3419
        %3428 = vst [vmem:[%s368 + $0x38] sm:$0xff] %v3420
        %s3429 = sand.u32 %s240, 1
        %s3430 = scalar_lea.sflag [#allocation3], %s3429
        %s3431 = sand.u32 %s240, 1
        %s3432 = smul.addr %s3431, 64
        %s3433 = scalar_lea.vmem [#allocation2], %s3432
        // Predicated region
        $region57: #{tpu_custom_call.1} parent=55 // pred_check
          %p3434 = pneg %p250
        $region58: #{tpu_custom_call.1} parent=55 // pred_check_branch
          %3436 = sbr.rel (%p3434) target = $region60
        $region59: #{tpu_custom_call.1} parent=55 // pred_region
          %s3438 = ssub.s32 1024, 1024
          %3439 = vsyncadd %s3430, %s3438
          %s3440 = smul.addr %s23, 8
          %s3441 = smul.addr %s3440, 128
          %s3442 = scalar_lea.hbm %s9, %s3441
          %s3443 = sshll.u32 %s3433, 4
          %s3444 = int_to_ptr.vmem [resolvable:$true] %s3443
          %3449 = dma.vmem_to_hbm [thread:$0]  %s3444, 1024, %s3442, %s3430, 128, 128, 8
        $region60: #{tpu_custom_call.1} parent=55 // pred_fallthru
          _
      $region56: #{tpu_custom_call.1} parent=5 // pred_fallthru
        _
      %p3450 = scmp.le.s32.totalorder 2, %s18
      // Predicated region
      $region61: #{tpu_custom_call.1} parent=5 // pred_check
        %p3451 = pneg %p3450
      $region62: #{tpu_custom_call.1} parent=5 // pred_check_branch
        %3453 = sbr.rel (%p3451) target = $region64
      $region63: #{tpu_custom_call.1} parent=5 // pred_region
        %s3454 = ssub.s32 %s18, 2
        // Predicated region
        $region65: #{tpu_custom_call.1} parent=63 // pred_check
          %p3455 = pneg %p256
        $region66: #{tpu_custom_call.1} parent=63 // pred_check_branch
          %3457 = sbr.rel (%p3455) target = $region68
        $region67: #{tpu_custom_call.1} parent=63 // pred_region
          %s3458 = sand.u32 %s241, 1
          %s3459 = scalar_lea.sflag [#allocation3], %s3458
          %s3460 = sand.u32 %s241, 1
          %s3461 = smul.addr %s3460, 64
          %s3462 = scalar_lea.vmem [#allocation2], %s3461
          %3463 = dma.done %s3459, 1024
        $region68: #{tpu_custom_call.1} parent=63 // pred_fallthru
          _
      $region64: #{tpu_custom_call.1} parent=5 // pred_fallthru
        _
    $region6: #{tpu_custom_call.1} parent=1 // loop_footer
      %s22 = sadd.s32 1, %s18
    $region7: #{tpu_custom_call.1} parent=1 // loop_footer_branch
      %17 = sbr.rel target = $region3
    $region8: #{tpu_custom_call.1} parent=1 // loop_exit
      _
    %3464 = vsyncpa [#allocation3], 1
    %s3465 = scalar_lea.sflag [#allocation3], 1
    %3466 = vsyncpa %s3465, 1

</llo_original>
